<compile_context>
chip_gen: v6e
topology: v6e:2x2x1
jax: 0.10.0
libtpu: 0.0.40
codegen_flags: <defaults>
</compile_context>

<pallas_src>
import functools

import jax
import jax.numpy as jnp
from jax.experimental import pallas as pl
from jax.experimental.pallas import tpu as pltpu

TM_MAX = 512              # max lane-tile of the GEMM output (N*H*W axis)
MXU_DTYPE = jnp.bfloat16  # MXU input dtype (accumulation stays f32)


def _gemm_bn_act_kernel(b_ref, a_ref, scale_ref, shift_ref, o_ref, *, act):
    """O = B @ A : (R,K) x (K,TM) -> (R,TM); fused per-row BN(eval) + act."""
    acc = jnp.dot(b_ref[...], a_ref[...], preferred_element_type=jnp.float32)
    y = acc * scale_ref[...] + shift_ref[...]        # (R,1) broadcast over lanes
    if act == "relu":
        y = jnp.maximum(y, 0.0)
    elif act == "tanh":
        y = jnp.tanh(y)
    o_ref[...] = y.astype(o_ref.dtype)


def gemm_bn_act(b, a, scale, shift, act, out_dtype):
    """b: (P,R,K) weights, a: (P,K,M) activations, scale/shift: (R,).

    Returns (P,R,M) in out_dtype.  Output is lane-dense: M (= N*H*W) on lanes.
    """
    P, R, K = b.shape
    M = a.shape[2]
    b = b.astype(MXU_DTYPE)
    a = a.astype(MXU_DTYPE)

    if M <= TM_MAX:
        tm, Mp = M, M                      # whole-extent block (no padding)
    else:
        tm = TM_MAX
        Mp = pl.cdiv(M, tm) * tm
    if Mp != M:                            # ragged fallback (not hit for pow2 shapes)
        a = jnp.pad(a, ((0, 0), (0, 0), (0, Mp - M)))

    out = pl.pallas_call(
        functools.partial(_gemm_bn_act_kernel, act=act),
        out_shape=jax.ShapeDtypeStruct((P, R, Mp), out_dtype),
        grid_spec=pltpu.PrefetchScalarGridSpec(
            num_scalar_prefetch=0,
            grid=(P, Mp // tm),
            in_specs=[
                pl.BlockSpec((None, R, K), lambda ph, i: (ph, 0, 0)),    # weights
                pl.BlockSpec((None, K, tm), lambda ph, i: (ph, 0, i)),   # acts
                pl.BlockSpec((R, 1), lambda ph, i: (0, 0)),              # BN scale
                pl.BlockSpec((R, 1), lambda ph, i: (0, 0)),              # BN shift
            ],
            out_specs=pl.BlockSpec((None, R, tm), lambda ph, i: (ph, 0, i)),
        ),
        compiler_params=pltpu.CompilerParams(
            dimension_semantics=("parallel", "parallel")),
        cost_estimate=pl.CostEstimate(
            flops=2 * P * R * K * Mp,
            transcendentals=(P * R * Mp) if act == "tanh" else 0,
            bytes_accessed=(a.size * a.dtype.itemsize
                            + b.size * b.dtype.itemsize
                            + P * R * Mp * jnp.dtype(out_dtype).itemsize)),
    )(b, a,
      scale.reshape(R, 1).astype(jnp.float32),
      shift.reshape(R, 1).astype(jnp.float32))
    return out[:, :, :M] if Mp != M else out


# Sub-pixel decomposition tables for ConvTranspose2d(k=4, stride=2, pad=1).
# Output row oh = 2*q + r.  Phase r, tap d reads padded-input row q+_IN_OFF[r][d]
# and multiplies kernel row _K_IDX[r][d] (same tables for columns).
_IN_OFF = ((1, 0), (2, 1))
_K_IDX = ((1, 3), (0, 2))


def conv_t_s2_layer(x_cm, w, scale, shift, act, out_dtype):
    """ConvTranspose2d(k=4, s=2, p=1, bias=False) + BN(eval) + act.

    x_cm: (Cin, N, H, W) channel-major.  w: (Cin, Cout, 4, 4) PyTorch layout.
    Returns (Cout, N, 2H, 2W) channel-major.
    """
    Cin, N, H, W = x_cm.shape
    Cout = w.shape[1]
    M = N * H * W
    xp = jnp.pad(x_cm, ((0, 0), (0, 0), (1, 1), (1, 1)))

    a_phases, b_phases = [], []
    for rh in range(2):
        for rw in range(2):
            taps, wtaps = [], []
            for dh in range(2):
                for dw in range(2):
                    ah, aw = _IN_OFF[rh][dh], _IN_OFF[rw][dw]
                    taps.append(xp[:, :, ah:ah + H, aw:aw + W].reshape(Cin, M))
                    kh, kw = _K_IDX[rh][dh], _K_IDX[rw][dw]
                    wtaps.append(w[:, :, kh, kw].T)           # (Cout, Cin)
            a_phases.append(jnp.concatenate(taps, axis=0))    # (4*Cin, M)
            b_phases.append(jnp.concatenate(wtaps, axis=1))   # (Cout, 4*Cin)
    a_stack = jnp.stack(a_phases, axis=0)                     # (4, 4*Cin, M)
    b_stack = jnp.stack(b_phases, axis=0)                     # (4, Cout, 4*Cin)

    y = gemm_bn_act(b_stack, a_stack, scale, shift, act, out_dtype)  # (4,Cout,M)
    # Interleave phases: y[2*rh+rw, co, n*H*W+qh*W+qw] -> out[co, n, 2qh+rh, 2qw+rw]
    y = y.reshape(2, 2, Cout, N, H, W)
    return jnp.transpose(y, (2, 3, 4, 0, 5, 1)).reshape(Cout, N, 2 * H, 2 * W)


def conv_t_layer1(z, w, scale, shift, out_dtype):
    """ConvTranspose2d(k=4, s=1, p=0) on a 1x1 input + BN(eval) + ReLU.

    z: (N, Cin, 1, 1).  Returns (Cout, N, 4, 4) channel-major.
    Compute is negligible; expressed as one (Cout*16, Cin) x (Cin, N) GEMM.
    """
    N, Cin = z.shape[0], z.shape[1]
    Cout = w.shape[1]
    a = z.reshape(N, Cin).T                                    # (Cin, N)
    b = jnp.transpose(w, (1, 2, 3, 0)).reshape(Cout * 16, Cin)  # rows = (co,kh,kw)
    y = gemm_bn_act(b[None], a[None],
                    jnp.repeat(scale, 16), jnp.repeat(shift, 16),
                    "relu", out_dtype)                         # (1, Cout*16, N)
    y = y[0].reshape(Cout, 4, 4, N)
    return jnp.transpose(y, (0, 3, 1, 2))                      # (Cout, N, 4, 4)


def init_params(key, input_size, general_complexity, image_channels,
                weights_mean, weights_std):
    """Deterministic parameter init (mimics DCGAN weights_init_general)."""
    C, G = image_channels, general_complexity
    chans = [input_size, 8 * C * G, 4 * C * G, 2 * C * G, 1 * C * G, C]
    eps = 1e-5
    params = []
    for li in range(5):
        key, kw, kg = jax.random.split(key, 3)
        cin, cout = chans[li], chans[li + 1]
        w = weights_mean + weights_std * jax.random.normal(kw, (cin, cout, 4, 4),
                                                           jnp.float32)
        if li < 4:  # layers 1-4 have BatchNorm
            gamma = 1.0 + weights_std * jax.random.normal(kg, (cout,), jnp.float32)
            beta = jnp.zeros((cout,), jnp.float32)
            scale = gamma / jnp.sqrt(1.0 + eps)   # running_var=1, running_mean=0
            shift = beta
        else:       # layer 5: no BN, Tanh only
            scale = jnp.ones((cout,), jnp.float32)
            shift = jnp.zeros((cout,), jnp.float32)
        params.append((w, scale, shift))
    return params


def generator64_forward(z, params):
    x = conv_t_layer1(z, *params[0], out_dtype=MXU_DTYPE)          # (8CG, N, 4, 4)
    for li in range(1, 4):                                          # layers 2-4
        x = conv_t_s2_layer(x, *params[li], act="relu", out_dtype=MXU_DTYPE)
    y = conv_t_s2_layer(x, *params[4], act="tanh", out_dtype=jnp.float32)
    return jnp.transpose(y, (1, 0, 2, 3))                           # back to NCHW


if __name__ == "__main__":
    # Small, forward-consistent config: latent=8, complexity=2, 3 image channels.
    N, input_size, general_complexity, image_channels = 2, 8, 2, 3
    weights_mean, weights_std = 0.0, 0.02
    dropout_prob = 0.3  # unused in eval-mode forward (Dropout2d = identity)

    key = jax.random.PRNGKey(0)
    key, kz, kp = jax.random.split(key, 3)
    z = jax.random.normal(kz, (N, input_size, 1, 1), jnp.float32)  # NCHW latent
    params = init_params(kp, input_size, general_complexity, image_channels,
                         weights_mean, weights_std)

    out = jax.jit(generator64_forward)(z, params)
    out = jax.block_until_ready(out)
    assert out.shape == (N, image_channels, 64, 64), out.shape
    assert bool(jnp.all(jnp.isfinite(out)))
    print("KERNEL_OK")
</pallas_src>

<mosaic_0001>
module attributes {stable_mosaic.version = 11 : i64} {
  func.func @_gemm_bn_act_kernel(%arg0: i32, %arg1: i32, %arg2: memref<1x768x8xbf16, #tpu.memory_space<vmem>>, %arg3: memref<1x8x2xbf16, #tpu.memory_space<vmem>>, %arg4: memref<768x1xf32, #tpu.memory_space<vmem>>, %arg5: memref<768x1xf32, #tpu.memory_space<vmem>>, %arg6: memref<1x768x2xbf16, #tpu.memory_space<vmem>>) attributes {dimension_semantics = [#tpu.dimension_semantics<parallel>, #tpu.dimension_semantics<parallel>], iteration_bounds = array<i64: 1, 1>, scalar_prefetch = 0 : i64, scratch_operands = 0 : i64, tpu.core_type = #tpu.core_type<tc>, window_params = [{transform_indices = @transform_0, window_bounds = array<i64: 1, 768, 8>}, {transform_indices = @transform_1, window_bounds = array<i64: 1, 8, 2>}, {pipeline_mode = #tpu.pipeline_mode<synchronous>, transform_indices = @transform_2, window_bounds = array<i64: 768, 1>}, {pipeline_mode = #tpu.pipeline_mode<synchronous>, transform_indices = @transform_3, window_bounds = array<i64: 768, 1>}, {transform_indices = @transform_4, window_bounds = array<i64: 1, 768, 2>}]} {
    %c0 = arith.constant 0 : index
    %c0_0 = arith.constant 0 : index
    %c0_1 = arith.constant 0 : index
    %0 = vector.load %arg2[%c0, %c0_0, %c0_1] : memref<1x768x8xbf16, #tpu.memory_space<vmem>>, vector<1x768x8xbf16>
    %1 = vector.shape_cast %0 : vector<1x768x8xbf16> to vector<768x8xbf16>
    %c0_2 = arith.constant 0 : index
    %c0_3 = arith.constant 0 : index
    %c0_4 = arith.constant 0 : index
    %2 = vector.load %arg3[%c0_2, %c0_3, %c0_4] : memref<1x8x2xbf16, #tpu.memory_space<vmem>>, vector<1x8x2xbf16>
    %3 = vector.shape_cast %2 : vector<1x8x2xbf16> to vector<8x2xbf16>
    %cst = arith.constant dense<0.000000e+00> : vector<768x2xf32>
    %4 = tpu.matmul %1, %3, %cst {dimension_numbers = #tpu.dot_dimension_numbers<[1], [0], [0], [1], [0, 0, 1, 1], [], []>} : vector<768x8xbf16>, vector<8x2xbf16>, vector<768x2xf32> -> vector<768x2xf32>
    %c0_5 = arith.constant 0 : index
    %c0_6 = arith.constant 0 : index
    %5 = vector.load %arg4[%c0_5, %c0_6] : memref<768x1xf32, #tpu.memory_space<vmem>>, vector<768x1xf32>
    %6 = vector.broadcast %5 : vector<768x1xf32> to vector<768x2xf32>
    %7 = arith.mulf %4, %6 : vector<768x2xf32>
    %c0_7 = arith.constant 0 : index
    %c0_8 = arith.constant 0 : index
    %8 = vector.load %arg5[%c0_7, %c0_8] : memref<768x1xf32, #tpu.memory_space<vmem>>, vector<768x1xf32>
    %9 = vector.broadcast %8 : vector<768x1xf32> to vector<768x2xf32>
    %10 = arith.addf %7, %9 : vector<768x2xf32>
    %cst_9 = arith.constant 0.000000e+00 : f32
    %11 = vector.broadcast %cst_9 : f32 to vector<768x2xf32>
    %12 = arith.maximumf %10, %11 : vector<768x2xf32>
    %13 = arith.truncf %12 : vector<768x2xf32> to vector<768x2xbf16>
    %c0_10 = arith.constant 0 : index
    %c0_11 = arith.constant 0 : index
    %c0_12 = arith.constant 0 : index
    %14 = vector.load %arg6[%c0_10, %c0_11, %c0_12] : memref<1x768x2xbf16, #tpu.memory_space<vmem>>, vector<1x768x2xbf16>
    %15 = vector.shape_cast %14 : vector<1x768x2xbf16> to vector<768x2xbf16>
    %16 = vector.shape_cast %13 : vector<768x2xbf16> to vector<1x768x2xbf16>
    tpu.vector_store %arg6[%c0_10, %c0_11, %c0_12], %16 {strides = array<i32>} : memref<1x768x2xbf16, #tpu.memory_space<vmem>>, vector<1x768x2xbf16>,
    return
  }
  func.func @transform_0(%arg0: i32, %arg1: i32) -> (i32, i32, i32) {
    %c0_i32 = arith.constant 0 : i32
    %c0_i32_0 = arith.constant 0 : i32
    %c0_i32_1 = arith.constant 0 : i32
    return %arg0, %c0_i32, %c0_i32_0 : i32, i32, i32
  }
  func.func @transform_1(%arg0: i32, %arg1: i32) -> (i32, i32, i32) {
    %c0_i32 = arith.constant 0 : i32
    %c0_i32_0 = arith.constant 0 : i32
    return %arg0, %c0_i32, %arg1 : i32, i32, i32
  }
  func.func @transform_2(%arg0: i32, %arg1: i32) -> (i32, i32) {
    %c0_i32 = arith.constant 0 : i32
    %c0_i32_0 = arith.constant 0 : i32
    %c0_i32_1 = arith.constant 0 : i32
    return %c0_i32, %c0_i32_0 : i32, i32
  }
  func.func @transform_3(%arg0: i32, %arg1: i32) -> (i32, i32) {
    %c0_i32 = arith.constant 0 : i32
    %c0_i32_0 = arith.constant 0 : i32
    %c0_i32_1 = arith.constant 0 : i32
    return %c0_i32, %c0_i32_0 : i32, i32
  }
  func.func @transform_4(%arg0: i32, %arg1: i32) -> (i32, i32, i32) {
    %c0_i32 = arith.constant 0 : i32
    %c0_i32_0 = arith.constant 0 : i32
    return %arg0, %c0_i32, %arg1 : i32, i32, i32
  }
}

module attributes {stable_mosaic.version = 11 : i64} {
  func.func @_gemm_bn_act_kernel(%arg0: i32, %arg1: i32, %arg2: memref<1x24x192xbf16, #tpu.memory_space<vmem>>, %arg3: memref<1x192x32xbf16, #tpu.memory_space<vmem>>, %arg4: memref<24x1xf32, #tpu.memory_space<vmem>>, %arg5: memref<24x1xf32, #tpu.memory_space<vmem>>, %arg6: memref<1x24x32xbf16, #tpu.memory_space<vmem>>) attributes {dimension_semantics = [#tpu.dimension_semantics<parallel>, #tpu.dimension_semantics<parallel>], iteration_bounds = array<i64: 4, 1>, scalar_prefetch = 0 : i64, scratch_operands = 0 : i64, tpu.core_type = #tpu.core_type<tc>, window_params = [{transform_indices = @transform_0, window_bounds = array<i64: 1, 24, 192>}, {transform_indices = @transform_1, window_bounds = array<i64: 1, 192, 32>}, {pipeline_mode = #tpu.pipeline_mode<synchronous>, transform_indices = @transform_2, window_bounds = array<i64: 24, 1>}, {pipeline_mode = #tpu.pipeline_mode<synchronous>, transform_indices = @transform_3, window_bounds = array<i64: 24, 1>}, {transform_indices = @transform_4, window_bounds = array<i64: 1, 24, 32>}]} {
    %c0 = arith.constant 0 : index
    %c0_0 = arith.constant 0 : index
    %c0_1 = arith.constant 0 : index
    %0 = vector.load %arg2[%c0, %c0_0, %c0_1] : memref<1x24x192xbf16, #tpu.memory_space<vmem>>, vector<1x24x192xbf16>
    %1 = vector.shape_cast %0 : vector<1x24x192xbf16> to vector<24x192xbf16>
    %c0_2 = arith.constant 0 : index
    %c0_3 = arith.constant 0 : index
    %c0_4 = arith.constant 0 : index
    %2 = vector.load %arg3[%c0_2, %c0_3, %c0_4] : memref<1x192x32xbf16, #tpu.memory_space<vmem>>, vector<1x192x32xbf16>
    %3 = vector.shape_cast %2 : vector<1x192x32xbf16> to vector<192x32xbf16>
    %cst = arith.constant dense<0.000000e+00> : vector<24x32xf32>
    %4 = tpu.matmul %1, %3, %cst {dimension_numbers = #tpu.dot_dimension_numbers<[1], [0], [0], [1], [0, 0, 1, 1], [], []>} : vector<24x192xbf16>, vector<192x32xbf16>, vector<24x32xf32> -> vector<24x32xf32>
    %c0_5 = arith.constant 0 : index
    %c0_6 = arith.constant 0 : index
    %5 = vector.load %arg4[%c0_5, %c0_6] : memref<24x1xf32, #tpu.memory_space<vmem>>, vector<24x1xf32>
    %6 = vector.broadcast %5 : vector<24x1xf32> to vector<24x32xf32>
    %7 = arith.mulf %4, %6 : vector<24x32xf32>
    %c0_7 = arith.constant 0 : index
    %c0_8 = arith.constant 0 : index
    %8 = vector.load %arg5[%c0_7, %c0_8] : memref<24x1xf32, #tpu.memory_space<vmem>>, vector<24x1xf32>
    %9 = vector.broadcast %8 : vector<24x1xf32> to vector<24x32xf32>
    %10 = arith.addf %7, %9 : vector<24x32xf32>
    %cst_9 = arith.constant 0.000000e+00 : f32
    %11 = vector.broadcast %cst_9 : f32 to vector<24x32xf32>
    %12 = arith.maximumf %10, %11 : vector<24x32xf32>
    %13 = arith.truncf %12 : vector<24x32xf32> to vector<24x32xbf16>
    %c0_10 = arith.constant 0 : index
    %c0_11 = arith.constant 0 : index
    %c0_12 = arith.constant 0 : index
    %14 = vector.load %arg6[%c0_10, %c0_11, %c0_12] : memref<1x24x32xbf16, #tpu.memory_space<vmem>>, vector<1x24x32xbf16>
    %15 = vector.shape_cast %14 : vector<1x24x32xbf16> to vector<24x32xbf16>
    %16 = vector.shape_cast %13 : vector<24x32xbf16> to vector<1x24x32xbf16>
    tpu.vector_store %arg6[%c0_10, %c0_11, %c0_12], %16 {strides = array<i32>} : memref<1x24x32xbf16, #tpu.memory_space<vmem>>, vector<1x24x32xbf16>,
    return
  }
  func.func @transform_0(%arg0: i32, %arg1: i32) -> (i32, i32, i32) {
    %c0_i32 = arith.constant 0 : i32
    %c0_i32_0 = arith.constant 0 : i32
    %c0_i32_1 = arith.constant 0 : i32
    return %arg0, %c0_i32, %c0_i32_0 : i32, i32, i32
  }
  func.func @transform_1(%arg0: i32, %arg1: i32) -> (i32, i32, i32) {
    %c0_i32 = arith.constant 0 : i32
    %c0_i32_0 = arith.constant 0 : i32
    return %arg0, %c0_i32, %arg1 : i32, i32, i32
  }
  func.func @transform_2(%arg0: i32, %arg1: i32) -> (i32, i32) {
    %c0_i32 = arith.constant 0 : i32
    %c0_i32_0 = arith.constant 0 : i32
    %c0_i32_1 = arith.constant 0 : i32
    return %c0_i32, %c0_i32_0 : i32, i32
  }
  func.func @transform_3(%arg0: i32, %arg1: i32) -> (i32, i32) {
    %c0_i32 = arith.constant 0 : i32
    %c0_i32_0 = arith.constant 0 : i32
    %c0_i32_1 = arith.constant 0 : i32
    return %c0_i32, %c0_i32_0 : i32, i32
  }
  func.func @transform_4(%arg0: i32, %arg1: i32) -> (i32, i32, i32) {
    %c0_i32 = arith.constant 0 : i32
    %c0_i32_0 = arith.constant 0 : i32
    return %arg0, %c0_i32, %arg1 : i32, i32, i32
  }
}

module attributes {stable_mosaic.version = 11 : i64} {
  func.func @_gemm_bn_act_kernel(%arg0: i32, %arg1: i32, %arg2: memref<1x12x96xbf16, #tpu.memory_space<vmem>>, %arg3: memref<1x96x128xbf16, #tpu.memory_space<vmem>>, %arg4: memref<12x1xf32, #tpu.memory_space<vmem>>, %arg5: memref<12x1xf32, #tpu.memory_space<vmem>>, %arg6: memref<1x12x128xbf16, #tpu.memory_space<vmem>>) attributes {dimension_semantics = [#tpu.dimension_semantics<parallel>, #tpu.dimension_semantics<parallel>], iteration_bounds = array<i64: 4, 1>, scalar_prefetch = 0 : i64, scratch_operands = 0 : i64, tpu.core_type = #tpu.core_type<tc>, window_params = [{transform_indices = @transform_0, window_bounds = array<i64: 1, 12, 96>}, {transform_indices = @transform_1, window_bounds = array<i64: 1, 96, 128>}, {pipeline_mode = #tpu.pipeline_mode<synchronous>, transform_indices = @transform_2, window_bounds = array<i64: 12, 1>}, {pipeline_mode = #tpu.pipeline_mode<synchronous>, transform_indices = @transform_3, window_bounds = array<i64: 12, 1>}, {transform_indices = @transform_4, window_bounds = array<i64: 1, 12, 128>}]} {
    %c0 = arith.constant 0 : index
    %c0_0 = arith.constant 0 : index
    %c0_1 = arith.constant 0 : index
    %0 = vector.load %arg2[%c0, %c0_0, %c0_1] : memref<1x12x96xbf16, #tpu.memory_space<vmem>>, vector<1x12x96xbf16>
    %1 = vector.shape_cast %0 : vector<1x12x96xbf16> to vector<12x96xbf16>
    %c0_2 = arith.constant 0 : index
    %c0_3 = arith.constant 0 : index
    %c0_4 = arith.constant 0 : index
    %2 = vector.load %arg3[%c0_2, %c0_3, %c0_4] : memref<1x96x128xbf16, #tpu.memory_space<vmem>>, vector<1x96x128xbf16>
    %3 = vector.shape_cast %2 : vector<1x96x128xbf16> to vector<96x128xbf16>
    %cst = arith.constant dense<0.000000e+00> : vector<12x128xf32>
    %4 = tpu.matmul %1, %3, %cst {dimension_numbers = #tpu.dot_dimension_numbers<[1], [0], [0], [1], [0, 0, 1, 1], [], []>} : vector<12x96xbf16>, vector<96x128xbf16>, vector<12x128xf32> -> vector<12x128xf32>
    %c0_5 = arith.constant 0 : index
    %c0_6 = arith.constant 0 : index
    %5 = vector.load %arg4[%c0_5, %c0_6] : memref<12x1xf32, #tpu.memory_space<vmem>>, vector<12x1xf32>
    %6 = vector.broadcast %5 : vector<12x1xf32> to vector<12x128xf32>
    %7 = arith.mulf %4, %6 : vector<12x128xf32>
    %c0_7 = arith.constant 0 : index
    %c0_8 = arith.constant 0 : index
    %8 = vector.load %arg5[%c0_7, %c0_8] : memref<12x1xf32, #tpu.memory_space<vmem>>, vector<12x1xf32>
    %9 = vector.broadcast %8 : vector<12x1xf32> to vector<12x128xf32>
    %10 = arith.addf %7, %9 : vector<12x128xf32>
    %cst_9 = arith.constant 0.000000e+00 : f32
    %11 = vector.broadcast %cst_9 : f32 to vector<12x128xf32>
    %12 = arith.maximumf %10, %11 : vector<12x128xf32>
    %13 = arith.truncf %12 : vector<12x128xf32> to vector<12x128xbf16>
    %c0_10 = arith.constant 0 : index
    %c0_11 = arith.constant 0 : index
    %c0_12 = arith.constant 0 : index
    %14 = vector.load %arg6[%c0_10, %c0_11, %c0_12] : memref<1x12x128xbf16, #tpu.memory_space<vmem>>, vector<1x12x128xbf16>
    %15 = vector.shape_cast %14 : vector<1x12x128xbf16> to vector<12x128xbf16>
    %16 = vector.shape_cast %13 : vector<12x128xbf16> to vector<1x12x128xbf16>
    tpu.vector_store %arg6[%c0_10, %c0_11, %c0_12], %16 {strides = array<i32>} : memref<1x12x128xbf16, #tpu.memory_space<vmem>>, vector<1x12x128xbf16>,
    return
  }
  func.func @transform_0(%arg0: i32, %arg1: i32) -> (i32, i32, i32) {
    %c0_i32 = arith.constant 0 : i32
    %c0_i32_0 = arith.constant 0 : i32
    %c0_i32_1 = arith.constant 0 : i32
    return %arg0, %c0_i32, %c0_i32_0 : i32, i32, i32
  }
  func.func @transform_1(%arg0: i32, %arg1: i32) -> (i32, i32, i32) {
    %c0_i32 = arith.constant 0 : i32
    %c0_i32_0 = arith.constant 0 : i32
    return %arg0, %c0_i32, %arg1 : i32, i32, i32
  }
  func.func @transform_2(%arg0: i32, %arg1: i32) -> (i32, i32) {
    %c0_i32 = arith.constant 0 : i32
    %c0_i32_0 = arith.constant 0 : i32
    %c0_i32_1 = arith.constant 0 : i32
    return %c0_i32, %c0_i32_0 : i32, i32
  }
  func.func @transform_3(%arg0: i32, %arg1: i32) -> (i32, i32) {
    %c0_i32 = arith.constant 0 : i32
    %c0_i32_0 = arith.constant 0 : i32
    %c0_i32_1 = arith.constant 0 : i32
    return %c0_i32, %c0_i32_0 : i32, i32
  }
  func.func @transform_4(%arg0: i32, %arg1: i32) -> (i32, i32, i32) {
    %c0_i32 = arith.constant 0 : i32
    %c0_i32_0 = arith.constant 0 : i32
    return %arg0, %c0_i32, %arg1 : i32, i32, i32
  }
}

module attributes {stable_mosaic.version = 11 : i64} {
  func.func @_gemm_bn_act_kernel(%arg0: i32, %arg1: i32, %arg2: memref<1x6x48xbf16, #tpu.memory_space<vmem>>, %arg3: memref<1x48x512xbf16, #tpu.memory_space<vmem>>, %arg4: memref<6x1xf32, #tpu.memory_space<vmem>>, %arg5: memref<6x1xf32, #tpu.memory_space<vmem>>, %arg6: memref<1x6x512xbf16, #tpu.memory_space<vmem>>) attributes {dimension_semantics = [#tpu.dimension_semantics<parallel>, #tpu.dimension_semantics<parallel>], iteration_bounds = array<i64: 4, 1>, scalar_prefetch = 0 : i64, scratch_operands = 0 : i64, tpu.core_type = #tpu.core_type<tc>, window_params = [{transform_indices = @transform_0, window_bounds = array<i64: 1, 6, 48>}, {transform_indices = @transform_1, window_bounds = array<i64: 1, 48, 512>}, {pipeline_mode = #tpu.pipeline_mode<synchronous>, transform_indices = @transform_2, window_bounds = array<i64: 6, 1>}, {pipeline_mode = #tpu.pipeline_mode<synchronous>, transform_indices = @transform_3, window_bounds = array<i64: 6, 1>}, {transform_indices = @transform_4, window_bounds = array<i64: 1, 6, 512>}]} {
    %c0 = arith.constant 0 : index
    %c0_0 = arith.constant 0 : index
    %c0_1 = arith.constant 0 : index
    %0 = vector.load %arg2[%c0, %c0_0, %c0_1] : memref<1x6x48xbf16, #tpu.memory_space<vmem>>, vector<1x6x48xbf16>
    %1 = vector.shape_cast %0 : vector<1x6x48xbf16> to vector<6x48xbf16>
    %c0_2 = arith.constant 0 : index
    %c0_3 = arith.constant 0 : index
    %c0_4 = arith.constant 0 : index
    %2 = vector.load %arg3[%c0_2, %c0_3, %c0_4] : memref<1x48x512xbf16, #tpu.memory_space<vmem>>, vector<1x48x512xbf16>
    %3 = vector.shape_cast %2 : vector<1x48x512xbf16> to vector<48x512xbf16>
    %cst = arith.constant dense<0.000000e+00> : vector<6x512xf32>
    %4 = tpu.matmul %1, %3, %cst {dimension_numbers = #tpu.dot_dimension_numbers<[1], [0], [0], [1], [0, 0, 1, 1], [], []>} : vector<6x48xbf16>, vector<48x512xbf16>, vector<6x512xf32> -> vector<6x512xf32>
    %c0_5 = arith.constant 0 : index
    %c0_6 = arith.constant 0 : index
    %5 = vector.load %arg4[%c0_5, %c0_6] : memref<6x1xf32, #tpu.memory_space<vmem>>, vector<6x1xf32>
    %6 = vector.broadcast %5 : vector<6x1xf32> to vector<6x512xf32>
    %7 = arith.mulf %4, %6 : vector<6x512xf32>
    %c0_7 = arith.constant 0 : index
    %c0_8 = arith.constant 0 : index
    %8 = vector.load %arg5[%c0_7, %c0_8] : memref<6x1xf32, #tpu.memory_space<vmem>>, vector<6x1xf32>
    %9 = vector.broadcast %8 : vector<6x1xf32> to vector<6x512xf32>
    %10 = arith.addf %7, %9 : vector<6x512xf32>
    %cst_9 = arith.constant 0.000000e+00 : f32
    %11 = vector.broadcast %cst_9 : f32 to vector<6x512xf32>
    %12 = arith.maximumf %10, %11 : vector<6x512xf32>
    %13 = arith.truncf %12 : vector<6x512xf32> to vector<6x512xbf16>
    %c0_10 = arith.constant 0 : index
    %c0_11 = arith.constant 0 : index
    %c0_12 = arith.constant 0 : index
    %14 = vector.load %arg6[%c0_10, %c0_11, %c0_12] : memref<1x6x512xbf16, #tpu.memory_space<vmem>>, vector<1x6x512xbf16>
    %15 = vector.shape_cast %14 : vector<1x6x512xbf16> to vector<6x512xbf16>
    %16 = vector.shape_cast %13 : vector<6x512xbf16> to vector<1x6x512xbf16>
    tpu.vector_store %arg6[%c0_10, %c0_11, %c0_12], %16 {strides = array<i32>} : memref<1x6x512xbf16, #tpu.memory_space<vmem>>, vector<1x6x512xbf16>,
    return
  }
  func.func @transform_0(%arg0: i32, %arg1: i32) -> (i32, i32, i32) {
    %c0_i32 = arith.constant 0 : i32
    %c0_i32_0 = arith.constant 0 : i32
    %c0_i32_1 = arith.constant 0 : i32
    return %arg0, %c0_i32, %c0_i32_0 : i32, i32, i32
  }
  func.func @transform_1(%arg0: i32, %arg1: i32) -> (i32, i32, i32) {
    %c0_i32 = arith.constant 0 : i32
    %c0_i32_0 = arith.constant 0 : i32
    return %arg0, %c0_i32, %arg1 : i32, i32, i32
  }
  func.func @transform_2(%arg0: i32, %arg1: i32) -> (i32, i32) {
    %c0_i32 = arith.constant 0 : i32
    %c0_i32_0 = arith.constant 0 : i32
    %c0_i32_1 = arith.constant 0 : i32
    return %c0_i32, %c0_i32_0 : i32, i32
  }
  func.func @transform_3(%arg0: i32, %arg1: i32) -> (i32, i32) {
    %c0_i32 = arith.constant 0 : i32
    %c0_i32_0 = arith.constant 0 : i32
    %c0_i32_1 = arith.constant 0 : i32
    return %c0_i32, %c0_i32_0 : i32, i32
  }
  func.func @transform_4(%arg0: i32, %arg1: i32) -> (i32, i32, i32) {
    %c0_i32 = arith.constant 0 : i32
    %c0_i32_0 = arith.constant 0 : i32
    return %arg0, %c0_i32, %arg1 : i32, i32, i32
  }
}

module attributes {stable_mosaic.version = 11 : i64} {
  func.func @_gemm_bn_act_kernel(%arg0: i32, %arg1: i32, %arg2: memref<1x3x24xbf16, #tpu.memory_space<vmem>>, %arg3: memref<1x24x512xbf16, #tpu.memory_space<vmem>>, %arg4: memref<3x1xf32, #tpu.memory_space<vmem>>, %arg5: memref<3x1xf32, #tpu.memory_space<vmem>>, %arg6: memref<1x3x512xf32, #tpu.memory_space<vmem>>) attributes {dimension_semantics = [#tpu.dimension_semantics<parallel>, #tpu.dimension_semantics<parallel>], iteration_bounds = array<i64: 4, 4>, scalar_prefetch = 0 : i64, scratch_operands = 0 : i64, tpu.core_type = #tpu.core_type<tc>, window_params = [{transform_indices = @transform_0, window_bounds = array<i64: 1, 3, 24>}, {transform_indices = @transform_1, window_bounds = array<i64: 1, 24, 512>}, {pipeline_mode = #tpu.pipeline_mode<synchronous>, transform_indices = @transform_2, window_bounds = array<i64: 3, 1>}, {pipeline_mode = #tpu.pipeline_mode<synchronous>, transform_indices = @transform_3, window_bounds = array<i64: 3, 1>}, {transform_indices = @transform_4, window_bounds = array<i64: 1, 3, 512>}]} {
    %c0 = arith.constant 0 : index
    %c0_0 = arith.constant 0 : index
    %c0_1 = arith.constant 0 : index
    %0 = vector.load %arg2[%c0, %c0_0, %c0_1] : memref<1x3x24xbf16, #tpu.memory_space<vmem>>, vector<1x3x24xbf16>
    %1 = vector.shape_cast %0 : vector<1x3x24xbf16> to vector<3x24xbf16>
    %c0_2 = arith.constant 0 : index
    %c0_3 = arith.constant 0 : index
    %c0_4 = arith.constant 0 : index
    %2 = vector.load %arg3[%c0_2, %c0_3, %c0_4] : memref<1x24x512xbf16, #tpu.memory_space<vmem>>, vector<1x24x512xbf16>
    %3 = vector.shape_cast %2 : vector<1x24x512xbf16> to vector<24x512xbf16>
    %cst = arith.constant dense<0.000000e+00> : vector<3x512xf32>
    %4 = tpu.matmul %1, %3, %cst {dimension_numbers = #tpu.dot_dimension_numbers<[1], [0], [0], [1], [0, 0, 1, 1], [], []>} : vector<3x24xbf16>, vector<24x512xbf16>, vector<3x512xf32> -> vector<3x512xf32>
    %c0_5 = arith.constant 0 : index
    %c0_6 = arith.constant 0 : index
    %5 = vector.load %arg4[%c0_5, %c0_6] : memref<3x1xf32, #tpu.memory_space<vmem>>, vector<3x1xf32>
    %6 = vector.broadcast %5 : vector<3x1xf32> to vector<3x512xf32>
    %7 = arith.mulf %4, %6 : vector<3x512xf32>
    %c0_7 = arith.constant 0 : index
    %c0_8 = arith.constant 0 : index
    %8 = vector.load %arg5[%c0_7, %c0_8] : memref<3x1xf32, #tpu.memory_space<vmem>>, vector<3x1xf32>
    %9 = vector.broadcast %8 : vector<3x1xf32> to vector<3x512xf32>
    %10 = arith.addf %7, %9 : vector<3x512xf32>
    %11 = math.tanh %10 : vector<3x512xf32>
    %c0_9 = arith.constant 0 : index
    %c0_10 = arith.constant 0 : index
    %c0_11 = arith.constant 0 : index
    %12 = vector.load %arg6[%c0_9, %c0_10, %c0_11] : memref<1x3x512xf32, #tpu.memory_space<vmem>>, vector<1x3x512xf32>
    %13 = vector.shape_cast %12 : vector<1x3x512xf32> to vector<3x512xf32>
    %14 = vector.shape_cast %11 : vector<3x512xf32> to vector<1x3x512xf32>
    tpu.vector_store %arg6[%c0_9, %c0_10, %c0_11], %14 {strides = array<i32>} : memref<1x3x512xf32, #tpu.memory_space<vmem>>, vector<1x3x512xf32>,
    return
  }
  func.func @transform_0(%arg0: i32, %arg1: i32) -> (i32, i32, i32) {
    %c0_i32 = arith.constant 0 : i32
    %c0_i32_0 = arith.constant 0 : i32
    %c0_i32_1 = arith.constant 0 : i32
    return %arg0, %c0_i32, %c0_i32_0 : i32, i32, i32
  }
  func.func @transform_1(%arg0: i32, %arg1: i32) -> (i32, i32, i32) {
    %c0_i32 = arith.constant 0 : i32
    %c0_i32_0 = arith.constant 0 : i32
    return %arg0, %c0_i32, %arg1 : i32, i32, i32
  }
  func.func @transform_2(%arg0: i32, %arg1: i32) -> (i32, i32) {
    %c0_i32 = arith.constant 0 : i32
    %c0_i32_0 = arith.constant 0 : i32
    %c0_i32_1 = arith.constant 0 : i32
    return %c0_i32, %c0_i32_0 : i32, i32
  }
  func.func @transform_3(%arg0: i32, %arg1: i32) -> (i32, i32) {
    %c0_i32 = arith.constant 0 : i32
    %c0_i32_0 = arith.constant 0 : i32
    %c0_i32_1 = arith.constant 0 : i32
    return %c0_i32, %c0_i32_0 : i32, i32
  }
  func.func @transform_4(%arg0: i32, %arg1: i32) -> (i32, i32, i32) {
    %c0_i32 = arith.constant 0 : i32
    %c0_i32_0 = arith.constant 0 : i32
    return %arg0, %c0_i32, %arg1 : i32, i32, i32
  }
}

</mosaic_0001>

<llo_original>
// kernel: generator64_forward.6
$region0: #{generator64_forward.6}
  #allocation0 [shape = 'u32[]', space=smem, size = 0x4, offset = 0x4, fixed_abs, tag = 'smem constant byte address 0x4 - core index']
  #allocation1 [shape = 'u32[144,128]{1,0:T(1,128)}', space=vmem, size = 0x12000, scoped, tag = 'internal scratch']
  %s0 = inlined_call_operand.vmem [shape: bf16[4,24,192], index: 0, kind: input, shape index: {}]
  %s1 = inlined_call_operand.vmem [shape: bf16[4,192,32], index: 1, kind: input, shape index: {}]
  %s2 = inlined_call_operand.vmem [shape: f32[24,1], index: 2, kind: input, shape index: {}]
  %s3 = inlined_call_operand.vmem [shape: f32[24,1], index: 3, kind: input, shape index: {}]
  %s4 = inlined_call_operand.vmem [shape: bf16[4,24,32], index: 4, kind: output, shape index: {}]
  %s5 = sld [smem:[#allocation0]]
  $region49: #{generator64_forward.6} parent=0
    _
  %s7 = ssub.s32 1, %s5
  %s8 = scalar_select 0, %s7, %s5
  loop: start=0, step=1, limit=6
  $region2: #{generator64_forward.6} parent=0 // loop_pre_header
    _
  $region3: #{generator64_forward.6} parent=0 // loop_header
    %s10 = sphi 0, %s14
    %p11 = scmp.ge.s32.totalorder %s10, 6
    %s17 = sphi 0, %s29
    %s18 = sphi 0, %s25
    %s19 = sphi 0, %s17
    %s20 = sphi 0, %s18
    %s21 = sphi 0, %s19
    %s22 = sphi 0, %s20
    %s32 = sphi 0, %s34
    %s35 = sphi 0, %s32
    %s36 = sphi 0, %s35
    %s52 = sphi 0, %s36
    %s60 = sphi 0, %s62
    %s63 = sphi 0, %s60
    %s64 = sphi 0, %s63
    %s80 = sphi 0, %s64
    %s84 = sphi 0, %s84
    %s86 = sphi 0, %s84
    %s87 = sphi 0, %s86
    %s101 = sphi 0, %s87
    %s105 = sphi 0, %s105
    %s107 = sphi 0, %s105
    %s108 = sphi 0, %s107
    %s122 = sphi 0, %s108
    %s130 = sphi 0, %s132
    %s133 = sphi 0, %s130
    %s134 = sphi 0, %s133
    %s150 = sphi 0, %s134
  $region4: #{generator64_forward.6} parent=0 // loop_header_branch
    %13 = sbr.rel (%p11) target = $region8
  $region5: #{generator64_forward.6} parent=0 // loop_body
    %s15 = ssub.s32 %s10, 1
    %s16 = ssub.s32 %s10, 2
    %s23 = sadd.s32 1, %s18
    %p24 = scmp.ge.s32.totalorder %s23, 1
    %s25 = scalar_select %p24, 0, %s23
    %s26 = sadd.s32 1, %s17
    %s27 = scalar_select %p24, %s26, %s17
    %p28 = scmp.ge.s32.totalorder %s27, 4
    %s29 = scalar_select %p28, 0, %s27
    %s30 = ssub.s32 %s17, %s29
    %p31 = scmp.eq.s32.totalorder %s30, 0
    %s33 = sadd.s32 %s32, 1
    %s34 = scalar_select %p31, %s32, %s33
    %p37 = pneg %p31
    %p38 = scmp.eq.s32.totalorder %s10, 3
    %p39 = por %p37, %p38
    %p40 = scmp.ne.s32.totalorder %s32, %s35
    %p41 = scmp.eq.s32.totalorder %s10, 0
    %p42 = por %p40, %p41
    %p43 = scmp.ne.s32.totalorder %s32, %s35
    %p44 = scmp.eq.s32.totalorder %s15, 3
    %p45 = por %p43, %p44
    %p46 = scmp.ne.s32.totalorder %s35, %s36
    %p47 = scmp.eq.s32.totalorder %s15, 0
    %p48 = por %p46, %p47
    %p49 = scmp.ne.s32.totalorder %s35, %s36
    %p50 = scmp.eq.s32.totalorder %s16, 3
    %p51 = por %p49, %p50
    %p53 = scmp.ne.s32.totalorder %s36, %s52
    %p54 = scmp.eq.s32.totalorder %s16, 0
    %p55 = por %p53, %p54
    %s56 = ssub.s32 %s17, %s29
    %s57 = ssub.s32 %s18, %s25
    %s58 = sor.u32 %s56, %s57
    %p59 = scmp.eq.s32.totalorder %s58, 0
    %s61 = sadd.s32 %s60, 1
    %s62 = scalar_select %p59, %s60, %s61
    %p65 = pneg %p59
    %p66 = scmp.eq.s32.totalorder %s10, 3
    %p67 = por %p65, %p66
    %p68 = scmp.ne.s32.totalorder %s60, %s63
    %p69 = scmp.eq.s32.totalorder %s10, 0
    %p70 = por %p68, %p69
    %p71 = scmp.ne.s32.totalorder %s60, %s63
    %p72 = scmp.eq.s32.totalorder %s15, 3
    %p73 = por %p71, %p72
    %p74 = scmp.ne.s32.totalorder %s63, %s64
    %p75 = scmp.eq.s32.totalorder %s15, 0
    %p76 = por %p74, %p75
    %p77 = scmp.ne.s32.totalorder %s63, %s64
    %p78 = scmp.eq.s32.totalorder %s16, 3
    %p79 = por %p77, %p78
    %p81 = scmp.ne.s32.totalorder %s64, %s80
    %p82 = scmp.eq.s32.totalorder %s16, 0
    %p83 = por %p81, %p82
    %s85 = sadd.s32 %s84, 1
    %p88 = scmp.eq.s32.totalorder %s10, 3
    %p89 = scmp.ne.s32.totalorder %s84, %s86
    %p90 = scmp.eq.s32.totalorder %s10, 0
    %p91 = por %p89, %p90
    %p92 = scmp.ne.s32.totalorder %s84, %s86
    %p93 = scmp.eq.s32.totalorder %s15, 3
    %p94 = por %p92, %p93
    %p95 = scmp.ne.s32.totalorder %s86, %s87
    %p96 = scmp.eq.s32.totalorder %s15, 0
    %p97 = por %p95, %p96
    %p98 = scmp.ne.s32.totalorder %s86, %s87
    %p99 = scmp.eq.s32.totalorder %s16, 3
    %p100 = por %p98, %p99
    %p102 = scmp.ne.s32.totalorder %s87, %s101
    %p103 = scmp.eq.s32.totalorder %s16, 0
    %p104 = por %p102, %p103
    %s106 = sadd.s32 %s105, 1
    %p109 = scmp.eq.s32.totalorder %s10, 3
    %p110 = scmp.ne.s32.totalorder %s105, %s107
    %p111 = scmp.eq.s32.totalorder %s10, 0
    %p112 = por %p110, %p111
    %p113 = scmp.ne.s32.totalorder %s105, %s107
    %p114 = scmp.eq.s32.totalorder %s15, 3
    %p115 = por %p113, %p114
    %p116 = scmp.ne.s32.totalorder %s107, %s108
    %p117 = scmp.eq.s32.totalorder %s15, 0
    %p118 = por %p116, %p117
    %p119 = scmp.ne.s32.totalorder %s107, %s108
    %p120 = scmp.eq.s32.totalorder %s16, 3
    %p121 = por %p119, %p120
    %p123 = scmp.ne.s32.totalorder %s108, %s122
    %p124 = scmp.eq.s32.totalorder %s16, 0
    %p125 = por %p123, %p124
    %s126 = ssub.s32 %s17, %s29
    %s127 = ssub.s32 %s18, %s25
    %s128 = sor.u32 %s126, %s127
    %p129 = scmp.eq.s32.totalorder %s128, 0
    %s131 = sadd.s32 %s130, 1
    %s132 = scalar_select %p129, %s130, %s131
    %p135 = pneg %p129
    %p136 = scmp.eq.s32.totalorder %s10, 3
    %p137 = por %p135, %p136
    %p138 = scmp.ne.s32.totalorder %s130, %s133
    %p139 = scmp.eq.s32.totalorder %s10, 0
    %p140 = por %p138, %p139
    %p141 = scmp.ne.s32.totalorder %s130, %s133
    %p142 = scmp.eq.s32.totalorder %s15, 3
    %p143 = por %p141, %p142
    %p144 = scmp.ne.s32.totalorder %s133, %s134
    %p145 = scmp.eq.s32.totalorder %s15, 0
    %p146 = por %p144, %p145
    %p147 = scmp.ne.s32.totalorder %s133, %s134
    %p148 = scmp.eq.s32.totalorder %s16, 3
    %p149 = por %p147, %p148
    %p151 = scmp.ne.s32.totalorder %s134, %s150
    %p152 = scmp.eq.s32.totalorder %s16, 0
    %p153 = por %p151, %p152
    %p154 = scmp.le.s32.totalorder 1, %s10
    %p155 = scmp.lt.s32.totalorder %s10, 5
    %p156 = pnand %p154, %p155
    %p157 = pneg %p156
    // Predicated region
    $region9: #{generator64_forward.6} parent=5 // pred_check
      _
    $region10: #{generator64_forward.6} parent=5 // pred_check_branch
      %159 = sbr.rel (%p156) target = $region12
    $region11: #{generator64_forward.6} parent=5 // pred_region
      %s160 = ssub.s32 %s10, 1
      // Predicated region
      $region13: #{generator64_forward.6} parent=11 // pred_check
        %p161 = pneg %p97
      $region14: #{generator64_forward.6} parent=11 // pred_check_branch
        %163 = sbr.rel (%p161) target = $region16
      $region15: #{generator64_forward.6} parent=11 // pred_region
        _
      $region16: #{generator64_forward.6} parent=11 // pred_fallthru
        _
      // Predicated region
      $region17: #{generator64_forward.6} parent=11 // pred_check
        %p164 = pneg %p118
      $region18: #{generator64_forward.6} parent=11 // pred_check_branch
        %166 = sbr.rel (%p164) target = $region20
      $region19: #{generator64_forward.6} parent=11 // pred_region
        _
      $region20: #{generator64_forward.6} parent=11 // pred_fallthru
        _
    $region12: #{generator64_forward.6} parent=5 // pred_fallthru
      _
    %p167 = scmp.lt.s32.totalorder %s10, 4
    // Predicated region
    $region21: #{generator64_forward.6} parent=5 // pred_check
      %p168 = pneg %p167
    $region22: #{generator64_forward.6} parent=5 // pred_check_branch
      %170 = sbr.rel (%p168) target = $region24
    $region23: #{generator64_forward.6} parent=5 // pred_region
      // Predicated region
      $region25: #{generator64_forward.6} parent=23 // pred_check
        %p171 = pneg %p42
      $region26: #{generator64_forward.6} parent=23 // pred_check_branch
        %173 = sbr.rel (%p171) target = $region28
      $region27: #{generator64_forward.6} parent=23 // pred_region
        %p174 = scmp.lt.s32.totalorder %s17, 3
        %s175 = scalar_select %p174, %s17, 3
        %s176 = smul.addr %s175, 6
        %s177 = smul.addr %s176, 4
        %s178 = scalar_lea.vmem %s0, %s177
      $region28: #{generator64_forward.6} parent=23 // pred_fallthru
        _
      // Predicated region
      $region29: #{generator64_forward.6} parent=23 // pred_check
        %p179 = pneg %p70
      $region30: #{generator64_forward.6} parent=23 // pred_check_branch
        %181 = sbr.rel (%p179) target = $region32
      $region31: #{generator64_forward.6} parent=23 // pred_region
        %p182 = scmp.lt.s32.totalorder %s17, 3
        %s183 = scalar_select %p182, %s17, 3
        %p184 = scmp.lt.s32.totalorder %s18, 0
        %s185 = scalar_select %p184, %s18, 0
        %s186 = smul.addr %s183, 24
        %s187 = sadd.s32 %s185, %s186
        %s188 = smul.addr %s187, 4
        %s189 = scalar_lea.vmem %s1, %s188
      $region32: #{generator64_forward.6} parent=23 // pred_fallthru
        _
    $region24: #{generator64_forward.6} parent=5 // pred_fallthru
      _
    %p190 = scmp.le.s32.totalorder 1, %s10
    %p191 = scmp.lt.s32.totalorder %s10, 5
    %p192 = pnand %p190, %p191
    %p193 = pneg %p192
    // Predicated region
    $region33: #{generator64_forward.6} parent=5 // pred_check
      _
    $region34: #{generator64_forward.6} parent=5 // pred_check_branch
      %195 = sbr.rel (%p192) target = $region36
    $region35: #{generator64_forward.6} parent=5 // pred_region
      %s196 = ssub.s32 %s10, 1
      %p197 = scmp.lt.s32.totalorder %s19, 3
      %s198 = scalar_select %p197, %s19, 3
      %s199 = smul.addr %s198, 6
      %s200 = smul.addr %s199, 4
      %s201 = scalar_lea.vmem %s0, %s200
      %p202 = pneg %p48
      %p203 = pneg %p45
      %p204 = scmp.lt.s32.totalorder %s19, 3
      %s205 = scalar_select %p204, %s19, 3
      %p206 = scmp.lt.s32.totalorder %s20, 0
      %s207 = scalar_select %p206, %s20, 0
      %s208 = smul.addr %s205, 24
      %s209 = sadd.s32 %s207, %s208
      %s210 = smul.addr %s209, 4
      %s211 = scalar_lea.vmem %s1, %s210
      %p212 = pneg %p76
      %p213 = pneg %p73
      %p214 = pneg %p97
      %p215 = pneg %p94
      %p216 = pneg %p118
      %p217 = pneg %p115
      %p218 = pneg %p146
      %p219 = pneg %p143
      %p220 = scmp.lt.s32.totalorder %s19, 3
      %s221 = scalar_select %p220, %s19, 3
      %p222 = scmp.lt.s32.totalorder %s20, 0
      %s223 = scalar_select %p222, %s20, 0
      %s224 = smul.addr %s221, 3
      %s225 = sadd.s32 %s223, %s224
      %s226 = smul.addr %s225, 4
      %s227 = scalar_lea.vmem %s4, %s226
      %p228 = scmp.lt.s32.totalorder %s19, 3
      %s229 = scalar_select %p228, %s19, 3
      %s230 = smul.addr %s229, 6
      %s231 = smul.addr %s230, 4
      %s232 = scalar_lea.vmem %s0, %s231
      %p233 = scmp.lt.s32.totalorder %s19, 3
      %s234 = scalar_select %p233, %s19, 3
      %p235 = scmp.lt.s32.totalorder %s20, 0
      %s236 = scalar_select %p235, %s20, 0
      %s237 = smul.addr %s234, 24
      %s238 = sadd.s32 %s236, %s237
      %s239 = smul.addr %s238, 4
      %s240 = scalar_lea.vmem %s1, %s239
      %p241 = scmp.lt.s32.totalorder %s19, 3
      %s242 = scalar_select %p241, %s19, 3
      %p243 = scmp.lt.s32.totalorder %s20, 0
      %s244 = scalar_select %p243, %s20, 0
      %s245 = smul.addr %s242, 3
      %s246 = sadd.s32 %s244, %s245
      %s247 = smul.addr %s246, 4
      %s248 = scalar_lea.vmem %s4, %s247
      %v250 = vld [vmem:[%s232] sm:$0xff]
      %v251 = vld [vmem:[%s232 + $0x8] sm:$0xff]
      %v252 = vld [vmem:[%s232 + $0x10] sm:$0xff]
      %v253 = vld [vmem:[%s240] sm:$0xf]
      %v254 = vld [vmem:[%s240 + $0x4] sm:$0xf]
      %v255 = vld [vmem:[%s240 + $0x8] sm:$0xf]
      %v256 = vld [vmem:[%s240 + $0xc] sm:$0xf]
      %v257 = vld [vmem:[%s240 + $0x10] sm:$0xf]
      %v258 = vld [vmem:[%s240 + $0x14] sm:$0xf]
      %v259 = vld [vmem:[%s240 + $0x18] sm:$0xf]
      %v260 = vld [vmem:[%s240 + $0x1c] sm:$0xf]
      %v261 = vld [vmem:[%s240 + $0x20] sm:$0xf]
      %v262 = vld [vmem:[%s240 + $0x24] sm:$0xf]
      %v263 = vld [vmem:[%s240 + $0x28] sm:$0xf]
      %v264 = vld [vmem:[%s240 + $0x2c] sm:$0xf]
      %v265 = vld [vmem:[%s240 + $0x30] sm:$0xf]
      %v266 = vld [vmem:[%s240 + $0x34] sm:$0xf]
      %v267 = vld [vmem:[%s240 + $0x38] sm:$0xf]
      %v268 = vld [vmem:[%s240 + $0x3c] sm:$0xf]
      %v269 = vld [vmem:[%s240 + $0x40] sm:$0xf]
      %v270 = vld [vmem:[%s240 + $0x44] sm:$0xf]
      %v271 = vld [vmem:[%s240 + $0x48] sm:$0xf]
      %v272 = vld [vmem:[%s240 + $0x4c] sm:$0xf]
      %v273 = vld [vmem:[%s240 + $0x50] sm:$0xf]
      %v274 = vld [vmem:[%s240 + $0x54] sm:$0xf]
      %v275 = vld [vmem:[%s240 + $0x58] sm:$0xf]
      %v276 = vld [vmem:[%s240 + $0x5c] sm:$0xf]
      %v280 = vunpack.c.l.b16 %v250
      %v281 = vunpack.c.h.b16 %v250
      %v282 = vunpack.c.l.b16 %v251
      %v283 = vunpack.c.h.b16 %v251
      %v284 = vunpack.c.l.b16 %v252
      %v285 = vunpack.c.h.b16 %v252
      %v286 = vpack.c.b16 %v282, %v280
      %v287 = vpack.c.b16 %v283, %v281
      %v288 = vpack.c.b16 %v284, %v284
      %v289 = vpack.c.b16 %v285, %v285
      %v316 = vunpack.c.l.b16 %v253
      %v317 = vunpack.c.l.b16 %v254
      %v318 = vunpack.c.l.b16 %v255
      %v319 = vunpack.c.l.b16 %v256
      %v320 = vunpack.c.l.b16 %v257
      %v321 = vunpack.c.l.b16 %v258
      %v322 = vunpack.c.l.b16 %v259
      %v323 = vunpack.c.l.b16 %v260
      %v324 = vunpack.c.l.b16 %v261
      %v325 = vunpack.c.l.b16 %v262
      %v326 = vunpack.c.l.b16 %v263
      %v327 = vunpack.c.l.b16 %v264
      %v328 = vunpack.c.l.b16 %v265
      %v329 = vunpack.c.l.b16 %v266
      %v330 = vunpack.c.l.b16 %v267
      %v331 = vunpack.c.l.b16 %v268
      %v332 = vunpack.c.l.b16 %v269
      %v333 = vunpack.c.l.b16 %v270
      %v334 = vunpack.c.l.b16 %v271
      %v335 = vunpack.c.l.b16 %v272
      %v336 = vunpack.c.l.b16 %v273
      %v337 = vunpack.c.l.b16 %v274
      %v338 = vunpack.c.l.b16 %v275
      %v339 = vunpack.c.l.b16 %v276
      %v340 = vpack.c.b16 %v317, %v316
      %v341 = vpack.c.b16 %v319, %v318
      %v342 = vpack.c.b16 %v321, %v320
      %v343 = vpack.c.b16 %v323, %v322
      %v344 = vpack.c.b16 %v325, %v324
      %v345 = vpack.c.b16 %v327, %v326
      %v346 = vpack.c.b16 %v329, %v328
      %v347 = vpack.c.b16 %v331, %v330
      %v348 = vpack.c.b16 %v333, %v332
      %v349 = vpack.c.b16 %v335, %v334
      %v350 = vpack.c.b16 %v337, %v336
      %v351 = vpack.c.b16 %v339, %v338
      %vm364 = vcmask 523264
      %v366 = vsel %vm364, %v287, 0
      %v369 = vsel %vm364, %v289, 0
      %371 = vmatprep.subr.bf16.mxu0 0
      %372 = vmatpush1.bf16.msra.mxu0 %v347
      %373 = vmatprep.subr.bf16.mxu0 0
      %374 = vmatpush1.bf16.msra.mxu0 %v346
      %375 = vmatprep.subr.bf16.mxu0 0
      %376 = vmatpush1.bf16.msra.mxu0 %v345
      %377 = vmatprep.subr.bf16.mxu0 0
      %378 = vmatpush1.bf16.msra.mxu0 %v344
      %379 = vmatprep.subr.bf16.mxu0 0
      %380 = vmatpush1.bf16.msra.mxu0 %v343
      %381 = vmatprep.subr.bf16.mxu0 0
      %382 = vmatpush1.bf16.msra.mxu0 %v342
      %383 = vmatprep.subr.bf16.mxu0 0
      %384 = vmatpush1.bf16.msra.mxu0 %v341
      %385 = vmatprep.subr.bf16.mxu0 0
      %386 = vmatpush1.bf16.msra.mxu0 %v340
      %387 = vmatprep.subr.bf16.mxu0 0
      %388 = vmatpush2.bf16.msra.mxu0 0
      %389 = vmatprep.subr.bf16.mxu0 0
      %390 = vmatpush2.bf16.msra.mxu0 0
      %391 = vmatprep.subr.bf16.mxu0 0
      %392 = vmatpush2.bf16.msra.mxu0 0
      %393 = vmatprep.subr.bf16.mxu0 0
      %394 = vmatpush2.bf16.msra.mxu0 0
      %395 = vmatprep.subr.bf16.mxu0 0
      %396 = vmatpush2.bf16.msra.mxu0 %v351
      %397 = vmatprep.subr.bf16.mxu0 0
      %398 = vmatpush2.bf16.msra.mxu0 %v350
      %399 = vmatprep.subr.bf16.mxu0 0
      %400 = vmatpush2.bf16.msra.mxu0 %v349
      %401 = vmatprep.subr.bf16.mxu0 0
      %402 = vmatpush2.bf16.msra.mxu0 %v348
      %403 = vmatprep.mubr.bf16.mxu0 %v366
      %404 = vmatmul.mubr.bf16.gmra.mxu0 %v286
      %v405 = vpop.f32.mrf.mxu0
      %v406 = vadd.f32 0.0, %v405
      %v407 = vpop.f32.mrf.mxu0
      %v408 = vpop.f32.mrf.mxu0
      %v409 = vadd.f32 0.0, %v408
      %v410 = vpop.f32.mrf.mxu0
      %411 = vmatprep.mubr.bf16.mxu0 %v369
      %412 = vmatmul.mubr.bf16.gmra.mxu0 %v288
      %v413 = vpop.f32.mrf.mxu0
      %v414 = vadd.f32 0.0, %v413
      %v415 = vpop.f32.mrf.mxu0
      %v416 = vpop.f32.mrf.mxu0
      %v417 = vpop.f32.mrf.mxu0
      %418 = vdwg.mxu0
      %v419 = vld [vmem:[%s2] sm:$0xff]
      %v420 = vld [vmem:[%s2 + $0x8] sm:$0xff]
      %v421 = vld [vmem:[%s2 + $0x10] sm:$0xff]
      %423 = vset.pattern.permute.xlu0 0
      %424 = vperm.xlu0 %423, %v419
      %v425 = vpop.permute.xlu0 %424
      %428 = vset.pattern.permute.xlu0 0
      %429 = vperm.xlu0 %428, %v420
      %v430 = vpop.permute.xlu0 %429
      %433 = vset.pattern.permute.xlu0 0
      %434 = vperm.xlu0 %433, %v421
      %v435 = vpop.permute.xlu0 %434
      %v437 = vmul.f32 %v406, %v425
      %v438 = vmul.f32 %v409, %v430
      %v439 = vmul.f32 %v414, %v435
      %v440 = vld [vmem:[%s3] sm:$0xff]
      %v441 = vld [vmem:[%s3 + $0x8] sm:$0xff]
      %v442 = vld [vmem:[%s3 + $0x10] sm:$0xff]
      %444 = vset.pattern.permute.xlu0 0
      %445 = vperm.xlu0 %444, %v440
      %v446 = vpop.permute.xlu0 %445
      %449 = vset.pattern.permute.xlu0 0
      %450 = vperm.xlu0 %449, %v441
      %v451 = vpop.permute.xlu0 %450
      %454 = vset.pattern.permute.xlu0 0
      %455 = vperm.xlu0 %454, %v442
      %v456 = vpop.permute.xlu0 %455
      %v458 = vadd.f32 %v437, %v446
      %v459 = vadd.f32 %v438, %v451
      %v460 = vadd.f32 %v439, %v456
      %v461 = vmax.f32 %v458, 0.0
      %v462 = vmax.f32 %v459, 0.0
      %v463 = vmax.f32 %v460, 0.0
      %v464 = vpack.c.bf16 %v462, %v461
      %v465 = vpack.c.bf16 %v463, %v463
      %v468 = vunpack.c.l.b16 %v464
      %v469 = vunpack.c.h.b16 %v464
      %v470 = vunpack.c.l.b16 %v465
      %v471 = vpack.c.b16 %v468, %v468
      %v472 = vpack.c.b16 %v469, %v469
      %v473 = vpack.c.b16 %v470, %v470
      %vm477 = vcmask 257024
      %478 = vst.msk [vmem:[%s248] sm:$0xf] %vm477, %v471
      %479 = vst.msk [vmem:[%s248 + $0x4] sm:$0xf] %vm477, %v472
      %480 = vst.msk [vmem:[%s248 + $0x8] sm:$0xf] %vm477, %v473
      %p481 = scmp.lt.s32.totalorder %s19, 3
      %s482 = scalar_select %p481, %s19, 3
      %p483 = scmp.lt.s32.totalorder %s20, 0
      %s484 = scalar_select %p483, %s20, 0
      %s485 = smul.addr %s482, 3
      %s486 = sadd.s32 %s484, %s485
      %s487 = smul.addr %s486, 4
      %s488 = scalar_lea.vmem %s4, %s487
      // Predicated region
      $region37: #{generator64_forward.6} parent=35 // pred_check
        %p489 = pneg %p143
      $region38: #{generator64_forward.6} parent=35 // pred_check_branch
        %491 = sbr.rel (%p489) target = $region40
      $region39: #{generator64_forward.6} parent=35 // pred_region
        _
      $region40: #{generator64_forward.6} parent=35 // pred_fallthru
        _
    $region36: #{generator64_forward.6} parent=5 // pred_fallthru
      _
    %p492 = scmp.le.s32.totalorder 2, %s10
    // Predicated region
    $region41: #{generator64_forward.6} parent=5 // pred_check
      %p493 = pneg %p492
    $region42: #{generator64_forward.6} parent=5 // pred_check_branch
      %495 = sbr.rel (%p493) target = $region44
    $region43: #{generator64_forward.6} parent=5 // pred_region
      %s496 = ssub.s32 %s10, 2
      // Predicated region
      $region45: #{generator64_forward.6} parent=43 // pred_check
        %p497 = pneg %p149
      $region46: #{generator64_forward.6} parent=43 // pred_check_branch
        %499 = sbr.rel (%p497) target = $region48
      $region47: #{generator64_forward.6} parent=43 // pred_region
        %p500 = scmp.lt.s32.totalorder %s21, 3
        %s501 = scalar_select %p500, %s21, 3
        %p502 = scmp.lt.s32.totalorder %s22, 0
        %s503 = scalar_select %p502, %s22, 0
        %s504 = smul.addr %s501, 3
        %s505 = sadd.s32 %s503, %s504
        %s506 = smul.addr %s505, 4
        %s507 = scalar_lea.vmem %s4, %s506
      $region48: #{generator64_forward.6} parent=43 // pred_fallthru
        _
    $region44: #{generator64_forward.6} parent=5 // pred_fallthru
      _
  $region6: #{generator64_forward.6} parent=0 // loop_footer
    %s14 = sadd.s32 1, %s10
  $region7: #{generator64_forward.6} parent=0 // loop_footer_branch
    %9 = sbr.rel target = $region3
  $region8: #{generator64_forward.6} parent=0 // loop_exit
    _

// kernel: generator64_forward.5
$region0: #{generator64_forward.5}
  #allocation0 [shape = 'u32[]', space=smem, size = 0x4, offset = 0x4, fixed_abs, tag = 'smem constant byte address 0x4 - core index']
  #allocation1 [shape = 'u32[144,128]{1,0:T(1,128)}', space=vmem, size = 0x12000, scoped, tag = 'internal scratch']
  %s0 = inlined_call_operand.vmem [shape: bf16[1,768,8], index: 0, kind: input, shape index: {}]
  %s1 = inlined_call_operand.vmem [shape: bf16[1,8,2], index: 1, kind: input, shape index: {}]
  %s2 = inlined_call_operand.vmem [shape: f32[768,1], index: 2, kind: input, shape index: {}]
  %s3 = inlined_call_operand.vmem [shape: f32[768,1], index: 3, kind: input, shape index: {}]
  %s4 = inlined_call_operand.vmem [shape: bf16[1,768,2], index: 4, kind: output, shape index: {}]
  %s5 = sld [smem:[#allocation0]]
  $region26: #{generator64_forward.5} parent=0
    _
  %s7 = ssub.s32 1, %s5
  %s8 = scalar_select 0, %s7, %s5
  // Predicated region
  $region2: #{generator64_forward.5} parent=0 // pred_check
    _
  $region3: #{generator64_forward.5} parent=0 // pred_check_branch
    %10 = sbr.rel (0) target = $region5
  $region4: #{generator64_forward.5} parent=0 // pred_region
    _
  $region5: #{generator64_forward.5} parent=0 // pred_fallthru
    _
  // Predicated region
  $region6: #{generator64_forward.5} parent=0 // pred_check
    _
  $region7: #{generator64_forward.5} parent=0 // pred_check_branch
    %12 = sbr.rel (0) target = $region9
  $region8: #{generator64_forward.5} parent=0 // pred_region
    _
  $region9: #{generator64_forward.5} parent=0 // pred_fallthru
    _
  // Predicated region
  $region10: #{generator64_forward.5} parent=0 // pred_check
    _
  $region11: #{generator64_forward.5} parent=0 // pred_check_branch
    %14 = sbr.rel (0) target = $region13
  $region12: #{generator64_forward.5} parent=0 // pred_region
    _
  $region13: #{generator64_forward.5} parent=0 // pred_fallthru
    _
  // Predicated region
  $region14: #{generator64_forward.5} parent=0 // pred_check
    _
  $region15: #{generator64_forward.5} parent=0 // pred_check_branch
    %16 = sbr.rel (0) target = $region17
  $region16: #{generator64_forward.5} parent=0 // pred_region
    _
  $region17: #{generator64_forward.5} parent=0 // pred_fallthru
    _
  %v18 = vld [vmem:[%s0] sm:$0xf]
  %v19 = vld [vmem:[%s0 + $0x4] sm:$0xf]
  %v20 = vld [vmem:[%s0 + $0x8] sm:$0xf]
  %v21 = vld [vmem:[%s0 + $0xc] sm:$0xf]
  %v22 = vld [vmem:[%s0 + $0x10] sm:$0xf]
  %v23 = vld [vmem:[%s0 + $0x14] sm:$0xf]
  %v24 = vld [vmem:[%s0 + $0x18] sm:$0xf]
  %v25 = vld [vmem:[%s0 + $0x1c] sm:$0xf]
  %v26 = vld [vmem:[%s0 + $0x20] sm:$0xf]
  %v27 = vld [vmem:[%s0 + $0x24] sm:$0xf]
  %v28 = vld [vmem:[%s0 + $0x28] sm:$0xf]
  %v29 = vld [vmem:[%s0 + $0x2c] sm:$0xf]
  %v30 = vld [vmem:[%s0 + $0x30] sm:$0xf]
  %v31 = vld [vmem:[%s0 + $0x34] sm:$0xf]
  %v32 = vld [vmem:[%s0 + $0x38] sm:$0xf]
  %v33 = vld [vmem:[%s0 + $0x3c] sm:$0xf]
  %v34 = vld [vmem:[%s0 + $0x40] sm:$0xf]
  %v35 = vld [vmem:[%s0 + $0x44] sm:$0xf]
  %v36 = vld [vmem:[%s0 + $0x48] sm:$0xf]
  %v37 = vld [vmem:[%s0 + $0x4c] sm:$0xf]
  %v38 = vld [vmem:[%s0 + $0x50] sm:$0xf]
  %v39 = vld [vmem:[%s0 + $0x54] sm:$0xf]
  %v40 = vld [vmem:[%s0 + $0x58] sm:$0xf]
  %v41 = vld [vmem:[%s0 + $0x5c] sm:$0xf]
  %v42 = vld [vmem:[%s0 + $0x60] sm:$0xf]
  %v43 = vld [vmem:[%s0 + $0x64] sm:$0xf]
  %v44 = vld [vmem:[%s0 + $0x68] sm:$0xf]
  %v45 = vld [vmem:[%s0 + $0x6c] sm:$0xf]
  %v46 = vld [vmem:[%s0 + $0x70] sm:$0xf]
  %v47 = vld [vmem:[%s0 + $0x74] sm:$0xf]
  %v48 = vld [vmem:[%s0 + $0x78] sm:$0xf]
  %v49 = vld [vmem:[%s0 + $0x7c] sm:$0xf]
  %v50 = vld [vmem:[%s0 + $0x80] sm:$0xf]
  %v51 = vld [vmem:[%s0 + $0x84] sm:$0xf]
  %v52 = vld [vmem:[%s0 + $0x88] sm:$0xf]
  %v53 = vld [vmem:[%s0 + $0x8c] sm:$0xf]
  %v54 = vld [vmem:[%s0 + $0x90] sm:$0xf]
  %v55 = vld [vmem:[%s0 + $0x94] sm:$0xf]
  %v56 = vld [vmem:[%s0 + $0x98] sm:$0xf]
  %v57 = vld [vmem:[%s0 + $0x9c] sm:$0xf]
  %v58 = vld [vmem:[%s0 + $0xa0] sm:$0xf]
  %v59 = vld [vmem:[%s0 + $0xa4] sm:$0xf]
  %v60 = vld [vmem:[%s0 + $0xa8] sm:$0xf]
  %v61 = vld [vmem:[%s0 + $0xac] sm:$0xf]
  %v62 = vld [vmem:[%s0 + $0xb0] sm:$0xf]
  %v63 = vld [vmem:[%s0 + $0xb4] sm:$0xf]
  %v64 = vld [vmem:[%s0 + $0xb8] sm:$0xf]
  %v65 = vld [vmem:[%s0 + $0xbc] sm:$0xf]
  %v66 = vld [vmem:[%s0 + $0xc0] sm:$0xf]
  %v67 = vld [vmem:[%s0 + $0xc4] sm:$0xf]
  %v68 = vld [vmem:[%s0 + $0xc8] sm:$0xf]
  %v69 = vld [vmem:[%s0 + $0xcc] sm:$0xf]
  %v70 = vld [vmem:[%s0 + $0xd0] sm:$0xf]
  %v71 = vld [vmem:[%s0 + $0xd4] sm:$0xf]
  %v72 = vld [vmem:[%s0 + $0xd8] sm:$0xf]
  %v73 = vld [vmem:[%s0 + $0xdc] sm:$0xf]
  %v74 = vld [vmem:[%s0 + $0xe0] sm:$0xf]
  %v75 = vld [vmem:[%s0 + $0xe4] sm:$0xf]
  %v76 = vld [vmem:[%s0 + $0xe8] sm:$0xf]
  %v77 = vld [vmem:[%s0 + $0xec] sm:$0xf]
  %v78 = vld [vmem:[%s0 + $0xf0] sm:$0xf]
  %v79 = vld [vmem:[%s0 + $0xf4] sm:$0xf]
  %v80 = vld [vmem:[%s0 + $0xf8] sm:$0xf]
  %v81 = vld [vmem:[%s0 + $0xfc] sm:$0xf]
  %v82 = vld [vmem:[%s0 + $0x100] sm:$0xf]
  %v83 = vld [vmem:[%s0 + $0x104] sm:$0xf]
  %v84 = vld [vmem:[%s0 + $0x108] sm:$0xf]
  %v85 = vld [vmem:[%s0 + $0x10c] sm:$0xf]
  %v86 = vld [vmem:[%s0 + $0x110] sm:$0xf]
  %v87 = vld [vmem:[%s0 + $0x114] sm:$0xf]
  %v88 = vld [vmem:[%s0 + $0x118] sm:$0xf]
  %v89 = vld [vmem:[%s0 + $0x11c] sm:$0xf]
  %v90 = vld [vmem:[%s0 + $0x120] sm:$0xf]
  %v91 = vld [vmem:[%s0 + $0x124] sm:$0xf]
  %v92 = vld [vmem:[%s0 + $0x128] sm:$0xf]
  %v93 = vld [vmem:[%s0 + $0x12c] sm:$0xf]
  %v94 = vld [vmem:[%s0 + $0x130] sm:$0xf]
  %v95 = vld [vmem:[%s0 + $0x134] sm:$0xf]
  %v96 = vld [vmem:[%s0 + $0x138] sm:$0xf]
  %v97 = vld [vmem:[%s0 + $0x13c] sm:$0xf]
  %v98 = vld [vmem:[%s0 + $0x140] sm:$0xf]
  %v99 = vld [vmem:[%s0 + $0x144] sm:$0xf]
  %v100 = vld [vmem:[%s0 + $0x148] sm:$0xf]
  %v101 = vld [vmem:[%s0 + $0x14c] sm:$0xf]
  %v102 = vld [vmem:[%s0 + $0x150] sm:$0xf]
  %v103 = vld [vmem:[%s0 + $0x154] sm:$0xf]
  %v104 = vld [vmem:[%s0 + $0x158] sm:$0xf]
  %v105 = vld [vmem:[%s0 + $0x15c] sm:$0xf]
  %v106 = vld [vmem:[%s0 + $0x160] sm:$0xf]
  %v107 = vld [vmem:[%s0 + $0x164] sm:$0xf]
  %v108 = vld [vmem:[%s0 + $0x168] sm:$0xf]
  %v109 = vld [vmem:[%s0 + $0x16c] sm:$0xf]
  %v110 = vld [vmem:[%s0 + $0x170] sm:$0xf]
  %v111 = vld [vmem:[%s0 + $0x174] sm:$0xf]
  %v112 = vld [vmem:[%s0 + $0x178] sm:$0xf]
  %v113 = vld [vmem:[%s0 + $0x17c] sm:$0xf]
  %v114 = vld [vmem:[%s1] sm:$0xf]
  %v211 = vunpack.c.l.b16 %v18
  %v212 = vunpack.c.l.b16 %v19
  %v213 = vunpack.c.l.b16 %v20
  %v214 = vunpack.c.l.b16 %v21
  %v215 = vunpack.c.l.b16 %v22
  %v216 = vunpack.c.l.b16 %v23
  %v217 = vunpack.c.l.b16 %v24
  %v218 = vunpack.c.l.b16 %v25
  %v219 = vunpack.c.l.b16 %v26
  %v220 = vunpack.c.l.b16 %v27
  %v221 = vunpack.c.l.b16 %v28
  %v222 = vunpack.c.l.b16 %v29
  %v223 = vunpack.c.l.b16 %v30
  %v224 = vunpack.c.l.b16 %v31
  %v225 = vunpack.c.l.b16 %v32
  %v226 = vunpack.c.l.b16 %v33
  %v227 = vunpack.c.l.b16 %v34
  %v228 = vunpack.c.l.b16 %v35
  %v229 = vunpack.c.l.b16 %v36
  %v230 = vunpack.c.l.b16 %v37
  %v231 = vunpack.c.l.b16 %v38
  %v232 = vunpack.c.l.b16 %v39
  %v233 = vunpack.c.l.b16 %v40
  %v234 = vunpack.c.l.b16 %v41
  %v235 = vunpack.c.l.b16 %v42
  %v236 = vunpack.c.l.b16 %v43
  %v237 = vunpack.c.l.b16 %v44
  %v238 = vunpack.c.l.b16 %v45
  %v239 = vunpack.c.l.b16 %v46
  %v240 = vunpack.c.l.b16 %v47
  %v241 = vunpack.c.l.b16 %v48
  %v242 = vunpack.c.l.b16 %v49
  %v243 = vunpack.c.l.b16 %v50
  %v244 = vunpack.c.l.b16 %v51
  %v245 = vunpack.c.l.b16 %v52
  %v246 = vunpack.c.l.b16 %v53
  %v247 = vunpack.c.l.b16 %v54
  %v248 = vunpack.c.l.b16 %v55
  %v249 = vunpack.c.l.b16 %v56
  %v250 = vunpack.c.l.b16 %v57
  %v251 = vunpack.c.l.b16 %v58
  %v252 = vunpack.c.l.b16 %v59
  %v253 = vunpack.c.l.b16 %v60
  %v254 = vunpack.c.l.b16 %v61
  %v255 = vunpack.c.l.b16 %v62
  %v256 = vunpack.c.l.b16 %v63
  %v257 = vunpack.c.l.b16 %v64
  %v258 = vunpack.c.l.b16 %v65
  %v259 = vunpack.c.l.b16 %v66
  %v260 = vunpack.c.l.b16 %v67
  %v261 = vunpack.c.l.b16 %v68
  %v262 = vunpack.c.l.b16 %v69
  %v263 = vunpack.c.l.b16 %v70
  %v264 = vunpack.c.l.b16 %v71
  %v265 = vunpack.c.l.b16 %v72
  %v266 = vunpack.c.l.b16 %v73
  %v267 = vunpack.c.l.b16 %v74
  %v268 = vunpack.c.l.b16 %v75
  %v269 = vunpack.c.l.b16 %v76
  %v270 = vunpack.c.l.b16 %v77
  %v271 = vunpack.c.l.b16 %v78
  %v272 = vunpack.c.l.b16 %v79
  %v273 = vunpack.c.l.b16 %v80
  %v274 = vunpack.c.l.b16 %v81
  %v275 = vunpack.c.l.b16 %v82
  %v276 = vunpack.c.l.b16 %v83
  %v277 = vunpack.c.l.b16 %v84
  %v278 = vunpack.c.l.b16 %v85
  %v279 = vunpack.c.l.b16 %v86
  %v280 = vunpack.c.l.b16 %v87
  %v281 = vunpack.c.l.b16 %v88
  %v282 = vunpack.c.l.b16 %v89
  %v283 = vunpack.c.l.b16 %v90
  %v284 = vunpack.c.l.b16 %v91
  %v285 = vunpack.c.l.b16 %v92
  %v286 = vunpack.c.l.b16 %v93
  %v287 = vunpack.c.l.b16 %v94
  %v288 = vunpack.c.l.b16 %v95
  %v289 = vunpack.c.l.b16 %v96
  %v290 = vunpack.c.l.b16 %v97
  %v291 = vunpack.c.l.b16 %v98
  %v292 = vunpack.c.l.b16 %v99
  %v293 = vunpack.c.l.b16 %v100
  %v294 = vunpack.c.l.b16 %v101
  %v295 = vunpack.c.l.b16 %v102
  %v296 = vunpack.c.l.b16 %v103
  %v297 = vunpack.c.l.b16 %v104
  %v298 = vunpack.c.l.b16 %v105
  %v299 = vunpack.c.l.b16 %v106
  %v300 = vunpack.c.l.b16 %v107
  %v301 = vunpack.c.l.b16 %v108
  %v302 = vunpack.c.l.b16 %v109
  %v303 = vunpack.c.l.b16 %v110
  %v304 = vunpack.c.l.b16 %v111
  %v305 = vunpack.c.l.b16 %v112
  %v306 = vunpack.c.l.b16 %v113
  %v307 = vpack.c.b16 %v212, %v211
  %v308 = vpack.c.b16 %v214, %v213
  %v309 = vpack.c.b16 %v216, %v215
  %v310 = vpack.c.b16 %v218, %v217
  %v311 = vpack.c.b16 %v220, %v219
  %v312 = vpack.c.b16 %v222, %v221
  %v313 = vpack.c.b16 %v224, %v223
  %v314 = vpack.c.b16 %v226, %v225
  %v315 = vpack.c.b16 %v228, %v227
  %v316 = vpack.c.b16 %v230, %v229
  %v317 = vpack.c.b16 %v232, %v231
  %v318 = vpack.c.b16 %v234, %v233
  %v319 = vpack.c.b16 %v236, %v235
  %v320 = vpack.c.b16 %v238, %v237
  %v321 = vpack.c.b16 %v240, %v239
  %v322 = vpack.c.b16 %v242, %v241
  %v323 = vpack.c.b16 %v244, %v243
  %v324 = vpack.c.b16 %v246, %v245
  %v325 = vpack.c.b16 %v248, %v247
  %v326 = vpack.c.b16 %v250, %v249
  %v327 = vpack.c.b16 %v252, %v251
  %v328 = vpack.c.b16 %v254, %v253
  %v329 = vpack.c.b16 %v256, %v255
  %v330 = vpack.c.b16 %v258, %v257
  %v331 = vpack.c.b16 %v260, %v259
  %v332 = vpack.c.b16 %v262, %v261
  %v333 = vpack.c.b16 %v264, %v263
  %v334 = vpack.c.b16 %v266, %v265
  %v335 = vpack.c.b16 %v268, %v267
  %v336 = vpack.c.b16 %v270, %v269
  %v337 = vpack.c.b16 %v272, %v271
  %v338 = vpack.c.b16 %v274, %v273
  %v339 = vpack.c.b16 %v276, %v275
  %v340 = vpack.c.b16 %v278, %v277
  %v341 = vpack.c.b16 %v280, %v279
  %v342 = vpack.c.b16 %v282, %v281
  %v343 = vpack.c.b16 %v284, %v283
  %v344 = vpack.c.b16 %v286, %v285
  %v345 = vpack.c.b16 %v288, %v287
  %v346 = vpack.c.b16 %v290, %v289
  %v347 = vpack.c.b16 %v292, %v291
  %v348 = vpack.c.b16 %v294, %v293
  %v349 = vpack.c.b16 %v296, %v295
  %v350 = vpack.c.b16 %v298, %v297
  %v351 = vpack.c.b16 %v300, %v299
  %v352 = vpack.c.b16 %v302, %v301
  %v353 = vpack.c.b16 %v304, %v303
  %v354 = vpack.c.b16 %v306, %v305
  %vm355 = vcmask 64512
  %v357 = vsel %vm355, %v307, 0
  %v360 = vsel %vm355, %v308, 0
  %v363 = vsel %vm355, %v309, 0
  %v366 = vsel %vm355, %v310, 0
  %v369 = vsel %vm355, %v311, 0
  %v372 = vsel %vm355, %v312, 0
  %v375 = vsel %vm355, %v313, 0
  %v378 = vsel %vm355, %v314, 0
  %v381 = vsel %vm355, %v315, 0
  %v384 = vsel %vm355, %v316, 0
  %v387 = vsel %vm355, %v317, 0
  %v390 = vsel %vm355, %v318, 0
  %v393 = vsel %vm355, %v319, 0
  %v396 = vsel %vm355, %v320, 0
  %v399 = vsel %vm355, %v321, 0
  %v402 = vsel %vm355, %v322, 0
  %v405 = vsel %vm355, %v323, 0
  %v408 = vsel %vm355, %v324, 0
  %v411 = vsel %vm355, %v325, 0
  %v414 = vsel %vm355, %v326, 0
  %v417 = vsel %vm355, %v327, 0
  %v420 = vsel %vm355, %v328, 0
  %v423 = vsel %vm355, %v329, 0
  %v426 = vsel %vm355, %v330, 0
  %v429 = vsel %vm355, %v331, 0
  %v432 = vsel %vm355, %v332, 0
  %v435 = vsel %vm355, %v333, 0
  %v438 = vsel %vm355, %v334, 0
  %v441 = vsel %vm355, %v335, 0
  %v444 = vsel %vm355, %v336, 0
  %v447 = vsel %vm355, %v337, 0
  %v450 = vsel %vm355, %v338, 0
  %v453 = vsel %vm355, %v339, 0
  %v456 = vsel %vm355, %v340, 0
  %v459 = vsel %vm355, %v341, 0
  %v462 = vsel %vm355, %v342, 0
  %v465 = vsel %vm355, %v343, 0
  %v468 = vsel %vm355, %v344, 0
  %v471 = vsel %vm355, %v345, 0
  %v474 = vsel %vm355, %v346, 0
  %v477 = vsel %vm355, %v347, 0
  %v480 = vsel %vm355, %v348, 0
  %v483 = vsel %vm355, %v349, 0
  %v486 = vsel %vm355, %v350, 0
  %v489 = vsel %vm355, %v351, 0
  %v492 = vsel %vm355, %v352, 0
  %v495 = vsel %vm355, %v353, 0
  %v498 = vsel %vm355, %v354, 0
  %vm500 = vcmask 1043456
  %v502 = vsel %vm500, %v114, 0
  %504 = vmatprep.subr.bf16.mxu0 0
  %505 = vmatpush1.bf16.msra.mxu0 0
  %506 = vmatprep.subr.bf16.mxu0 0
  %507 = vmatpush1.bf16.msra.mxu0 0
  %508 = vmatprep.subr.bf16.mxu0 0
  %509 = vmatpush1.bf16.msra.mxu0 0
  %510 = vmatprep.subr.bf16.mxu0 0
  %511 = vmatpush1.bf16.msra.mxu0 0
  %512 = vmatprep.subr.bf16.mxu0 0
  %513 = vmatpush1.bf16.msra.mxu0 0
  %514 = vmatprep.subr.bf16.mxu0 0
  %515 = vmatpush1.bf16.msra.mxu0 0
  %516 = vmatprep.subr.bf16.mxu0 0
  %517 = vmatpush1.bf16.msra.mxu0 0
  %518 = vmatprep.subr.bf16.mxu0 0
  %519 = vmatpush1.bf16.msra.mxu0 %v502
  %520 = vmatprep.subr.bf16.mxu0 0
  %521 = vmatpush2.bf16.msra.mxu0 0
  %522 = vmatprep.subr.bf16.mxu0 0
  %523 = vmatpush2.bf16.msra.mxu0 0
  %524 = vmatprep.subr.bf16.mxu0 0
  %525 = vmatpush2.bf16.msra.mxu0 0
  %526 = vmatprep.subr.bf16.mxu0 0
  %527 = vmatpush2.bf16.msra.mxu0 0
  %528 = vmatprep.subr.bf16.mxu0 0
  %529 = vmatpush2.bf16.msra.mxu0 0
  %530 = vmatprep.subr.bf16.mxu0 0
  %531 = vmatpush2.bf16.msra.mxu0 0
  %532 = vmatprep.subr.bf16.mxu0 0
  %533 = vmatpush2.bf16.msra.mxu0 0
  %534 = vmatprep.subr.bf16.mxu0 0
  %535 = vmatpush2.bf16.msra.mxu0 0
  %536 = vmatprep.mubr.bf16.mxu0 0
  %537 = vmatmul.mubr.bf16.gmra.mxu0 %v357
  %v538 = vpop.f32.mrf.mxu0
  %v539 = vadd.f32 0.0, %v538
  %v540 = vpop.f32.mrf.mxu0
  %v541 = vpop.f32.mrf.mxu0
  %v542 = vadd.f32 0.0, %v541
  %v543 = vpop.f32.mrf.mxu0
  %544 = vmatprep.mubr.bf16.mxu0 0
  %545 = vmatmul.mubr.bf16.gmra.mxu0 %v360
  %v546 = vpop.f32.mrf.mxu0
  %v547 = vadd.f32 0.0, %v546
  %v548 = vpop.f32.mrf.mxu0
  %v549 = vpop.f32.mrf.mxu0
  %v550 = vadd.f32 0.0, %v549
  %v551 = vpop.f32.mrf.mxu0
  %552 = vmatprep.mubr.bf16.mxu0 0
  %553 = vmatmul.mubr.bf16.gmra.mxu0 %v363
  %v554 = vpop.f32.mrf.mxu0
  %v555 = vadd.f32 0.0, %v554
  %v556 = vpop.f32.mrf.mxu0
  %v557 = vpop.f32.mrf.mxu0
  %v558 = vadd.f32 0.0, %v557
  %v559 = vpop.f32.mrf.mxu0
  %560 = vmatprep.mubr.bf16.mxu0 0
  %561 = vmatmul.mubr.bf16.gmra.mxu0 %v366
  %v562 = vpop.f32.mrf.mxu0
  %v563 = vadd.f32 0.0, %v562
  %v564 = vpop.f32.mrf.mxu0
  %v565 = vpop.f32.mrf.mxu0
  %v566 = vadd.f32 0.0, %v565
  %v567 = vpop.f32.mrf.mxu0
  %568 = vmatprep.mubr.bf16.mxu0 0
  %569 = vmatmul.mubr.bf16.gmra.mxu0 %v369
  %v570 = vpop.f32.mrf.mxu0
  %v571 = vadd.f32 0.0, %v570
  %v572 = vpop.f32.mrf.mxu0
  %v573 = vpop.f32.mrf.mxu0
  %v574 = vadd.f32 0.0, %v573
  %v575 = vpop.f32.mrf.mxu0
  %576 = vmatprep.mubr.bf16.mxu0 0
  %577 = vmatmul.mubr.bf16.gmra.mxu0 %v372
  %v578 = vpop.f32.mrf.mxu0
  %v579 = vadd.f32 0.0, %v578
  %v580 = vpop.f32.mrf.mxu0
  %v581 = vpop.f32.mrf.mxu0
  %v582 = vadd.f32 0.0, %v581
  %v583 = vpop.f32.mrf.mxu0
  %584 = vmatprep.mubr.bf16.mxu0 0
  %585 = vmatmul.mubr.bf16.gmra.mxu0 %v375
  %v586 = vpop.f32.mrf.mxu0
  %v587 = vadd.f32 0.0, %v586
  %v588 = vpop.f32.mrf.mxu0
  %v589 = vpop.f32.mrf.mxu0
  %v590 = vadd.f32 0.0, %v589
  %v591 = vpop.f32.mrf.mxu0
  %592 = vmatprep.mubr.bf16.mxu0 0
  %593 = vmatmul.mubr.bf16.gmra.mxu0 %v378
  %v594 = vpop.f32.mrf.mxu0
  %v595 = vadd.f32 0.0, %v594
  %v596 = vpop.f32.mrf.mxu0
  %v597 = vpop.f32.mrf.mxu0
  %v598 = vadd.f32 0.0, %v597
  %v599 = vpop.f32.mrf.mxu0
  %600 = vmatprep.mubr.bf16.mxu0 0
  %601 = vmatmul.mubr.bf16.gmra.mxu0 %v381
  %v602 = vpop.f32.mrf.mxu0
  %v603 = vadd.f32 0.0, %v602
  %v604 = vpop.f32.mrf.mxu0
  %v605 = vpop.f32.mrf.mxu0
  %v606 = vadd.f32 0.0, %v605
  %v607 = vpop.f32.mrf.mxu0
  %608 = vmatprep.mubr.bf16.mxu0 0
  %609 = vmatmul.mubr.bf16.gmra.mxu0 %v384
  %v610 = vpop.f32.mrf.mxu0
  %v611 = vadd.f32 0.0, %v610
  %v612 = vpop.f32.mrf.mxu0
  %v613 = vpop.f32.mrf.mxu0
  %v614 = vadd.f32 0.0, %v613
  %v615 = vpop.f32.mrf.mxu0
  %616 = vmatprep.mubr.bf16.mxu0 0
  %617 = vmatmul.mubr.bf16.gmra.mxu0 %v387
  %v618 = vpop.f32.mrf.mxu0
  %v619 = vadd.f32 0.0, %v618
  %v620 = vpop.f32.mrf.mxu0
  %v621 = vpop.f32.mrf.mxu0
  %v622 = vadd.f32 0.0, %v621
  %v623 = vpop.f32.mrf.mxu0
  %624 = vmatprep.mubr.bf16.mxu0 0
  %625 = vmatmul.mubr.bf16.gmra.mxu0 %v390
  %v626 = vpop.f32.mrf.mxu0
  %v627 = vadd.f32 0.0, %v626
  %v628 = vpop.f32.mrf.mxu0
  %v629 = vpop.f32.mrf.mxu0
  %v630 = vadd.f32 0.0, %v629
  %v631 = vpop.f32.mrf.mxu0
  %632 = vmatprep.mubr.bf16.mxu0 0
  %633 = vmatmul.mubr.bf16.gmra.mxu0 %v393
  %v634 = vpop.f32.mrf.mxu0
  %v635 = vadd.f32 0.0, %v634
  %v636 = vpop.f32.mrf.mxu0
  %v637 = vpop.f32.mrf.mxu0
  %v638 = vadd.f32 0.0, %v637
  %v639 = vpop.f32.mrf.mxu0
  %640 = vmatprep.mubr.bf16.mxu0 0
  %641 = vmatmul.mubr.bf16.gmra.mxu0 %v396
  %v642 = vpop.f32.mrf.mxu0
  %v643 = vadd.f32 0.0, %v642
  %v644 = vpop.f32.mrf.mxu0
  %v645 = vpop.f32.mrf.mxu0
  %v646 = vadd.f32 0.0, %v645
  %v647 = vpop.f32.mrf.mxu0
  %648 = vmatprep.mubr.bf16.mxu0 0
  %649 = vmatmul.mubr.bf16.gmra.mxu0 %v399
  %v650 = vpop.f32.mrf.mxu0
  %v651 = vadd.f32 0.0, %v650
  %v652 = vpop.f32.mrf.mxu0
  %v653 = vpop.f32.mrf.mxu0
  %v654 = vadd.f32 0.0, %v653
  %v655 = vpop.f32.mrf.mxu0
  %656 = vmatprep.mubr.bf16.mxu0 0
  %657 = vmatmul.mubr.bf16.gmra.mxu0 %v402
  %v658 = vpop.f32.mrf.mxu0
  %v659 = vadd.f32 0.0, %v658
  %v660 = vpop.f32.mrf.mxu0
  %v661 = vpop.f32.mrf.mxu0
  %v662 = vadd.f32 0.0, %v661
  %v663 = vpop.f32.mrf.mxu0
  %664 = vmatprep.mubr.bf16.mxu0 0
  %665 = vmatmul.mubr.bf16.gmra.mxu0 %v405
  %v666 = vpop.f32.mrf.mxu0
  %v667 = vadd.f32 0.0, %v666
  %v668 = vpop.f32.mrf.mxu0
  %v669 = vpop.f32.mrf.mxu0
  %v670 = vadd.f32 0.0, %v669
  %v671 = vpop.f32.mrf.mxu0
  %672 = vmatprep.mubr.bf16.mxu0 0
  %673 = vmatmul.mubr.bf16.gmra.mxu0 %v408
  %v674 = vpop.f32.mrf.mxu0
  %v675 = vadd.f32 0.0, %v674
  %v676 = vpop.f32.mrf.mxu0
  %v677 = vpop.f32.mrf.mxu0
  %v678 = vadd.f32 0.0, %v677
  %v679 = vpop.f32.mrf.mxu0
  %680 = vmatprep.mubr.bf16.mxu0 0
  %681 = vmatmul.mubr.bf16.gmra.mxu0 %v411
  %v682 = vpop.f32.mrf.mxu0
  %v683 = vadd.f32 0.0, %v682
  %v684 = vpop.f32.mrf.mxu0
  %v685 = vpop.f32.mrf.mxu0
  %v686 = vadd.f32 0.0, %v685
  %v687 = vpop.f32.mrf.mxu0
  %688 = vmatprep.mubr.bf16.mxu0 0
  %689 = vmatmul.mubr.bf16.gmra.mxu0 %v414
  %v690 = vpop.f32.mrf.mxu0
  %v691 = vadd.f32 0.0, %v690
  %v692 = vpop.f32.mrf.mxu0
  %v693 = vpop.f32.mrf.mxu0
  %v694 = vadd.f32 0.0, %v693
  %v695 = vpop.f32.mrf.mxu0
  %696 = vmatprep.mubr.bf16.mxu0 0
  %697 = vmatmul.mubr.bf16.gmra.mxu0 %v417
  %v698 = vpop.f32.mrf.mxu0
  %v699 = vadd.f32 0.0, %v698
  %v700 = vpop.f32.mrf.mxu0
  %v701 = vpop.f32.mrf.mxu0
  %v702 = vadd.f32 0.0, %v701
  %v703 = vpop.f32.mrf.mxu0
  %704 = vmatprep.mubr.bf16.mxu0 0
  %705 = vmatmul.mubr.bf16.gmra.mxu0 %v420
  %v706 = vpop.f32.mrf.mxu0
  %v707 = vadd.f32 0.0, %v706
  %v708 = vpop.f32.mrf.mxu0
  %v709 = vpop.f32.mrf.mxu0
  %v710 = vadd.f32 0.0, %v709
  %v711 = vpop.f32.mrf.mxu0
  %712 = vmatprep.mubr.bf16.mxu0 0
  %713 = vmatmul.mubr.bf16.gmra.mxu0 %v423
  %v714 = vpop.f32.mrf.mxu0
  %v715 = vadd.f32 0.0, %v714
  %v716 = vpop.f32.mrf.mxu0
  %v717 = vpop.f32.mrf.mxu0
  %v718 = vadd.f32 0.0, %v717
  %v719 = vpop.f32.mrf.mxu0
  %720 = vmatprep.mubr.bf16.mxu0 0
  %721 = vmatmul.mubr.bf16.gmra.mxu0 %v426
  %v722 = vpop.f32.mrf.mxu0
  %v723 = vadd.f32 0.0, %v722
  %v724 = vpop.f32.mrf.mxu0
  %v725 = vpop.f32.mrf.mxu0
  %v726 = vadd.f32 0.0, %v725
  %v727 = vpop.f32.mrf.mxu0
  %728 = vmatprep.mubr.bf16.mxu0 0
  %729 = vmatmul.mubr.bf16.gmra.mxu0 %v429
  %v730 = vpop.f32.mrf.mxu0
  %v731 = vadd.f32 0.0, %v730
  %v732 = vpop.f32.mrf.mxu0
  %v733 = vpop.f32.mrf.mxu0
  %v734 = vadd.f32 0.0, %v733
  %v735 = vpop.f32.mrf.mxu0
  %736 = vmatprep.mubr.bf16.mxu0 0
  %737 = vmatmul.mubr.bf16.gmra.mxu0 %v432
  %v738 = vpop.f32.mrf.mxu0
  %v739 = vadd.f32 0.0, %v738
  %v740 = vpop.f32.mrf.mxu0
  %v741 = vpop.f32.mrf.mxu0
  %v742 = vadd.f32 0.0, %v741
  %v743 = vpop.f32.mrf.mxu0
  %744 = vmatprep.mubr.bf16.mxu0 0
  %745 = vmatmul.mubr.bf16.gmra.mxu0 %v435
  %v746 = vpop.f32.mrf.mxu0
  %v747 = vadd.f32 0.0, %v746
  %v748 = vpop.f32.mrf.mxu0
  %v749 = vpop.f32.mrf.mxu0
  %v750 = vadd.f32 0.0, %v749
  %v751 = vpop.f32.mrf.mxu0
  %752 = vmatprep.mubr.bf16.mxu0 0
  %753 = vmatmul.mubr.bf16.gmra.mxu0 %v438
  %v754 = vpop.f32.mrf.mxu0
  %v755 = vadd.f32 0.0, %v754
  %v756 = vpop.f32.mrf.mxu0
  %v757 = vpop.f32.mrf.mxu0
  %v758 = vadd.f32 0.0, %v757
  %v759 = vpop.f32.mrf.mxu0
  %760 = vmatprep.mubr.bf16.mxu0 0
  %761 = vmatmul.mubr.bf16.gmra.mxu0 %v441
  %v762 = vpop.f32.mrf.mxu0
  %v763 = vadd.f32 0.0, %v762
  %v764 = vpop.f32.mrf.mxu0
  %v765 = vpop.f32.mrf.mxu0
  %v766 = vadd.f32 0.0, %v765
  %v767 = vpop.f32.mrf.mxu0
  %768 = vmatprep.mubr.bf16.mxu0 0
  %769 = vmatmul.mubr.bf16.gmra.mxu0 %v444
  %v770 = vpop.f32.mrf.mxu0
  %v771 = vadd.f32 0.0, %v770
  %v772 = vpop.f32.mrf.mxu0
  %v773 = vpop.f32.mrf.mxu0
  %v774 = vadd.f32 0.0, %v773
  %v775 = vpop.f32.mrf.mxu0
  %776 = vmatprep.mubr.bf16.mxu0 0
  %777 = vmatmul.mubr.bf16.gmra.mxu0 %v447
  %v778 = vpop.f32.mrf.mxu0
  %v779 = vadd.f32 0.0, %v778
  %v780 = vpop.f32.mrf.mxu0
  %v781 = vpop.f32.mrf.mxu0
  %v782 = vadd.f32 0.0, %v781
  %v783 = vpop.f32.mrf.mxu0
  %784 = vmatprep.mubr.bf16.mxu0 0
  %785 = vmatmul.mubr.bf16.gmra.mxu0 %v450
  %v786 = vpop.f32.mrf.mxu0
  %v787 = vadd.f32 0.0, %v786
  %v788 = vpop.f32.mrf.mxu0
  %v789 = vpop.f32.mrf.mxu0
  %v790 = vadd.f32 0.0, %v789
  %v791 = vpop.f32.mrf.mxu0
  %792 = vmatprep.mubr.bf16.mxu0 0
  %793 = vmatmul.mubr.bf16.gmra.mxu0 %v453
  %v794 = vpop.f32.mrf.mxu0
  %v795 = vadd.f32 0.0, %v794
  %v796 = vpop.f32.mrf.mxu0
  %v797 = vpop.f32.mrf.mxu0
  %v798 = vadd.f32 0.0, %v797
  %v799 = vpop.f32.mrf.mxu0
  %800 = vmatprep.mubr.bf16.mxu0 0
  %801 = vmatmul.mubr.bf16.gmra.mxu0 %v456
  %v802 = vpop.f32.mrf.mxu0
  %v803 = vadd.f32 0.0, %v802
  %v804 = vpop.f32.mrf.mxu0
  %v805 = vpop.f32.mrf.mxu0
  %v806 = vadd.f32 0.0, %v805
  %v807 = vpop.f32.mrf.mxu0
  %808 = vmatprep.mubr.bf16.mxu0 0
  %809 = vmatmul.mubr.bf16.gmra.mxu0 %v459
  %v810 = vpop.f32.mrf.mxu0
  %v811 = vadd.f32 0.0, %v810
  %v812 = vpop.f32.mrf.mxu0
  %v813 = vpop.f32.mrf.mxu0
  %v814 = vadd.f32 0.0, %v813
  %v815 = vpop.f32.mrf.mxu0
  %816 = vmatprep.mubr.bf16.mxu0 0
  %817 = vmatmul.mubr.bf16.gmra.mxu0 %v462
  %v818 = vpop.f32.mrf.mxu0
  %v819 = vadd.f32 0.0, %v818
  %v820 = vpop.f32.mrf.mxu0
  %v821 = vpop.f32.mrf.mxu0
  %v822 = vadd.f32 0.0, %v821
  %v823 = vpop.f32.mrf.mxu0
  %824 = vmatprep.mubr.bf16.mxu0 0
  %825 = vmatmul.mubr.bf16.gmra.mxu0 %v465
  %v826 = vpop.f32.mrf.mxu0
  %v827 = vadd.f32 0.0, %v826
  %v828 = vpop.f32.mrf.mxu0
  %v829 = vpop.f32.mrf.mxu0
  %v830 = vadd.f32 0.0, %v829
  %v831 = vpop.f32.mrf.mxu0
  %832 = vmatprep.mubr.bf16.mxu0 0
  %833 = vmatmul.mubr.bf16.gmra.mxu0 %v468
  %v834 = vpop.f32.mrf.mxu0
  %v835 = vadd.f32 0.0, %v834
  %v836 = vpop.f32.mrf.mxu0
  %v837 = vpop.f32.mrf.mxu0
  %v838 = vadd.f32 0.0, %v837
  %v839 = vpop.f32.mrf.mxu0
  %840 = vmatprep.mubr.bf16.mxu0 0
  %841 = vmatmul.mubr.bf16.gmra.mxu0 %v471
  %v842 = vpop.f32.mrf.mxu0
  %v843 = vadd.f32 0.0, %v842
  %v844 = vpop.f32.mrf.mxu0
  %v845 = vpop.f32.mrf.mxu0
  %v846 = vadd.f32 0.0, %v845
  %v847 = vpop.f32.mrf.mxu0
  %848 = vmatprep.mubr.bf16.mxu0 0
  %849 = vmatmul.mubr.bf16.gmra.mxu0 %v474
  %v850 = vpop.f32.mrf.mxu0
  %v851 = vadd.f32 0.0, %v850
  %v852 = vpop.f32.mrf.mxu0
  %v853 = vpop.f32.mrf.mxu0
  %v854 = vadd.f32 0.0, %v853
  %v855 = vpop.f32.mrf.mxu0
  %856 = vmatprep.mubr.bf16.mxu0 0
  %857 = vmatmul.mubr.bf16.gmra.mxu0 %v477
  %v858 = vpop.f32.mrf.mxu0
  %v859 = vadd.f32 0.0, %v858
  %v860 = vpop.f32.mrf.mxu0
  %v861 = vpop.f32.mrf.mxu0
  %v862 = vadd.f32 0.0, %v861
  %v863 = vpop.f32.mrf.mxu0
  %864 = vmatprep.mubr.bf16.mxu0 0
  %865 = vmatmul.mubr.bf16.gmra.mxu0 %v480
  %v866 = vpop.f32.mrf.mxu0
  %v867 = vadd.f32 0.0, %v866
  %v868 = vpop.f32.mrf.mxu0
  %v869 = vpop.f32.mrf.mxu0
  %v870 = vadd.f32 0.0, %v869
  %v871 = vpop.f32.mrf.mxu0
  %872 = vmatprep.mubr.bf16.mxu0 0
  %873 = vmatmul.mubr.bf16.gmra.mxu0 %v483
  %v874 = vpop.f32.mrf.mxu0
  %v875 = vadd.f32 0.0, %v874
  %v876 = vpop.f32.mrf.mxu0
  %v877 = vpop.f32.mrf.mxu0
  %v878 = vadd.f32 0.0, %v877
  %v879 = vpop.f32.mrf.mxu0
  %880 = vmatprep.mubr.bf16.mxu0 0
  %881 = vmatmul.mubr.bf16.gmra.mxu0 %v486
  %v882 = vpop.f32.mrf.mxu0
  %v883 = vadd.f32 0.0, %v882
  %v884 = vpop.f32.mrf.mxu0
  %v885 = vpop.f32.mrf.mxu0
  %v886 = vadd.f32 0.0, %v885
  %v887 = vpop.f32.mrf.mxu0
  %888 = vmatprep.mubr.bf16.mxu0 0
  %889 = vmatmul.mubr.bf16.gmra.mxu0 %v489
  %v890 = vpop.f32.mrf.mxu0
  %v891 = vadd.f32 0.0, %v890
  %v892 = vpop.f32.mrf.mxu0
  %v893 = vpop.f32.mrf.mxu0
  %v894 = vadd.f32 0.0, %v893
  %v895 = vpop.f32.mrf.mxu0
  %896 = vmatprep.mubr.bf16.mxu0 0
  %897 = vmatmul.mubr.bf16.gmra.mxu0 %v492
  %v898 = vpop.f32.mrf.mxu0
  %v899 = vadd.f32 0.0, %v898
  %v900 = vpop.f32.mrf.mxu0
  %v901 = vpop.f32.mrf.mxu0
  %v902 = vadd.f32 0.0, %v901
  %v903 = vpop.f32.mrf.mxu0
  %904 = vmatprep.mubr.bf16.mxu0 0
  %905 = vmatmul.mubr.bf16.gmra.mxu0 %v495
  %v906 = vpop.f32.mrf.mxu0
  %v907 = vadd.f32 0.0, %v906
  %v908 = vpop.f32.mrf.mxu0
  %v909 = vpop.f32.mrf.mxu0
  %v910 = vadd.f32 0.0, %v909
  %v911 = vpop.f32.mrf.mxu0
  %912 = vmatprep.mubr.bf16.mxu0 0
  %913 = vmatmul.mubr.bf16.gmra.mxu0 %v498
  %v914 = vpop.f32.mrf.mxu0
  %v915 = vadd.f32 0.0, %v914
  %v916 = vpop.f32.mrf.mxu0
  %v917 = vpop.f32.mrf.mxu0
  %v918 = vadd.f32 0.0, %v917
  %v919 = vpop.f32.mrf.mxu0
  %920 = vdwg.mxu0
  %v921 = vld [vmem:[%s2] sm:$0xff]
  %v922 = vld [vmem:[%s2 + $0x8] sm:$0xff]
  %v923 = vld [vmem:[%s2 + $0x10] sm:$0xff]
  %v924 = vld [vmem:[%s2 + $0x18] sm:$0xff]
  %v925 = vld [vmem:[%s2 + $0x20] sm:$0xff]
  %v926 = vld [vmem:[%s2 + $0x28] sm:$0xff]
  %v927 = vld [vmem:[%s2 + $0x30] sm:$0xff]
  %v928 = vld [vmem:[%s2 + $0x38] sm:$0xff]
  %v929 = vld [vmem:[%s2 + $0x40] sm:$0xff]
  %v930 = vld [vmem:[%s2 + $0x48] sm:$0xff]
  %v931 = vld [vmem:[%s2 + $0x50] sm:$0xff]
  %v932 = vld [vmem:[%s2 + $0x58] sm:$0xff]
  %v933 = vld [vmem:[%s2 + $0x60] sm:$0xff]
  %v934 = vld [vmem:[%s2 + $0x68] sm:$0xff]
  %v935 = vld [vmem:[%s2 + $0x70] sm:$0xff]
  %v936 = vld [vmem:[%s2 + $0x78] sm:$0xff]
  %v937 = vld [vmem:[%s2 + $0x80] sm:$0xff]
  %v938 = vld [vmem:[%s2 + $0x88] sm:$0xff]
  %v939 = vld [vmem:[%s2 + $0x90] sm:$0xff]
  %v940 = vld [vmem:[%s2 + $0x98] sm:$0xff]
  %v941 = vld [vmem:[%s2 + $0xa0] sm:$0xff]
  %v942 = vld [vmem:[%s2 + $0xa8] sm:$0xff]
  %v943 = vld [vmem:[%s2 + $0xb0] sm:$0xff]
  %v944 = vld [vmem:[%s2 + $0xb8] sm:$0xff]
  %v945 = vld [vmem:[%s2 + $0xc0] sm:$0xff]
  %v946 = vld [vmem:[%s2 + $0xc8] sm:$0xff]
  %v947 = vld [vmem:[%s2 + $0xd0] sm:$0xff]
  %v948 = vld [vmem:[%s2 + $0xd8] sm:$0xff]
  %v949 = vld [vmem:[%s2 + $0xe0] sm:$0xff]
  %v950 = vld [vmem:[%s2 + $0xe8] sm:$0xff]
  %v951 = vld [vmem:[%s2 + $0xf0] sm:$0xff]
  %v952 = vld [vmem:[%s2 + $0xf8] sm:$0xff]
  %v953 = vld [vmem:[%s2 + $0x100] sm:$0xff]
  %v954 = vld [vmem:[%s2 + $0x108] sm:$0xff]
  %v955 = vld [vmem:[%s2 + $0x110] sm:$0xff]
  %v956 = vld [vmem:[%s2 + $0x118] sm:$0xff]
  %v957 = vld [vmem:[%s2 + $0x120] sm:$0xff]
  %v958 = vld [vmem:[%s2 + $0x128] sm:$0xff]
  %v959 = vld [vmem:[%s2 + $0x130] sm:$0xff]
  %v960 = vld [vmem:[%s2 + $0x138] sm:$0xff]
  %v961 = vld [vmem:[%s2 + $0x140] sm:$0xff]
  %v962 = vld [vmem:[%s2 + $0x148] sm:$0xff]
  %v963 = vld [vmem:[%s2 + $0x150] sm:$0xff]
  %v964 = vld [vmem:[%s2 + $0x158] sm:$0xff]
  %v965 = vld [vmem:[%s2 + $0x160] sm:$0xff]
  %v966 = vld [vmem:[%s2 + $0x168] sm:$0xff]
  %v967 = vld [vmem:[%s2 + $0x170] sm:$0xff]
  %v968 = vld [vmem:[%s2 + $0x178] sm:$0xff]
  %v969 = vld [vmem:[%s2 + $0x180] sm:$0xff]
  %v970 = vld [vmem:[%s2 + $0x188] sm:$0xff]
  %v971 = vld [vmem:[%s2 + $0x190] sm:$0xff]
  %v972 = vld [vmem:[%s2 + $0x198] sm:$0xff]
  %v973 = vld [vmem:[%s2 + $0x1a0] sm:$0xff]
  %v974 = vld [vmem:[%s2 + $0x1a8] sm:$0xff]
  %v975 = vld [vmem:[%s2 + $0x1b0] sm:$0xff]
  %v976 = vld [vmem:[%s2 + $0x1b8] sm:$0xff]
  %v977 = vld [vmem:[%s2 + $0x1c0] sm:$0xff]
  %v978 = vld [vmem:[%s2 + $0x1c8] sm:$0xff]
  %v979 = vld [vmem:[%s2 + $0x1d0] sm:$0xff]
  %v980 = vld [vmem:[%s2 + $0x1d8] sm:$0xff]
  %v981 = vld [vmem:[%s2 + $0x1e0] sm:$0xff]
  %v982 = vld [vmem:[%s2 + $0x1e8] sm:$0xff]
  %v983 = vld [vmem:[%s2 + $0x1f0] sm:$0xff]
  %v984 = vld [vmem:[%s2 + $0x1f8] sm:$0xff]
  %v985 = vld [vmem:[%s2 + $0x200] sm:$0xff]
  %v986 = vld [vmem:[%s2 + $0x208] sm:$0xff]
  %v987 = vld [vmem:[%s2 + $0x210] sm:$0xff]
  %v988 = vld [vmem:[%s2 + $0x218] sm:$0xff]
  %v989 = vld [vmem:[%s2 + $0x220] sm:$0xff]
  %v990 = vld [vmem:[%s2 + $0x228] sm:$0xff]
  %v991 = vld [vmem:[%s2 + $0x230] sm:$0xff]
  %v992 = vld [vmem:[%s2 + $0x238] sm:$0xff]
  %v993 = vld [vmem:[%s2 + $0x240] sm:$0xff]
  %v994 = vld [vmem:[%s2 + $0x248] sm:$0xff]
  %v995 = vld [vmem:[%s2 + $0x250] sm:$0xff]
  %v996 = vld [vmem:[%s2 + $0x258] sm:$0xff]
  %v997 = vld [vmem:[%s2 + $0x260] sm:$0xff]
  %v998 = vld [vmem:[%s2 + $0x268] sm:$0xff]
  %v999 = vld [vmem:[%s2 + $0x270] sm:$0xff]
  %v1000 = vld [vmem:[%s2 + $0x278] sm:$0xff]
  %v1001 = vld [vmem:[%s2 + $0x280] sm:$0xff]
  %v1002 = vld [vmem:[%s2 + $0x288] sm:$0xff]
  %v1003 = vld [vmem:[%s2 + $0x290] sm:$0xff]
  %v1004 = vld [vmem:[%s2 + $0x298] sm:$0xff]
  %v1005 = vld [vmem:[%s2 + $0x2a0] sm:$0xff]
  %v1006 = vld [vmem:[%s2 + $0x2a8] sm:$0xff]
  %v1007 = vld [vmem:[%s2 + $0x2b0] sm:$0xff]
  %v1008 = vld [vmem:[%s2 + $0x2b8] sm:$0xff]
  %v1009 = vld [vmem:[%s2 + $0x2c0] sm:$0xff]
  %v1010 = vld [vmem:[%s2 + $0x2c8] sm:$0xff]
  %v1011 = vld [vmem:[%s2 + $0x2d0] sm:$0xff]
  %v1012 = vld [vmem:[%s2 + $0x2d8] sm:$0xff]
  %v1013 = vld [vmem:[%s2 + $0x2e0] sm:$0xff]
  %v1014 = vld [vmem:[%s2 + $0x2e8] sm:$0xff]
  %v1015 = vld [vmem:[%s2 + $0x2f0] sm:$0xff]
  %v1016 = vld [vmem:[%s2 + $0x2f8] sm:$0xff]
  %1018 = vset.pattern.permute.xlu0 0
  %1019 = vperm.xlu0 %1018, %v921
  %v1020 = vpop.permute.xlu0 %1019
  %1023 = vset.pattern.permute.xlu0 0
  %1024 = vperm.xlu0 %1023, %v922
  %v1025 = vpop.permute.xlu0 %1024
  %1028 = vset.pattern.permute.xlu0 0
  %1029 = vperm.xlu0 %1028, %v923
  %v1030 = vpop.permute.xlu0 %1029
  %1033 = vset.pattern.permute.xlu0 0
  %1034 = vperm.xlu0 %1033, %v924
  %v1035 = vpop.permute.xlu0 %1034
  %1038 = vset.pattern.permute.xlu0 0
  %1039 = vperm.xlu0 %1038, %v925
  %v1040 = vpop.permute.xlu0 %1039
  %1043 = vset.pattern.permute.xlu0 0
  %1044 = vperm.xlu0 %1043, %v926
  %v1045 = vpop.permute.xlu0 %1044
  %1048 = vset.pattern.permute.xlu0 0
  %1049 = vperm.xlu0 %1048, %v927
  %v1050 = vpop.permute.xlu0 %1049
  %1053 = vset.pattern.permute.xlu0 0
  %1054 = vperm.xlu0 %1053, %v928
  %v1055 = vpop.permute.xlu0 %1054
  %1058 = vset.pattern.permute.xlu0 0
  %1059 = vperm.xlu0 %1058, %v929
  %v1060 = vpop.permute.xlu0 %1059
  %1063 = vset.pattern.permute.xlu0 0
  %1064 = vperm.xlu0 %1063, %v930
  %v1065 = vpop.permute.xlu0 %1064
  %1068 = vset.pattern.permute.xlu0 0
  %1069 = vperm.xlu0 %1068, %v931
  %v1070 = vpop.permute.xlu0 %1069
  %1073 = vset.pattern.permute.xlu0 0
  %1074 = vperm.xlu0 %1073, %v932
  %v1075 = vpop.permute.xlu0 %1074
  %1078 = vset.pattern.permute.xlu0 0
  %1079 = vperm.xlu0 %1078, %v933
  %v1080 = vpop.permute.xlu0 %1079
  %1083 = vset.pattern.permute.xlu0 0
  %1084 = vperm.xlu0 %1083, %v934
  %v1085 = vpop.permute.xlu0 %1084
  %1088 = vset.pattern.permute.xlu0 0
  %1089 = vperm.xlu0 %1088, %v935
  %v1090 = vpop.permute.xlu0 %1089
  %1093 = vset.pattern.permute.xlu0 0
  %1094 = vperm.xlu0 %1093, %v936
  %v1095 = vpop.permute.xlu0 %1094
  %1098 = vset.pattern.permute.xlu0 0
  %1099 = vperm.xlu0 %1098, %v937
  %v1100 = vpop.permute.xlu0 %1099
  %1103 = vset.pattern.permute.xlu0 0
  %1104 = vperm.xlu0 %1103, %v938
  %v1105 = vpop.permute.xlu0 %1104
  %1108 = vset.pattern.permute.xlu0 0
  %1109 = vperm.xlu0 %1108, %v939
  %v1110 = vpop.permute.xlu0 %1109
  %1113 = vset.pattern.permute.xlu0 0
  %1114 = vperm.xlu0 %1113, %v940
  %v1115 = vpop.permute.xlu0 %1114
  %1118 = vset.pattern.permute.xlu0 0
  %1119 = vperm.xlu0 %1118, %v941
  %v1120 = vpop.permute.xlu0 %1119
  %1123 = vset.pattern.permute.xlu0 0
  %1124 = vperm.xlu0 %1123, %v942
  %v1125 = vpop.permute.xlu0 %1124
  %1128 = vset.pattern.permute.xlu0 0
  %1129 = vperm.xlu0 %1128, %v943
  %v1130 = vpop.permute.xlu0 %1129
  %1133 = vset.pattern.permute.xlu0 0
  %1134 = vperm.xlu0 %1133, %v944
  %v1135 = vpop.permute.xlu0 %1134
  %1138 = vset.pattern.permute.xlu0 0
  %1139 = vperm.xlu0 %1138, %v945
  %v1140 = vpop.permute.xlu0 %1139
  %1143 = vset.pattern.permute.xlu0 0
  %1144 = vperm.xlu0 %1143, %v946
  %v1145 = vpop.permute.xlu0 %1144
  %1148 = vset.pattern.permute.xlu0 0
  %1149 = vperm.xlu0 %1148, %v947
  %v1150 = vpop.permute.xlu0 %1149
  %1153 = vset.pattern.permute.xlu0 0
  %1154 = vperm.xlu0 %1153, %v948
  %v1155 = vpop.permute.xlu0 %1154
  %1158 = vset.pattern.permute.xlu0 0
  %1159 = vperm.xlu0 %1158, %v949
  %v1160 = vpop.permute.xlu0 %1159
  %1163 = vset.pattern.permute.xlu0 0
  %1164 = vperm.xlu0 %1163, %v950
  %v1165 = vpop.permute.xlu0 %1164
  %1168 = vset.pattern.permute.xlu0 0
  %1169 = vperm.xlu0 %1168, %v951
  %v1170 = vpop.permute.xlu0 %1169
  %1173 = vset.pattern.permute.xlu0 0
  %1174 = vperm.xlu0 %1173, %v952
  %v1175 = vpop.permute.xlu0 %1174
  %1178 = vset.pattern.permute.xlu0 0
  %1179 = vperm.xlu0 %1178, %v953
  %v1180 = vpop.permute.xlu0 %1179
  %1183 = vset.pattern.permute.xlu0 0
  %1184 = vperm.xlu0 %1183, %v954
  %v1185 = vpop.permute.xlu0 %1184
  %1188 = vset.pattern.permute.xlu0 0
  %1189 = vperm.xlu0 %1188, %v955
  %v1190 = vpop.permute.xlu0 %1189
  %1193 = vset.pattern.permute.xlu0 0
  %1194 = vperm.xlu0 %1193, %v956
  %v1195 = vpop.permute.xlu0 %1194
  %1198 = vset.pattern.permute.xlu0 0
  %1199 = vperm.xlu0 %1198, %v957
  %v1200 = vpop.permute.xlu0 %1199
  %1203 = vset.pattern.permute.xlu0 0
  %1204 = vperm.xlu0 %1203, %v958
  %v1205 = vpop.permute.xlu0 %1204
  %1208 = vset.pattern.permute.xlu0 0
  %1209 = vperm.xlu0 %1208, %v959
  %v1210 = vpop.permute.xlu0 %1209
  %1213 = vset.pattern.permute.xlu0 0
  %1214 = vperm.xlu0 %1213, %v960
  %v1215 = vpop.permute.xlu0 %1214
  %1218 = vset.pattern.permute.xlu0 0
  %1219 = vperm.xlu0 %1218, %v961
  %v1220 = vpop.permute.xlu0 %1219
  %1223 = vset.pattern.permute.xlu0 0
  %1224 = vperm.xlu0 %1223, %v962
  %v1225 = vpop.permute.xlu0 %1224
  %1228 = vset.pattern.permute.xlu0 0
  %1229 = vperm.xlu0 %1228, %v963
  %v1230 = vpop.permute.xlu0 %1229
  %1233 = vset.pattern.permute.xlu0 0
  %1234 = vperm.xlu0 %1233, %v964
  %v1235 = vpop.permute.xlu0 %1234
  %1238 = vset.pattern.permute.xlu0 0
  %1239 = vperm.xlu0 %1238, %v965
  %v1240 = vpop.permute.xlu0 %1239
  %1243 = vset.pattern.permute.xlu0 0
  %1244 = vperm.xlu0 %1243, %v966
  %v1245 = vpop.permute.xlu0 %1244
  %1248 = vset.pattern.permute.xlu0 0
  %1249 = vperm.xlu0 %1248, %v967
  %v1250 = vpop.permute.xlu0 %1249
  %1253 = vset.pattern.permute.xlu0 0
  %1254 = vperm.xlu0 %1253, %v968
  %v1255 = vpop.permute.xlu0 %1254
  %1258 = vset.pattern.permute.xlu0 0
  %1259 = vperm.xlu0 %1258, %v969
  %v1260 = vpop.permute.xlu0 %1259
  %1263 = vset.pattern.permute.xlu0 0
  %1264 = vperm.xlu0 %1263, %v970
  %v1265 = vpop.permute.xlu0 %1264
  %1268 = vset.pattern.permute.xlu0 0
  %1269 = vperm.xlu0 %1268, %v971
  %v1270 = vpop.permute.xlu0 %1269
  %1273 = vset.pattern.permute.xlu0 0
  %1274 = vperm.xlu0 %1273, %v972
  %v1275 = vpop.permute.xlu0 %1274
  %1278 = vset.pattern.permute.xlu0 0
  %1279 = vperm.xlu0 %1278, %v973
  %v1280 = vpop.permute.xlu0 %1279
  %1283 = vset.pattern.permute.xlu0 0
  %1284 = vperm.xlu0 %1283, %v974
  %v1285 = vpop.permute.xlu0 %1284
  %1288 = vset.pattern.permute.xlu0 0
  %1289 = vperm.xlu0 %1288, %v975
  %v1290 = vpop.permute.xlu0 %1289
  %1293 = vset.pattern.permute.xlu0 0
  %1294 = vperm.xlu0 %1293, %v976
  %v1295 = vpop.permute.xlu0 %1294
  %1298 = vset.pattern.permute.xlu0 0
  %1299 = vperm.xlu0 %1298, %v977
  %v1300 = vpop.permute.xlu0 %1299
  %1303 = vset.pattern.permute.xlu0 0
  %1304 = vperm.xlu0 %1303, %v978
  %v1305 = vpop.permute.xlu0 %1304
  %1308 = vset.pattern.permute.xlu0 0
  %1309 = vperm.xlu0 %1308, %v979
  %v1310 = vpop.permute.xlu0 %1309
  %1313 = vset.pattern.permute.xlu0 0
  %1314 = vperm.xlu0 %1313, %v980
  %v1315 = vpop.permute.xlu0 %1314
  %1318 = vset.pattern.permute.xlu0 0
  %1319 = vperm.xlu0 %1318, %v981
  %v1320 = vpop.permute.xlu0 %1319
  %1323 = vset.pattern.permute.xlu0 0
  %1324 = vperm.xlu0 %1323, %v982
  %v1325 = vpop.permute.xlu0 %1324
  %1328 = vset.pattern.permute.xlu0 0
  %1329 = vperm.xlu0 %1328, %v983
  %v1330 = vpop.permute.xlu0 %1329
  %1333 = vset.pattern.permute.xlu0 0
  %1334 = vperm.xlu0 %1333, %v984
  %v1335 = vpop.permute.xlu0 %1334
  %1338 = vset.pattern.permute.xlu0 0
  %1339 = vperm.xlu0 %1338, %v985
  %v1340 = vpop.permute.xlu0 %1339
  %1343 = vset.pattern.permute.xlu0 0
  %1344 = vperm.xlu0 %1343, %v986
  %v1345 = vpop.permute.xlu0 %1344
  %1348 = vset.pattern.permute.xlu0 0
  %1349 = vperm.xlu0 %1348, %v987
  %v1350 = vpop.permute.xlu0 %1349
  %1353 = vset.pattern.permute.xlu0 0
  %1354 = vperm.xlu0 %1353, %v988
  %v1355 = vpop.permute.xlu0 %1354
  %1358 = vset.pattern.permute.xlu0 0
  %1359 = vperm.xlu0 %1358, %v989
  %v1360 = vpop.permute.xlu0 %1359
  %1363 = vset.pattern.permute.xlu0 0
  %1364 = vperm.xlu0 %1363, %v990
  %v1365 = vpop.permute.xlu0 %1364
  %1368 = vset.pattern.permute.xlu0 0
  %1369 = vperm.xlu0 %1368, %v991
  %v1370 = vpop.permute.xlu0 %1369
  %1373 = vset.pattern.permute.xlu0 0
  %1374 = vperm.xlu0 %1373, %v992
  %v1375 = vpop.permute.xlu0 %1374
  %1378 = vset.pattern.permute.xlu0 0
  %1379 = vperm.xlu0 %1378, %v993
  %v1380 = vpop.permute.xlu0 %1379
  %1383 = vset.pattern.permute.xlu0 0
  %1384 = vperm.xlu0 %1383, %v994
  %v1385 = vpop.permute.xlu0 %1384
  %1388 = vset.pattern.permute.xlu0 0
  %1389 = vperm.xlu0 %1388, %v995
  %v1390 = vpop.permute.xlu0 %1389
  %1393 = vset.pattern.permute.xlu0 0
  %1394 = vperm.xlu0 %1393, %v996
  %v1395 = vpop.permute.xlu0 %1394
  %1398 = vset.pattern.permute.xlu0 0
  %1399 = vperm.xlu0 %1398, %v997
  %v1400 = vpop.permute.xlu0 %1399
  %1403 = vset.pattern.permute.xlu0 0
  %1404 = vperm.xlu0 %1403, %v998
  %v1405 = vpop.permute.xlu0 %1404
  %1408 = vset.pattern.permute.xlu0 0
  %1409 = vperm.xlu0 %1408, %v999
  %v1410 = vpop.permute.xlu0 %1409
  %1413 = vset.pattern.permute.xlu0 0
  %1414 = vperm.xlu0 %1413, %v1000
  %v1415 = vpop.permute.xlu0 %1414
  %1418 = vset.pattern.permute.xlu0 0
  %1419 = vperm.xlu0 %1418, %v1001
  %v1420 = vpop.permute.xlu0 %1419
  %1423 = vset.pattern.permute.xlu0 0
  %1424 = vperm.xlu0 %1423, %v1002
  %v1425 = vpop.permute.xlu0 %1424
  %1428 = vset.pattern.permute.xlu0 0
  %1429 = vperm.xlu0 %1428, %v1003
  %v1430 = vpop.permute.xlu0 %1429
  %1433 = vset.pattern.permute.xlu0 0
  %1434 = vperm.xlu0 %1433, %v1004
  %v1435 = vpop.permute.xlu0 %1434
  %1438 = vset.pattern.permute.xlu0 0
  %1439 = vperm.xlu0 %1438, %v1005
  %v1440 = vpop.permute.xlu0 %1439
  %1443 = vset.pattern.permute.xlu0 0
  %1444 = vperm.xlu0 %1443, %v1006
  %v1445 = vpop.permute.xlu0 %1444
  %1448 = vset.pattern.permute.xlu0 0
  %1449 = vperm.xlu0 %1448, %v1007
  %v1450 = vpop.permute.xlu0 %1449
  %1453 = vset.pattern.permute.xlu0 0
  %1454 = vperm.xlu0 %1453, %v1008
  %v1455 = vpop.permute.xlu0 %1454
  %1458 = vset.pattern.permute.xlu0 0
  %1459 = vperm.xlu0 %1458, %v1009
  %v1460 = vpop.permute.xlu0 %1459
  %1463 = vset.pattern.permute.xlu0 0
  %1464 = vperm.xlu0 %1463, %v1010
  %v1465 = vpop.permute.xlu0 %1464
  %1468 = vset.pattern.permute.xlu0 0
  %1469 = vperm.xlu0 %1468, %v1011
  %v1470 = vpop.permute.xlu0 %1469
  %1473 = vset.pattern.permute.xlu0 0
  %1474 = vperm.xlu0 %1473, %v1012
  %v1475 = vpop.permute.xlu0 %1474
  %1478 = vset.pattern.permute.xlu0 0
  %1479 = vperm.xlu0 %1478, %v1013
  %v1480 = vpop.permute.xlu0 %1479
  %1483 = vset.pattern.permute.xlu0 0
  %1484 = vperm.xlu0 %1483, %v1014
  %v1485 = vpop.permute.xlu0 %1484
  %1488 = vset.pattern.permute.xlu0 0
  %1489 = vperm.xlu0 %1488, %v1015
  %v1490 = vpop.permute.xlu0 %1489
  %1493 = vset.pattern.permute.xlu0 0
  %1494 = vperm.xlu0 %1493, %v1016
  %v1495 = vpop.permute.xlu0 %1494
  %v1497 = vmul.f32 %v539, %v1020
  %v1498 = vmul.f32 %v542, %v1025
  %v1499 = vmul.f32 %v547, %v1030
  %v1500 = vmul.f32 %v550, %v1035
  %v1501 = vmul.f32 %v555, %v1040
  %v1502 = vmul.f32 %v558, %v1045
  %v1503 = vmul.f32 %v563, %v1050
  %v1504 = vmul.f32 %v566, %v1055
  %v1505 = vmul.f32 %v571, %v1060
  %v1506 = vmul.f32 %v574, %v1065
  %v1507 = vmul.f32 %v579, %v1070
  %v1508 = vmul.f32 %v582, %v1075
  %v1509 = vmul.f32 %v587, %v1080
  %v1510 = vmul.f32 %v590, %v1085
  %v1511 = vmul.f32 %v595, %v1090
  %v1512 = vmul.f32 %v598, %v1095
  %v1513 = vmul.f32 %v603, %v1100
  %v1514 = vmul.f32 %v606, %v1105
  %v1515 = vmul.f32 %v611, %v1110
  %v1516 = vmul.f32 %v614, %v1115
  %v1517 = vmul.f32 %v619, %v1120
  %v1518 = vmul.f32 %v622, %v1125
  %v1519 = vmul.f32 %v627, %v1130
  %v1520 = vmul.f32 %v630, %v1135
  %v1521 = vmul.f32 %v635, %v1140
  %v1522 = vmul.f32 %v638, %v1145
  %v1523 = vmul.f32 %v643, %v1150
  %v1524 = vmul.f32 %v646, %v1155
  %v1525 = vmul.f32 %v651, %v1160
  %v1526 = vmul.f32 %v654, %v1165
  %v1527 = vmul.f32 %v659, %v1170
  %v1528 = vmul.f32 %v662, %v1175
  %v1529 = vmul.f32 %v667, %v1180
  %v1530 = vmul.f32 %v670, %v1185
  %v1531 = vmul.f32 %v675, %v1190
  %v1532 = vmul.f32 %v678, %v1195
  %v1533 = vmul.f32 %v683, %v1200
  %v1534 = vmul.f32 %v686, %v1205
  %v1535 = vmul.f32 %v691, %v1210
  %v1536 = vmul.f32 %v694, %v1215
  %v1537 = vmul.f32 %v699, %v1220
  %v1538 = vmul.f32 %v702, %v1225
  %v1539 = vmul.f32 %v707, %v1230
  %v1540 = vmul.f32 %v710, %v1235
  %v1541 = vmul.f32 %v715, %v1240
  %v1542 = vmul.f32 %v718, %v1245
  %v1543 = vmul.f32 %v723, %v1250
  %v1544 = vmul.f32 %v726, %v1255
  %v1545 = vmul.f32 %v731, %v1260
  %v1546 = vmul.f32 %v734, %v1265
  %v1547 = vmul.f32 %v739, %v1270
  %v1548 = vmul.f32 %v742, %v1275
  %v1549 = vmul.f32 %v747, %v1280
  %v1550 = vmul.f32 %v750, %v1285
  %v1551 = vmul.f32 %v755, %v1290
  %v1552 = vmul.f32 %v758, %v1295
  %v1553 = vmul.f32 %v763, %v1300
  %v1554 = vmul.f32 %v766, %v1305
  %v1555 = vmul.f32 %v771, %v1310
  %v1556 = vmul.f32 %v774, %v1315
  %v1557 = vmul.f32 %v779, %v1320
  %v1558 = vmul.f32 %v782, %v1325
  %v1559 = vmul.f32 %v787, %v1330
  %v1560 = vmul.f32 %v790, %v1335
  %v1561 = vmul.f32 %v795, %v1340
  %v1562 = vmul.f32 %v798, %v1345
  %v1563 = vmul.f32 %v803, %v1350
  %v1564 = vmul.f32 %v806, %v1355
  %v1565 = vmul.f32 %v811, %v1360
  %v1566 = vmul.f32 %v814, %v1365
  %v1567 = vmul.f32 %v819, %v1370
  %v1568 = vmul.f32 %v822, %v1375
  %v1569 = vmul.f32 %v827, %v1380
  %v1570 = vmul.f32 %v830, %v1385
  %v1571 = vmul.f32 %v835, %v1390
  %v1572 = vmul.f32 %v838, %v1395
  %v1573 = vmul.f32 %v843, %v1400
  %v1574 = vmul.f32 %v846, %v1405
  %v1575 = vmul.f32 %v851, %v1410
  %v1576 = vmul.f32 %v854, %v1415
  %v1577 = vmul.f32 %v859, %v1420
  %v1578 = vmul.f32 %v862, %v1425
  %v1579 = vmul.f32 %v867, %v1430
  %v1580 = vmul.f32 %v870, %v1435
  %v1581 = vmul.f32 %v875, %v1440
  %v1582 = vmul.f32 %v878, %v1445
  %v1583 = vmul.f32 %v883, %v1450
  %v1584 = vmul.f32 %v886, %v1455
  %v1585 = vmul.f32 %v891, %v1460
  %v1586 = vmul.f32 %v894, %v1465
  %v1587 = vmul.f32 %v899, %v1470
  %v1588 = vmul.f32 %v902, %v1475
  %v1589 = vmul.f32 %v907, %v1480
  %v1590 = vmul.f32 %v910, %v1485
  %v1591 = vmul.f32 %v915, %v1490
  %v1592 = vmul.f32 %v918, %v1495
  %v1593 = vld [vmem:[%s3] sm:$0xff]
  %v1594 = vld [vmem:[%s3 + $0x8] sm:$0xff]
  %v1595 = vld [vmem:[%s3 + $0x10] sm:$0xff]
  %v1596 = vld [vmem:[%s3 + $0x18] sm:$0xff]
  %v1597 = vld [vmem:[%s3 + $0x20] sm:$0xff]
  %v1598 = vld [vmem:[%s3 + $0x28] sm:$0xff]
  %v1599 = vld [vmem:[%s3 + $0x30] sm:$0xff]
  %v1600 = vld [vmem:[%s3 + $0x38] sm:$0xff]
  %v1601 = vld [vmem:[%s3 + $0x40] sm:$0xff]
  %v1602 = vld [vmem:[%s3 + $0x48] sm:$0xff]
  %v1603 = vld [vmem:[%s3 + $0x50] sm:$0xff]
  %v1604 = vld [vmem:[%s3 + $0x58] sm:$0xff]
  %v1605 = vld [vmem:[%s3 + $0x60] sm:$0xff]
  %v1606 = vld [vmem:[%s3 + $0x68] sm:$0xff]
  %v1607 = vld [vmem:[%s3 + $0x70] sm:$0xff]
  %v1608 = vld [vmem:[%s3 + $0x78] sm:$0xff]
  %v1609 = vld [vmem:[%s3 + $0x80] sm:$0xff]
  %v1610 = vld [vmem:[%s3 + $0x88] sm:$0xff]
  %v1611 = vld [vmem:[%s3 + $0x90] sm:$0xff]
  %v1612 = vld [vmem:[%s3 + $0x98] sm:$0xff]
  %v1613 = vld [vmem:[%s3 + $0xa0] sm:$0xff]
  %v1614 = vld [vmem:[%s3 + $0xa8] sm:$0xff]
  %v1615 = vld [vmem:[%s3 + $0xb0] sm:$0xff]
  %v1616 = vld [vmem:[%s3 + $0xb8] sm:$0xff]
  %v1617 = vld [vmem:[%s3 + $0xc0] sm:$0xff]
  %v1618 = vld [vmem:[%s3 + $0xc8] sm:$0xff]
  %v1619 = vld [vmem:[%s3 + $0xd0] sm:$0xff]
  %v1620 = vld [vmem:[%s3 + $0xd8] sm:$0xff]
  %v1621 = vld [vmem:[%s3 + $0xe0] sm:$0xff]
  %v1622 = vld [vmem:[%s3 + $0xe8] sm:$0xff]
  %v1623 = vld [vmem:[%s3 + $0xf0] sm:$0xff]
  %v1624 = vld [vmem:[%s3 + $0xf8] sm:$0xff]
  %v1625 = vld [vmem:[%s3 + $0x100] sm:$0xff]
  %v1626 = vld [vmem:[%s3 + $0x108] sm:$0xff]
  %v1627 = vld [vmem:[%s3 + $0x110] sm:$0xff]
  %v1628 = vld [vmem:[%s3 + $0x118] sm:$0xff]
  %v1629 = vld [vmem:[%s3 + $0x120] sm:$0xff]
  %v1630 = vld [vmem:[%s3 + $0x128] sm:$0xff]
  %v1631 = vld [vmem:[%s3 + $0x130] sm:$0xff]
  %v1632 = vld [vmem:[%s3 + $0x138] sm:$0xff]
  %v1633 = vld [vmem:[%s3 + $0x140] sm:$0xff]
  %v1634 = vld [vmem:[%s3 + $0x148] sm:$0xff]
  %v1635 = vld [vmem:[%s3 + $0x150] sm:$0xff]
  %v1636 = vld [vmem:[%s3 + $0x158] sm:$0xff]
  %v1637 = vld [vmem:[%s3 + $0x160] sm:$0xff]
  %v1638 = vld [vmem:[%s3 + $0x168] sm:$0xff]
  %v1639 = vld [vmem:[%s3 + $0x170] sm:$0xff]
  %v1640 = vld [vmem:[%s3 + $0x178] sm:$0xff]
  %v1641 = vld [vmem:[%s3 + $0x180] sm:$0xff]
  %v1642 = vld [vmem:[%s3 + $0x188] sm:$0xff]
  %v1643 = vld [vmem:[%s3 + $0x190] sm:$0xff]
  %v1644 = vld [vmem:[%s3 + $0x198] sm:$0xff]
  %v1645 = vld [vmem:[%s3 + $0x1a0] sm:$0xff]
  %v1646 = vld [vmem:[%s3 + $0x1a8] sm:$0xff]
  %v1647 = vld [vmem:[%s3 + $0x1b0] sm:$0xff]
  %v1648 = vld [vmem:[%s3 + $0x1b8] sm:$0xff]
  %v1649 = vld [vmem:[%s3 + $0x1c0] sm:$0xff]
  %v1650 = vld [vmem:[%s3 + $0x1c8] sm:$0xff]
  %v1651 = vld [vmem:[%s3 + $0x1d0] sm:$0xff]
  %v1652 = vld [vmem:[%s3 + $0x1d8] sm:$0xff]
  %v1653 = vld [vmem:[%s3 + $0x1e0] sm:$0xff]
  %v1654 = vld [vmem:[%s3 + $0x1e8] sm:$0xff]
  %v1655 = vld [vmem:[%s3 + $0x1f0] sm:$0xff]
  %v1656 = vld [vmem:[%s3 + $0x1f8] sm:$0xff]
  %v1657 = vld [vmem:[%s3 + $0x200] sm:$0xff]
  %v1658 = vld [vmem:[%s3 + $0x208] sm:$0xff]
  %v1659 = vld [vmem:[%s3 + $0x210] sm:$0xff]
  %v1660 = vld [vmem:[%s3 + $0x218] sm:$0xff]
  %v1661 = vld [vmem:[%s3 + $0x220] sm:$0xff]
  %v1662 = vld [vmem:[%s3 + $0x228] sm:$0xff]
  %v1663 = vld [vmem:[%s3 + $0x230] sm:$0xff]
  %v1664 = vld [vmem:[%s3 + $0x238] sm:$0xff]
  %v1665 = vld [vmem:[%s3 + $0x240] sm:$0xff]
  %v1666 = vld [vmem:[%s3 + $0x248] sm:$0xff]
  %v1667 = vld [vmem:[%s3 + $0x250] sm:$0xff]
  %v1668 = vld [vmem:[%s3 + $0x258] sm:$0xff]
  %v1669 = vld [vmem:[%s3 + $0x260] sm:$0xff]
  %v1670 = vld [vmem:[%s3 + $0x268] sm:$0xff]
  %v1671 = vld [vmem:[%s3 + $0x270] sm:$0xff]
  %v1672 = vld [vmem:[%s3 + $0x278] sm:$0xff]
  %v1673 = vld [vmem:[%s3 + $0x280] sm:$0xff]
  %v1674 = vld [vmem:[%s3 + $0x288] sm:$0xff]
  %v1675 = vld [vmem:[%s3 + $0x290] sm:$0xff]
  %v1676 = vld [vmem:[%s3 + $0x298] sm:$0xff]
  %v1677 = vld [vmem:[%s3 + $0x2a0] sm:$0xff]
  %v1678 = vld [vmem:[%s3 + $0x2a8] sm:$0xff]
  %v1679 = vld [vmem:[%s3 + $0x2b0] sm:$0xff]
  %v1680 = vld [vmem:[%s3 + $0x2b8] sm:$0xff]
  %v1681 = vld [vmem:[%s3 + $0x2c0] sm:$0xff]
  %v1682 = vld [vmem:[%s3 + $0x2c8] sm:$0xff]
  %v1683 = vld [vmem:[%s3 + $0x2d0] sm:$0xff]
  %v1684 = vld [vmem:[%s3 + $0x2d8] sm:$0xff]
  %v1685 = vld [vmem:[%s3 + $0x2e0] sm:$0xff]
  %v1686 = vld [vmem:[%s3 + $0x2e8] sm:$0xff]
  %v1687 = vld [vmem:[%s3 + $0x2f0] sm:$0xff]
  %v1688 = vld [vmem:[%s3 + $0x2f8] sm:$0xff]
  %1690 = vset.pattern.permute.xlu0 0
  %1691 = vperm.xlu0 %1690, %v1593
  %v1692 = vpop.permute.xlu0 %1691
  %1695 = vset.pattern.permute.xlu0 0
  %1696 = vperm.xlu0 %1695, %v1594
  %v1697 = vpop.permute.xlu0 %1696
  %1700 = vset.pattern.permute.xlu0 0
  %1701 = vperm.xlu0 %1700, %v1595
  %v1702 = vpop.permute.xlu0 %1701
  %1705 = vset.pattern.permute.xlu0 0
  %1706 = vperm.xlu0 %1705, %v1596
  %v1707 = vpop.permute.xlu0 %1706
  %1710 = vset.pattern.permute.xlu0 0
  %1711 = vperm.xlu0 %1710, %v1597
  %v1712 = vpop.permute.xlu0 %1711
  %1715 = vset.pattern.permute.xlu0 0
  %1716 = vperm.xlu0 %1715, %v1598
  %v1717 = vpop.permute.xlu0 %1716
  %1720 = vset.pattern.permute.xlu0 0
  %1721 = vperm.xlu0 %1720, %v1599
  %v1722 = vpop.permute.xlu0 %1721
  %1725 = vset.pattern.permute.xlu0 0
  %1726 = vperm.xlu0 %1725, %v1600
  %v1727 = vpop.permute.xlu0 %1726
  %1730 = vset.pattern.permute.xlu0 0
  %1731 = vperm.xlu0 %1730, %v1601
  %v1732 = vpop.permute.xlu0 %1731
  %1735 = vset.pattern.permute.xlu0 0
  %1736 = vperm.xlu0 %1735, %v1602
  %v1737 = vpop.permute.xlu0 %1736
  %1740 = vset.pattern.permute.xlu0 0
  %1741 = vperm.xlu0 %1740, %v1603
  %v1742 = vpop.permute.xlu0 %1741
  %1745 = vset.pattern.permute.xlu0 0
  %1746 = vperm.xlu0 %1745, %v1604
  %v1747 = vpop.permute.xlu0 %1746
  %1750 = vset.pattern.permute.xlu0 0
  %1751 = vperm.xlu0 %1750, %v1605
  %v1752 = vpop.permute.xlu0 %1751
  %1755 = vset.pattern.permute.xlu0 0
  %1756 = vperm.xlu0 %1755, %v1606
  %v1757 = vpop.permute.xlu0 %1756
  %1760 = vset.pattern.permute.xlu0 0
  %1761 = vperm.xlu0 %1760, %v1607
  %v1762 = vpop.permute.xlu0 %1761
  %1765 = vset.pattern.permute.xlu0 0
  %1766 = vperm.xlu0 %1765, %v1608
  %v1767 = vpop.permute.xlu0 %1766
  %1770 = vset.pattern.permute.xlu0 0
  %1771 = vperm.xlu0 %1770, %v1609
  %v1772 = vpop.permute.xlu0 %1771
  %1775 = vset.pattern.permute.xlu0 0
  %1776 = vperm.xlu0 %1775, %v1610
  %v1777 = vpop.permute.xlu0 %1776
  %1780 = vset.pattern.permute.xlu0 0
  %1781 = vperm.xlu0 %1780, %v1611
  %v1782 = vpop.permute.xlu0 %1781
  %1785 = vset.pattern.permute.xlu0 0
  %1786 = vperm.xlu0 %1785, %v1612
  %v1787 = vpop.permute.xlu0 %1786
  %1790 = vset.pattern.permute.xlu0 0
  %1791 = vperm.xlu0 %1790, %v1613
  %v1792 = vpop.permute.xlu0 %1791
  %1795 = vset.pattern.permute.xlu0 0
  %1796 = vperm.xlu0 %1795, %v1614
  %v1797 = vpop.permute.xlu0 %1796
  %1800 = vset.pattern.permute.xlu0 0
  %1801 = vperm.xlu0 %1800, %v1615
  %v1802 = vpop.permute.xlu0 %1801
  %1805 = vset.pattern.permute.xlu0 0
  %1806 = vperm.xlu0 %1805, %v1616
  %v1807 = vpop.permute.xlu0 %1806
  %1810 = vset.pattern.permute.xlu0 0
  %1811 = vperm.xlu0 %1810, %v1617
  %v1812 = vpop.permute.xlu0 %1811
  %1815 = vset.pattern.permute.xlu0 0
  %1816 = vperm.xlu0 %1815, %v1618
  %v1817 = vpop.permute.xlu0 %1816
  %1820 = vset.pattern.permute.xlu0 0
  %1821 = vperm.xlu0 %1820, %v1619
  %v1822 = vpop.permute.xlu0 %1821
  %1825 = vset.pattern.permute.xlu0 0
  %1826 = vperm.xlu0 %1825, %v1620
  %v1827 = vpop.permute.xlu0 %1826
  %1830 = vset.pattern.permute.xlu0 0
  %1831 = vperm.xlu0 %1830, %v1621
  %v1832 = vpop.permute.xlu0 %1831
  %1835 = vset.pattern.permute.xlu0 0
  %1836 = vperm.xlu0 %1835, %v1622
  %v1837 = vpop.permute.xlu0 %1836
  %1840 = vset.pattern.permute.xlu0 0
  %1841 = vperm.xlu0 %1840, %v1623
  %v1842 = vpop.permute.xlu0 %1841
  %1845 = vset.pattern.permute.xlu0 0
  %1846 = vperm.xlu0 %1845, %v1624
  %v1847 = vpop.permute.xlu0 %1846
  %1850 = vset.pattern.permute.xlu0 0
  %1851 = vperm.xlu0 %1850, %v1625
  %v1852 = vpop.permute.xlu0 %1851
  %1855 = vset.pattern.permute.xlu0 0
  %1856 = vperm.xlu0 %1855, %v1626
  %v1857 = vpop.permute.xlu0 %1856
  %1860 = vset.pattern.permute.xlu0 0
  %1861 = vperm.xlu0 %1860, %v1627
  %v1862 = vpop.permute.xlu0 %1861
  %1865 = vset.pattern.permute.xlu0 0
  %1866 = vperm.xlu0 %1865, %v1628
  %v1867 = vpop.permute.xlu0 %1866
  %1870 = vset.pattern.permute.xlu0 0
  %1871 = vperm.xlu0 %1870, %v1629
  %v1872 = vpop.permute.xlu0 %1871
  %1875 = vset.pattern.permute.xlu0 0
  %1876 = vperm.xlu0 %1875, %v1630
  %v1877 = vpop.permute.xlu0 %1876
  %1880 = vset.pattern.permute.xlu0 0
  %1881 = vperm.xlu0 %1880, %v1631
  %v1882 = vpop.permute.xlu0 %1881
  %1885 = vset.pattern.permute.xlu0 0
  %1886 = vperm.xlu0 %1885, %v1632
  %v1887 = vpop.permute.xlu0 %1886
  %1890 = vset.pattern.permute.xlu0 0
  %1891 = vperm.xlu0 %1890, %v1633
  %v1892 = vpop.permute.xlu0 %1891
  %1895 = vset.pattern.permute.xlu0 0
  %1896 = vperm.xlu0 %1895, %v1634
  %v1897 = vpop.permute.xlu0 %1896
  %1900 = vset.pattern.permute.xlu0 0
  %1901 = vperm.xlu0 %1900, %v1635
  %v1902 = vpop.permute.xlu0 %1901
  %1905 = vset.pattern.permute.xlu0 0
  %1906 = vperm.xlu0 %1905, %v1636
  %v1907 = vpop.permute.xlu0 %1906
  %1910 = vset.pattern.permute.xlu0 0
  %1911 = vperm.xlu0 %1910, %v1637
  %v1912 = vpop.permute.xlu0 %1911
  %1915 = vset.pattern.permute.xlu0 0
  %1916 = vperm.xlu0 %1915, %v1638
  %v1917 = vpop.permute.xlu0 %1916
  %1920 = vset.pattern.permute.xlu0 0
  %1921 = vperm.xlu0 %1920, %v1639
  %v1922 = vpop.permute.xlu0 %1921
  %1925 = vset.pattern.permute.xlu0 0
  %1926 = vperm.xlu0 %1925, %v1640
  %v1927 = vpop.permute.xlu0 %1926
  %1930 = vset.pattern.permute.xlu0 0
  %1931 = vperm.xlu0 %1930, %v1641
  %v1932 = vpop.permute.xlu0 %1931
  %1935 = vset.pattern.permute.xlu0 0
  %1936 = vperm.xlu0 %1935, %v1642
  %v1937 = vpop.permute.xlu0 %1936
  %1940 = vset.pattern.permute.xlu0 0
  %1941 = vperm.xlu0 %1940, %v1643
  %v1942 = vpop.permute.xlu0 %1941
  %1945 = vset.pattern.permute.xlu0 0
  %1946 = vperm.xlu0 %1945, %v1644
  %v1947 = vpop.permute.xlu0 %1946
  %1950 = vset.pattern.permute.xlu0 0
  %1951 = vperm.xlu0 %1950, %v1645
  %v1952 = vpop.permute.xlu0 %1951
  %1955 = vset.pattern.permute.xlu0 0
  %1956 = vperm.xlu0 %1955, %v1646
  %v1957 = vpop.permute.xlu0 %1956
  %1960 = vset.pattern.permute.xlu0 0
  %1961 = vperm.xlu0 %1960, %v1647
  %v1962 = vpop.permute.xlu0 %1961
  %1965 = vset.pattern.permute.xlu0 0
  %1966 = vperm.xlu0 %1965, %v1648
  %v1967 = vpop.permute.xlu0 %1966
  %1970 = vset.pattern.permute.xlu0 0
  %1971 = vperm.xlu0 %1970, %v1649
  %v1972 = vpop.permute.xlu0 %1971
  %1975 = vset.pattern.permute.xlu0 0
  %1976 = vperm.xlu0 %1975, %v1650
  %v1977 = vpop.permute.xlu0 %1976
  %1980 = vset.pattern.permute.xlu0 0
  %1981 = vperm.xlu0 %1980, %v1651
  %v1982 = vpop.permute.xlu0 %1981
  %1985 = vset.pattern.permute.xlu0 0
  %1986 = vperm.xlu0 %1985, %v1652
  %v1987 = vpop.permute.xlu0 %1986
  %1990 = vset.pattern.permute.xlu0 0
  %1991 = vperm.xlu0 %1990, %v1653
  %v1992 = vpop.permute.xlu0 %1991
  %1995 = vset.pattern.permute.xlu0 0
  %1996 = vperm.xlu0 %1995, %v1654
  %v1997 = vpop.permute.xlu0 %1996
  %2000 = vset.pattern.permute.xlu0 0
  %2001 = vperm.xlu0 %2000, %v1655
  %v2002 = vpop.permute.xlu0 %2001
  %2005 = vset.pattern.permute.xlu0 0
  %2006 = vperm.xlu0 %2005, %v1656
  %v2007 = vpop.permute.xlu0 %2006
  %2010 = vset.pattern.permute.xlu0 0
  %2011 = vperm.xlu0 %2010, %v1657
  %v2012 = vpop.permute.xlu0 %2011
  %2015 = vset.pattern.permute.xlu0 0
  %2016 = vperm.xlu0 %2015, %v1658
  %v2017 = vpop.permute.xlu0 %2016
  %2020 = vset.pattern.permute.xlu0 0
  %2021 = vperm.xlu0 %2020, %v1659
  %v2022 = vpop.permute.xlu0 %2021
  %2025 = vset.pattern.permute.xlu0 0
  %2026 = vperm.xlu0 %2025, %v1660
  %v2027 = vpop.permute.xlu0 %2026
  %2030 = vset.pattern.permute.xlu0 0
  %2031 = vperm.xlu0 %2030, %v1661
  %v2032 = vpop.permute.xlu0 %2031
  %2035 = vset.pattern.permute.xlu0 0
  %2036 = vperm.xlu0 %2035, %v1662
  %v2037 = vpop.permute.xlu0 %2036
  %2040 = vset.pattern.permute.xlu0 0
  %2041 = vperm.xlu0 %2040, %v1663
  %v2042 = vpop.permute.xlu0 %2041
  %2045 = vset.pattern.permute.xlu0 0
  %2046 = vperm.xlu0 %2045, %v1664
  %v2047 = vpop.permute.xlu0 %2046
  %2050 = vset.pattern.permute.xlu0 0
  %2051 = vperm.xlu0 %2050, %v1665
  %v2052 = vpop.permute.xlu0 %2051
  %2055 = vset.pattern.permute.xlu0 0
  %2056 = vperm.xlu0 %2055, %v1666
  %v2057 = vpop.permute.xlu0 %2056
  %2060 = vset.pattern.permute.xlu0 0
  %2061 = vperm.xlu0 %2060, %v1667
  %v2062 = vpop.permute.xlu0 %2061
  %2065 = vset.pattern.permute.xlu0 0
  %2066 = vperm.xlu0 %2065, %v1668
  %v2067 = vpop.permute.xlu0 %2066
  %2070 = vset.pattern.permute.xlu0 0
  %2071 = vperm.xlu0 %2070, %v1669
  %v2072 = vpop.permute.xlu0 %2071
  %2075 = vset.pattern.permute.xlu0 0
  %2076 = vperm.xlu0 %2075, %v1670
  %v2077 = vpop.permute.xlu0 %2076
  %2080 = vset.pattern.permute.xlu0 0
  %2081 = vperm.xlu0 %2080, %v1671
  %v2082 = vpop.permute.xlu0 %2081
  %2085 = vset.pattern.permute.xlu0 0
  %2086 = vperm.xlu0 %2085, %v1672
  %v2087 = vpop.permute.xlu0 %2086
  %2090 = vset.pattern.permute.xlu0 0
  %2091 = vperm.xlu0 %2090, %v1673
  %v2092 = vpop.permute.xlu0 %2091
  %2095 = vset.pattern.permute.xlu0 0
  %2096 = vperm.xlu0 %2095, %v1674
  %v2097 = vpop.permute.xlu0 %2096
  %2100 = vset.pattern.permute.xlu0 0
  %2101 = vperm.xlu0 %2100, %v1675
  %v2102 = vpop.permute.xlu0 %2101
  %2105 = vset.pattern.permute.xlu0 0
  %2106 = vperm.xlu0 %2105, %v1676
  %v2107 = vpop.permute.xlu0 %2106
  %2110 = vset.pattern.permute.xlu0 0
  %2111 = vperm.xlu0 %2110, %v1677
  %v2112 = vpop.permute.xlu0 %2111
  %2115 = vset.pattern.permute.xlu0 0
  %2116 = vperm.xlu0 %2115, %v1678
  %v2117 = vpop.permute.xlu0 %2116
  %2120 = vset.pattern.permute.xlu0 0
  %2121 = vperm.xlu0 %2120, %v1679
  %v2122 = vpop.permute.xlu0 %2121
  %2125 = vset.pattern.permute.xlu0 0
  %2126 = vperm.xlu0 %2125, %v1680
  %v2127 = vpop.permute.xlu0 %2126
  %2130 = vset.pattern.permute.xlu0 0
  %2131 = vperm.xlu0 %2130, %v1681
  %v2132 = vpop.permute.xlu0 %2131
  %2135 = vset.pattern.permute.xlu0 0
  %2136 = vperm.xlu0 %2135, %v1682
  %v2137 = vpop.permute.xlu0 %2136
  %2140 = vset.pattern.permute.xlu0 0
  %2141 = vperm.xlu0 %2140, %v1683
  %v2142 = vpop.permute.xlu0 %2141
  %2145 = vset.pattern.permute.xlu0 0
  %2146 = vperm.xlu0 %2145, %v1684
  %v2147 = vpop.permute.xlu0 %2146
  %2150 = vset.pattern.permute.xlu0 0
  %2151 = vperm.xlu0 %2150, %v1685
  %v2152 = vpop.permute.xlu0 %2151
  %2155 = vset.pattern.permute.xlu0 0
  %2156 = vperm.xlu0 %2155, %v1686
  %v2157 = vpop.permute.xlu0 %2156
  %2160 = vset.pattern.permute.xlu0 0
  %2161 = vperm.xlu0 %2160, %v1687
  %v2162 = vpop.permute.xlu0 %2161
  %2165 = vset.pattern.permute.xlu0 0
  %2166 = vperm.xlu0 %2165, %v1688
  %v2167 = vpop.permute.xlu0 %2166
  %v2169 = vadd.f32 %v1497, %v1692
  %v2170 = vadd.f32 %v1498, %v1697
  %v2171 = vadd.f32 %v1499, %v1702
  %v2172 = vadd.f32 %v1500, %v1707
  %v2173 = vadd.f32 %v1501, %v1712
  %v2174 = vadd.f32 %v1502, %v1717
  %v2175 = vadd.f32 %v1503, %v1722
  %v2176 = vadd.f32 %v1504, %v1727
  %v2177 = vadd.f32 %v1505, %v1732
  %v2178 = vadd.f32 %v1506, %v1737
  %v2179 = vadd.f32 %v1507, %v1742
  %v2180 = vadd.f32 %v1508, %v1747
  %v2181 = vadd.f32 %v1509, %v1752
  %v2182 = vadd.f32 %v1510, %v1757
  %v2183 = vadd.f32 %v1511, %v1762
  %v2184 = vadd.f32 %v1512, %v1767
  %v2185 = vadd.f32 %v1513, %v1772
  %v2186 = vadd.f32 %v1514, %v1777
  %v2187 = vadd.f32 %v1515, %v1782
  %v2188 = vadd.f32 %v1516, %v1787
  %v2189 = vadd.f32 %v1517, %v1792
  %v2190 = vadd.f32 %v1518, %v1797
  %v2191 = vadd.f32 %v1519, %v1802
  %v2192 = vadd.f32 %v1520, %v1807
  %v2193 = vadd.f32 %v1521, %v1812
  %v2194 = vadd.f32 %v1522, %v1817
  %v2195 = vadd.f32 %v1523, %v1822
  %v2196 = vadd.f32 %v1524, %v1827
  %v2197 = vadd.f32 %v1525, %v1832
  %v2198 = vadd.f32 %v1526, %v1837
  %v2199 = vadd.f32 %v1527, %v1842
  %v2200 = vadd.f32 %v1528, %v1847
  %v2201 = vadd.f32 %v1529, %v1852
  %v2202 = vadd.f32 %v1530, %v1857
  %v2203 = vadd.f32 %v1531, %v1862
  %v2204 = vadd.f32 %v1532, %v1867
  %v2205 = vadd.f32 %v1533, %v1872
  %v2206 = vadd.f32 %v1534, %v1877
  %v2207 = vadd.f32 %v1535, %v1882
  %v2208 = vadd.f32 %v1536, %v1887
  %v2209 = vadd.f32 %v1537, %v1892
  %v2210 = vadd.f32 %v1538, %v1897
  %v2211 = vadd.f32 %v1539, %v1902
  %v2212 = vadd.f32 %v1540, %v1907
  %v2213 = vadd.f32 %v1541, %v1912
  %v2214 = vadd.f32 %v1542, %v1917
  %v2215 = vadd.f32 %v1543, %v1922
  %v2216 = vadd.f32 %v1544, %v1927
  %v2217 = vadd.f32 %v1545, %v1932
  %v2218 = vadd.f32 %v1546, %v1937
  %v2219 = vadd.f32 %v1547, %v1942
  %v2220 = vadd.f32 %v1548, %v1947
  %v2221 = vadd.f32 %v1549, %v1952
  %v2222 = vadd.f32 %v1550, %v1957
  %v2223 = vadd.f32 %v1551, %v1962
  %v2224 = vadd.f32 %v1552, %v1967
  %v2225 = vadd.f32 %v1553, %v1972
  %v2226 = vadd.f32 %v1554, %v1977
  %v2227 = vadd.f32 %v1555, %v1982
  %v2228 = vadd.f32 %v1556, %v1987
  %v2229 = vadd.f32 %v1557, %v1992
  %v2230 = vadd.f32 %v1558, %v1997
  %v2231 = vadd.f32 %v1559, %v2002
  %v2232 = vadd.f32 %v1560, %v2007
  %v2233 = vadd.f32 %v1561, %v2012
  %v2234 = vadd.f32 %v1562, %v2017
  %v2235 = vadd.f32 %v1563, %v2022
  %v2236 = vadd.f32 %v1564, %v2027
  %v2237 = vadd.f32 %v1565, %v2032
  %v2238 = vadd.f32 %v1566, %v2037
  %v2239 = vadd.f32 %v1567, %v2042
  %v2240 = vadd.f32 %v1568, %v2047
  %v2241 = vadd.f32 %v1569, %v2052
  %v2242 = vadd.f32 %v1570, %v2057
  %v2243 = vadd.f32 %v1571, %v2062
  %v2244 = vadd.f32 %v1572, %v2067
  %v2245 = vadd.f32 %v1573, %v2072
  %v2246 = vadd.f32 %v1574, %v2077
  %v2247 = vadd.f32 %v1575, %v2082
  %v2248 = vadd.f32 %v1576, %v2087
  %v2249 = vadd.f32 %v1577, %v2092
  %v2250 = vadd.f32 %v1578, %v2097
  %v2251 = vadd.f32 %v1579, %v2102
  %v2252 = vadd.f32 %v1580, %v2107
  %v2253 = vadd.f32 %v1581, %v2112
  %v2254 = vadd.f32 %v1582, %v2117
  %v2255 = vadd.f32 %v1583, %v2122
  %v2256 = vadd.f32 %v1584, %v2127
  %v2257 = vadd.f32 %v1585, %v2132
  %v2258 = vadd.f32 %v1586, %v2137
  %v2259 = vadd.f32 %v1587, %v2142
  %v2260 = vadd.f32 %v1588, %v2147
  %v2261 = vadd.f32 %v1589, %v2152
  %v2262 = vadd.f32 %v1590, %v2157
  %v2263 = vadd.f32 %v1591, %v2162
  %v2264 = vadd.f32 %v1592, %v2167
  %v2265 = vmax.f32 %v2169, 0.0
  %v2266 = vmax.f32 %v2170, 0.0
  %v2267 = vmax.f32 %v2171, 0.0
  %v2268 = vmax.f32 %v2172, 0.0
  %v2269 = vmax.f32 %v2173, 0.0
  %v2270 = vmax.f32 %v2174, 0.0
  %v2271 = vmax.f32 %v2175, 0.0
  %v2272 = vmax.f32 %v2176, 0.0
  %v2273 = vmax.f32 %v2177, 0.0
  %v2274 = vmax.f32 %v2178, 0.0
  %v2275 = vmax.f32 %v2179, 0.0
  %v2276 = vmax.f32 %v2180, 0.0
  %v2277 = vmax.f32 %v2181, 0.0
  %v2278 = vmax.f32 %v2182, 0.0
  %v2279 = vmax.f32 %v2183, 0.0
  %v2280 = vmax.f32 %v2184, 0.0
  %v2281 = vmax.f32 %v2185, 0.0
  %v2282 = vmax.f32 %v2186, 0.0
  %v2283 = vmax.f32 %v2187, 0.0
  %v2284 = vmax.f32 %v2188, 0.0
  %v2285 = vmax.f32 %v2189, 0.0
  %v2286 = vmax.f32 %v2190, 0.0
  %v2287 = vmax.f32 %v2191, 0.0
  %v2288 = vmax.f32 %v2192, 0.0
  %v2289 = vmax.f32 %v2193, 0.0
  %v2290 = vmax.f32 %v2194, 0.0
  %v2291 = vmax.f32 %v2195, 0.0
  %v2292 = vmax.f32 %v2196, 0.0
  %v2293 = vmax.f32 %v2197, 0.0
  %v2294 = vmax.f32 %v2198, 0.0
  %v2295 = vmax.f32 %v2199, 0.0
  %v2296 = vmax.f32 %v2200, 0.0
  %v2297 = vmax.f32 %v2201, 0.0
  %v2298 = vmax.f32 %v2202, 0.0
  %v2299 = vmax.f32 %v2203, 0.0
  %v2300 = vmax.f32 %v2204, 0.0
  %v2301 = vmax.f32 %v2205, 0.0
  %v2302 = vmax.f32 %v2206, 0.0
  %v2303 = vmax.f32 %v2207, 0.0
  %v2304 = vmax.f32 %v2208, 0.0
  %v2305 = vmax.f32 %v2209, 0.0
  %v2306 = vmax.f32 %v2210, 0.0
  %v2307 = vmax.f32 %v2211, 0.0
  %v2308 = vmax.f32 %v2212, 0.0
  %v2309 = vmax.f32 %v2213, 0.0
  %v2310 = vmax.f32 %v2214, 0.0
  %v2311 = vmax.f32 %v2215, 0.0
  %v2312 = vmax.f32 %v2216, 0.0
  %v2313 = vmax.f32 %v2217, 0.0
  %v2314 = vmax.f32 %v2218, 0.0
  %v2315 = vmax.f32 %v2219, 0.0
  %v2316 = vmax.f32 %v2220, 0.0
  %v2317 = vmax.f32 %v2221, 0.0
  %v2318 = vmax.f32 %v2222, 0.0
  %v2319 = vmax.f32 %v2223, 0.0
  %v2320 = vmax.f32 %v2224, 0.0
  %v2321 = vmax.f32 %v2225, 0.0
  %v2322 = vmax.f32 %v2226, 0.0
  %v2323 = vmax.f32 %v2227, 0.0
  %v2324 = vmax.f32 %v2228, 0.0
  %v2325 = vmax.f32 %v2229, 0.0
  %v2326 = vmax.f32 %v2230, 0.0
  %v2327 = vmax.f32 %v2231, 0.0
  %v2328 = vmax.f32 %v2232, 0.0
  %v2329 = vmax.f32 %v2233, 0.0
  %v2330 = vmax.f32 %v2234, 0.0
  %v2331 = vmax.f32 %v2235, 0.0
  %v2332 = vmax.f32 %v2236, 0.0
  %v2333 = vmax.f32 %v2237, 0.0
  %v2334 = vmax.f32 %v2238, 0.0
  %v2335 = vmax.f32 %v2239, 0.0
  %v2336 = vmax.f32 %v2240, 0.0
  %v2337 = vmax.f32 %v2241, 0.0
  %v2338 = vmax.f32 %v2242, 0.0
  %v2339 = vmax.f32 %v2243, 0.0
  %v2340 = vmax.f32 %v2244, 0.0
  %v2341 = vmax.f32 %v2245, 0.0
  %v2342 = vmax.f32 %v2246, 0.0
  %v2343 = vmax.f32 %v2247, 0.0
  %v2344 = vmax.f32 %v2248, 0.0
  %v2345 = vmax.f32 %v2249, 0.0
  %v2346 = vmax.f32 %v2250, 0.0
  %v2347 = vmax.f32 %v2251, 0.0
  %v2348 = vmax.f32 %v2252, 0.0
  %v2349 = vmax.f32 %v2253, 0.0
  %v2350 = vmax.f32 %v2254, 0.0
  %v2351 = vmax.f32 %v2255, 0.0
  %v2352 = vmax.f32 %v2256, 0.0
  %v2353 = vmax.f32 %v2257, 0.0
  %v2354 = vmax.f32 %v2258, 0.0
  %v2355 = vmax.f32 %v2259, 0.0
  %v2356 = vmax.f32 %v2260, 0.0
  %v2357 = vmax.f32 %v2261, 0.0
  %v2358 = vmax.f32 %v2262, 0.0
  %v2359 = vmax.f32 %v2263, 0.0
  %v2360 = vmax.f32 %v2264, 0.0
  %v2361 = vpack.c.bf16 %v2266, %v2265
  %v2362 = vpack.c.bf16 %v2268, %v2267
  %v2363 = vpack.c.bf16 %v2270, %v2269
  %v2364 = vpack.c.bf16 %v2272, %v2271
  %v2365 = vpack.c.bf16 %v2274, %v2273
  %v2366 = vpack.c.bf16 %v2276, %v2275
  %v2367 = vpack.c.bf16 %v2278, %v2277
  %v2368 = vpack.c.bf16 %v2280, %v2279
  %v2369 = vpack.c.bf16 %v2282, %v2281
  %v2370 = vpack.c.bf16 %v2284, %v2283
  %v2371 = vpack.c.bf16 %v2286, %v2285
  %v2372 = vpack.c.bf16 %v2288, %v2287
  %v2373 = vpack.c.bf16 %v2290, %v2289
  %v2374 = vpack.c.bf16 %v2292, %v2291
  %v2375 = vpack.c.bf16 %v2294, %v2293
  %v2376 = vpack.c.bf16 %v2296, %v2295
  %v2377 = vpack.c.bf16 %v2298, %v2297
  %v2378 = vpack.c.bf16 %v2300, %v2299
  %v2379 = vpack.c.bf16 %v2302, %v2301
  %v2380 = vpack.c.bf16 %v2304, %v2303
  %v2381 = vpack.c.bf16 %v2306, %v2305
  %v2382 = vpack.c.bf16 %v2308, %v2307
  %v2383 = vpack.c.bf16 %v2310, %v2309
  %v2384 = vpack.c.bf16 %v2312, %v2311
  %v2385 = vpack.c.bf16 %v2314, %v2313
  %v2386 = vpack.c.bf16 %v2316, %v2315
  %v2387 = vpack.c.bf16 %v2318, %v2317
  %v2388 = vpack.c.bf16 %v2320, %v2319
  %v2389 = vpack.c.bf16 %v2322, %v2321
  %v2390 = vpack.c.bf16 %v2324, %v2323
  %v2391 = vpack.c.bf16 %v2326, %v2325
  %v2392 = vpack.c.bf16 %v2328, %v2327
  %v2393 = vpack.c.bf16 %v2330, %v2329
  %v2394 = vpack.c.bf16 %v2332, %v2331
  %v2395 = vpack.c.bf16 %v2334, %v2333
  %v2396 = vpack.c.bf16 %v2336, %v2335
  %v2397 = vpack.c.bf16 %v2338, %v2337
  %v2398 = vpack.c.bf16 %v2340, %v2339
  %v2399 = vpack.c.bf16 %v2342, %v2341
  %v2400 = vpack.c.bf16 %v2344, %v2343
  %v2401 = vpack.c.bf16 %v2346, %v2345
  %v2402 = vpack.c.bf16 %v2348, %v2347
  %v2403 = vpack.c.bf16 %v2350, %v2349
  %v2404 = vpack.c.bf16 %v2352, %v2351
  %v2405 = vpack.c.bf16 %v2354, %v2353
  %v2406 = vpack.c.bf16 %v2356, %v2355
  %v2407 = vpack.c.bf16 %v2358, %v2357
  %v2408 = vpack.c.bf16 %v2360, %v2359
  %v2457 = vunpack.c.l.b16 %v2361
  %v2458 = vunpack.c.h.b16 %v2361
  %v2459 = vunpack.c.l.b16 %v2362
  %v2460 = vunpack.c.h.b16 %v2362
  %v2461 = vunpack.c.l.b16 %v2363
  %v2462 = vunpack.c.h.b16 %v2363
  %v2463 = vunpack.c.l.b16 %v2364
  %v2464 = vunpack.c.h.b16 %v2364
  %v2465 = vunpack.c.l.b16 %v2365
  %v2466 = vunpack.c.h.b16 %v2365
  %v2467 = vunpack.c.l.b16 %v2366
  %v2468 = vunpack.c.h.b16 %v2366
  %v2469 = vunpack.c.l.b16 %v2367
  %v2470 = vunpack.c.h.b16 %v2367
  %v2471 = vunpack.c.l.b16 %v2368
  %v2472 = vunpack.c.h.b16 %v2368
  %v2473 = vunpack.c.l.b16 %v2369
  %v2474 = vunpack.c.h.b16 %v2369
  %v2475 = vunpack.c.l.b16 %v2370
  %v2476 = vunpack.c.h.b16 %v2370
  %v2477 = vunpack.c.l.b16 %v2371
  %v2478 = vunpack.c.h.b16 %v2371
  %v2479 = vunpack.c.l.b16 %v2372
  %v2480 = vunpack.c.h.b16 %v2372
  %v2481 = vunpack.c.l.b16 %v2373
  %v2482 = vunpack.c.h.b16 %v2373
  %v2483 = vunpack.c.l.b16 %v2374
  %v2484 = vunpack.c.h.b16 %v2374
  %v2485 = vunpack.c.l.b16 %v2375
  %v2486 = vunpack.c.h.b16 %v2375
  %v2487 = vunpack.c.l.b16 %v2376
  %v2488 = vunpack.c.h.b16 %v2376
  %v2489 = vunpack.c.l.b16 %v2377
  %v2490 = vunpack.c.h.b16 %v2377
  %v2491 = vunpack.c.l.b16 %v2378
  %v2492 = vunpack.c.h.b16 %v2378
  %v2493 = vunpack.c.l.b16 %v2379
  %v2494 = vunpack.c.h.b16 %v2379
  %v2495 = vunpack.c.l.b16 %v2380
  %v2496 = vunpack.c.h.b16 %v2380
  %v2497 = vunpack.c.l.b16 %v2381
  %v2498 = vunpack.c.h.b16 %v2381
  %v2499 = vunpack.c.l.b16 %v2382
  %v2500 = vunpack.c.h.b16 %v2382
  %v2501 = vunpack.c.l.b16 %v2383
  %v2502 = vunpack.c.h.b16 %v2383
  %v2503 = vunpack.c.l.b16 %v2384
  %v2504 = vunpack.c.h.b16 %v2384
  %v2505 = vunpack.c.l.b16 %v2385
  %v2506 = vunpack.c.h.b16 %v2385
  %v2507 = vunpack.c.l.b16 %v2386
  %v2508 = vunpack.c.h.b16 %v2386
  %v2509 = vunpack.c.l.b16 %v2387
  %v2510 = vunpack.c.h.b16 %v2387
  %v2511 = vunpack.c.l.b16 %v2388
  %v2512 = vunpack.c.h.b16 %v2388
  %v2513 = vunpack.c.l.b16 %v2389
  %v2514 = vunpack.c.h.b16 %v2389
  %v2515 = vunpack.c.l.b16 %v2390
  %v2516 = vunpack.c.h.b16 %v2390
  %v2517 = vunpack.c.l.b16 %v2391
  %v2518 = vunpack.c.h.b16 %v2391
  %v2519 = vunpack.c.l.b16 %v2392
  %v2520 = vunpack.c.h.b16 %v2392
  %v2521 = vunpack.c.l.b16 %v2393
  %v2522 = vunpack.c.h.b16 %v2393
  %v2523 = vunpack.c.l.b16 %v2394
  %v2524 = vunpack.c.h.b16 %v2394
  %v2525 = vunpack.c.l.b16 %v2395
  %v2526 = vunpack.c.h.b16 %v2395
  %v2527 = vunpack.c.l.b16 %v2396
  %v2528 = vunpack.c.h.b16 %v2396
  %v2529 = vunpack.c.l.b16 %v2397
  %v2530 = vunpack.c.h.b16 %v2397
  %v2531 = vunpack.c.l.b16 %v2398
  %v2532 = vunpack.c.h.b16 %v2398
  %v2533 = vunpack.c.l.b16 %v2399
  %v2534 = vunpack.c.h.b16 %v2399
  %v2535 = vunpack.c.l.b16 %v2400
  %v2536 = vunpack.c.h.b16 %v2400
  %v2537 = vunpack.c.l.b16 %v2401
  %v2538 = vunpack.c.h.b16 %v2401
  %v2539 = vunpack.c.l.b16 %v2402
  %v2540 = vunpack.c.h.b16 %v2402
  %v2541 = vunpack.c.l.b16 %v2403
  %v2542 = vunpack.c.h.b16 %v2403
  %v2543 = vunpack.c.l.b16 %v2404
  %v2544 = vunpack.c.h.b16 %v2404
  %v2545 = vunpack.c.l.b16 %v2405
  %v2546 = vunpack.c.h.b16 %v2405
  %v2547 = vunpack.c.l.b16 %v2406
  %v2548 = vunpack.c.h.b16 %v2406
  %v2549 = vunpack.c.l.b16 %v2407
  %v2550 = vunpack.c.h.b16 %v2407
  %v2551 = vunpack.c.l.b16 %v2408
  %v2552 = vunpack.c.h.b16 %v2408
  %v2553 = vpack.c.b16 %v2457, %v2457
  %v2554 = vpack.c.b16 %v2458, %v2458
  %v2555 = vpack.c.b16 %v2459, %v2459
  %v2556 = vpack.c.b16 %v2460, %v2460
  %v2557 = vpack.c.b16 %v2461, %v2461
  %v2558 = vpack.c.b16 %v2462, %v2462
  %v2559 = vpack.c.b16 %v2463, %v2463
  %v2560 = vpack.c.b16 %v2464, %v2464
  %v2561 = vpack.c.b16 %v2465, %v2465
  %v2562 = vpack.c.b16 %v2466, %v2466
  %v2563 = vpack.c.b16 %v2467, %v2467
  %v2564 = vpack.c.b16 %v2468, %v2468
  %v2565 = vpack.c.b16 %v2469, %v2469
  %v2566 = vpack.c.b16 %v2470, %v2470
  %v2567 = vpack.c.b16 %v2471, %v2471
  %v2568 = vpack.c.b16 %v2472, %v2472
  %v2569 = vpack.c.b16 %v2473, %v2473
  %v2570 = vpack.c.b16 %v2474, %v2474
  %v2571 = vpack.c.b16 %v2475, %v2475
  %v2572 = vpack.c.b16 %v2476, %v2476
  %v2573 = vpack.c.b16 %v2477, %v2477
  %v2574 = vpack.c.b16 %v2478, %v2478
  %v2575 = vpack.c.b16 %v2479, %v2479
  %v2576 = vpack.c.b16 %v2480, %v2480
  %v2577 = vpack.c.b16 %v2481, %v2481
  %v2578 = vpack.c.b16 %v2482, %v2482
  %v2579 = vpack.c.b16 %v2483, %v2483
  %v2580 = vpack.c.b16 %v2484, %v2484
  %v2581 = vpack.c.b16 %v2485, %v2485
  %v2582 = vpack.c.b16 %v2486, %v2486
  %v2583 = vpack.c.b16 %v2487, %v2487
  %v2584 = vpack.c.b16 %v2488, %v2488
  %v2585 = vpack.c.b16 %v2489, %v2489
  %v2586 = vpack.c.b16 %v2490, %v2490
  %v2587 = vpack.c.b16 %v2491, %v2491
  %v2588 = vpack.c.b16 %v2492, %v2492
  %v2589 = vpack.c.b16 %v2493, %v2493
  %v2590 = vpack.c.b16 %v2494, %v2494
  %v2591 = vpack.c.b16 %v2495, %v2495
  %v2592 = vpack.c.b16 %v2496, %v2496
  %v2593 = vpack.c.b16 %v2497, %v2497
  %v2594 = vpack.c.b16 %v2498, %v2498
  %v2595 = vpack.c.b16 %v2499, %v2499
  %v2596 = vpack.c.b16 %v2500, %v2500
  %v2597 = vpack.c.b16 %v2501, %v2501
  %v2598 = vpack.c.b16 %v2502, %v2502
  %v2599 = vpack.c.b16 %v2503, %v2503
  %v2600 = vpack.c.b16 %v2504, %v2504
  %v2601 = vpack.c.b16 %v2505, %v2505
  %v2602 = vpack.c.b16 %v2506, %v2506
  %v2603 = vpack.c.b16 %v2507, %v2507
  %v2604 = vpack.c.b16 %v2508, %v2508
  %v2605 = vpack.c.b16 %v2509, %v2509
  %v2606 = vpack.c.b16 %v2510, %v2510
  %v2607 = vpack.c.b16 %v2511, %v2511
  %v2608 = vpack.c.b16 %v2512, %v2512
  %v2609 = vpack.c.b16 %v2513, %v2513
  %v2610 = vpack.c.b16 %v2514, %v2514
  %v2611 = vpack.c.b16 %v2515, %v2515
  %v2612 = vpack.c.b16 %v2516, %v2516
  %v2613 = vpack.c.b16 %v2517, %v2517
  %v2614 = vpack.c.b16 %v2518, %v2518
  %v2615 = vpack.c.b16 %v2519, %v2519
  %v2616 = vpack.c.b16 %v2520, %v2520
  %v2617 = vpack.c.b16 %v2521, %v2521
  %v2618 = vpack.c.b16 %v2522, %v2522
  %v2619 = vpack.c.b16 %v2523, %v2523
  %v2620 = vpack.c.b16 %v2524, %v2524
  %v2621 = vpack.c.b16 %v2525, %v2525
  %v2622 = vpack.c.b16 %v2526, %v2526
  %v2623 = vpack.c.b16 %v2527, %v2527
  %v2624 = vpack.c.b16 %v2528, %v2528
  %v2625 = vpack.c.b16 %v2529, %v2529
  %v2626 = vpack.c.b16 %v2530, %v2530
  %v2627 = vpack.c.b16 %v2531, %v2531
  %v2628 = vpack.c.b16 %v2532, %v2532
  %v2629 = vpack.c.b16 %v2533, %v2533
  %v2630 = vpack.c.b16 %v2534, %v2534
  %v2631 = vpack.c.b16 %v2535, %v2535
  %v2632 = vpack.c.b16 %v2536, %v2536
  %v2633 = vpack.c.b16 %v2537, %v2537
  %v2634 = vpack.c.b16 %v2538, %v2538
  %v2635 = vpack.c.b16 %v2539, %v2539
  %v2636 = vpack.c.b16 %v2540, %v2540
  %v2637 = vpack.c.b16 %v2541, %v2541
  %v2638 = vpack.c.b16 %v2542, %v2542
  %v2639 = vpack.c.b16 %v2543, %v2543
  %v2640 = vpack.c.b16 %v2544, %v2544
  %v2641 = vpack.c.b16 %v2545, %v2545
  %v2642 = vpack.c.b16 %v2546, %v2546
  %v2643 = vpack.c.b16 %v2547, %v2547
  %v2644 = vpack.c.b16 %v2548, %v2548
  %v2645 = vpack.c.b16 %v2549, %v2549
  %v2646 = vpack.c.b16 %v2550, %v2550
  %v2647 = vpack.c.b16 %v2551, %v2551
  %v2648 = vpack.c.b16 %v2552, %v2552
  %vm2745 = vcmask 11264
  %2746 = vst.msk [vmem:[%s4] sm:$0xf] %vm2745, %v2553
  %2747 = vst.msk [vmem:[%s4 + $0x4] sm:$0xf] %vm2745, %v2554
  %2748 = vst.msk [vmem:[%s4 + $0x8] sm:$0xf] %vm2745, %v2555
  %2749 = vst.msk [vmem:[%s4 + $0xc] sm:$0xf] %vm2745, %v2556
  %2750 = vst.msk [vmem:[%s4 + $0x10] sm:$0xf] %vm2745, %v2557
  %2751 = vst.msk [vmem:[%s4 + $0x14] sm:$0xf] %vm2745, %v2558
  %2752 = vst.msk [vmem:[%s4 + $0x18] sm:$0xf] %vm2745, %v2559
  %2753 = vst.msk [vmem:[%s4 + $0x1c] sm:$0xf] %vm2745, %v2560
  %2754 = vst.msk [vmem:[%s4 + $0x20] sm:$0xf] %vm2745, %v2561
  %2755 = vst.msk [vmem:[%s4 + $0x24] sm:$0xf] %vm2745, %v2562
  %2756 = vst.msk [vmem:[%s4 + $0x28] sm:$0xf] %vm2745, %v2563
  %2757 = vst.msk [vmem:[%s4 + $0x2c] sm:$0xf] %vm2745, %v2564
  %2758 = vst.msk [vmem:[%s4 + $0x30] sm:$0xf] %vm2745, %v2565
  %2759 = vst.msk [vmem:[%s4 + $0x34] sm:$0xf] %vm2745, %v2566
  %2760 = vst.msk [vmem:[%s4 + $0x38] sm:$0xf] %vm2745, %v2567
  %2761 = vst.msk [vmem:[%s4 + $0x3c] sm:$0xf] %vm2745, %v2568
  %2762 = vst.msk [vmem:[%s4 + $0x40] sm:$0xf] %vm2745, %v2569
  %2763 = vst.msk [vmem:[%s4 + $0x44] sm:$0xf] %vm2745, %v2570
  %2764 = vst.msk [vmem:[%s4 + $0x48] sm:$0xf] %vm2745, %v2571
  %2765 = vst.msk [vmem:[%s4 + $0x4c] sm:$0xf] %vm2745, %v2572
  %2766 = vst.msk [vmem:[%s4 + $0x50] sm:$0xf] %vm2745, %v2573
  %2767 = vst.msk [vmem:[%s4 + $0x54] sm:$0xf] %vm2745, %v2574
  %2768 = vst.msk [vmem:[%s4 + $0x58] sm:$0xf] %vm2745, %v2575
  %2769 = vst.msk [vmem:[%s4 + $0x5c] sm:$0xf] %vm2745, %v2576
  %2770 = vst.msk [vmem:[%s4 + $0x60] sm:$0xf] %vm2745, %v2577
  %2771 = vst.msk [vmem:[%s4 + $0x64] sm:$0xf] %vm2745, %v2578
  %2772 = vst.msk [vmem:[%s4 + $0x68] sm:$0xf] %vm2745, %v2579
  %2773 = vst.msk [vmem:[%s4 + $0x6c] sm:$0xf] %vm2745, %v2580
  %2774 = vst.msk [vmem:[%s4 + $0x70] sm:$0xf] %vm2745, %v2581
  %2775 = vst.msk [vmem:[%s4 + $0x74] sm:$0xf] %vm2745, %v2582
  %2776 = vst.msk [vmem:[%s4 + $0x78] sm:$0xf] %vm2745, %v2583
  %2777 = vst.msk [vmem:[%s4 + $0x7c] sm:$0xf] %vm2745, %v2584
  %2778 = vst.msk [vmem:[%s4 + $0x80] sm:$0xf] %vm2745, %v2585
  %2779 = vst.msk [vmem:[%s4 + $0x84] sm:$0xf] %vm2745, %v2586
  %2780 = vst.msk [vmem:[%s4 + $0x88] sm:$0xf] %vm2745, %v2587
  %2781 = vst.msk [vmem:[%s4 + $0x8c] sm:$0xf] %vm2745, %v2588
  %2782 = vst.msk [vmem:[%s4 + $0x90] sm:$0xf] %vm2745, %v2589
  %2783 = vst.msk [vmem:[%s4 + $0x94] sm:$0xf] %vm2745, %v2590
  %2784 = vst.msk [vmem:[%s4 + $0x98] sm:$0xf] %vm2745, %v2591
  %2785 = vst.msk [vmem:[%s4 + $0x9c] sm:$0xf] %vm2745, %v2592
  %2786 = vst.msk [vmem:[%s4 + $0xa0] sm:$0xf] %vm2745, %v2593
  %2787 = vst.msk [vmem:[%s4 + $0xa4] sm:$0xf] %vm2745, %v2594
  %2788 = vst.msk [vmem:[%s4 + $0xa8] sm:$0xf] %vm2745, %v2595
  %2789 = vst.msk [vmem:[%s4 + $0xac] sm:$0xf] %vm2745, %v2596
  %2790 = vst.msk [vmem:[%s4 + $0xb0] sm:$0xf] %vm2745, %v2597
  %2791 = vst.msk [vmem:[%s4 + $0xb4] sm:$0xf] %vm2745, %v2598
  %2792 = vst.msk [vmem:[%s4 + $0xb8] sm:$0xf] %vm2745, %v2599
  %2793 = vst.msk [vmem:[%s4 + $0xbc] sm:$0xf] %vm2745, %v2600
  %2794 = vst.msk [vmem:[%s4 + $0xc0] sm:$0xf] %vm2745, %v2601
  %2795 = vst.msk [vmem:[%s4 + $0xc4] sm:$0xf] %vm2745, %v2602
  %2796 = vst.msk [vmem:[%s4 + $0xc8] sm:$0xf] %vm2745, %v2603
  %2797 = vst.msk [vmem:[%s4 + $0xcc] sm:$0xf] %vm2745, %v2604
  %2798 = vst.msk [vmem:[%s4 + $0xd0] sm:$0xf] %vm2745, %v2605
  %2799 = vst.msk [vmem:[%s4 + $0xd4] sm:$0xf] %vm2745, %v2606
  %2800 = vst.msk [vmem:[%s4 + $0xd8] sm:$0xf] %vm2745, %v2607
  %2801 = vst.msk [vmem:[%s4 + $0xdc] sm:$0xf] %vm2745, %v2608
  %2802 = vst.msk [vmem:[%s4 + $0xe0] sm:$0xf] %vm2745, %v2609
  %2803 = vst.msk [vmem:[%s4 + $0xe4] sm:$0xf] %vm2745, %v2610
  %2804 = vst.msk [vmem:[%s4 + $0xe8] sm:$0xf] %vm2745, %v2611
  %2805 = vst.msk [vmem:[%s4 + $0xec] sm:$0xf] %vm2745, %v2612
  %2806 = vst.msk [vmem:[%s4 + $0xf0] sm:$0xf] %vm2745, %v2613
  %2807 = vst.msk [vmem:[%s4 + $0xf4] sm:$0xf] %vm2745, %v2614
  %2808 = vst.msk [vmem:[%s4 + $0xf8] sm:$0xf] %vm2745, %v2615
  %2809 = vst.msk [vmem:[%s4 + $0xfc] sm:$0xf] %vm2745, %v2616
  %2810 = vst.msk [vmem:[%s4 + $0x100] sm:$0xf] %vm2745, %v2617
  %2811 = vst.msk [vmem:[%s4 + $0x104] sm:$0xf] %vm2745, %v2618
  %2812 = vst.msk [vmem:[%s4 + $0x108] sm:$0xf] %vm2745, %v2619
  %2813 = vst.msk [vmem:[%s4 + $0x10c] sm:$0xf] %vm2745, %v2620
  %2814 = vst.msk [vmem:[%s4 + $0x110] sm:$0xf] %vm2745, %v2621
  %2815 = vst.msk [vmem:[%s4 + $0x114] sm:$0xf] %vm2745, %v2622
  %2816 = vst.msk [vmem:[%s4 + $0x118] sm:$0xf] %vm2745, %v2623
  %2817 = vst.msk [vmem:[%s4 + $0x11c] sm:$0xf] %vm2745, %v2624
  %2818 = vst.msk [vmem:[%s4 + $0x120] sm:$0xf] %vm2745, %v2625
  %2819 = vst.msk [vmem:[%s4 + $0x124] sm:$0xf] %vm2745, %v2626
  %2820 = vst.msk [vmem:[%s4 + $0x128] sm:$0xf] %vm2745, %v2627
  %2821 = vst.msk [vmem:[%s4 + $0x12c] sm:$0xf] %vm2745, %v2628
  %2822 = vst.msk [vmem:[%s4 + $0x130] sm:$0xf] %vm2745, %v2629
  %2823 = vst.msk [vmem:[%s4 + $0x134] sm:$0xf] %vm2745, %v2630
  %2824 = vst.msk [vmem:[%s4 + $0x138] sm:$0xf] %vm2745, %v2631
  %2825 = vst.msk [vmem:[%s4 + $0x13c] sm:$0xf] %vm2745, %v2632
  %2826 = vst.msk [vmem:[%s4 + $0x140] sm:$0xf] %vm2745, %v2633
  %2827 = vst.msk [vmem:[%s4 + $0x144] sm:$0xf] %vm2745, %v2634
  %2828 = vst.msk [vmem:[%s4 + $0x148] sm:$0xf] %vm2745, %v2635
  %2829 = vst.msk [vmem:[%s4 + $0x14c] sm:$0xf] %vm2745, %v2636
  %2830 = vst.msk [vmem:[%s4 + $0x150] sm:$0xf] %vm2745, %v2637
  %2831 = vst.msk [vmem:[%s4 + $0x154] sm:$0xf] %vm2745, %v2638
  %2832 = vst.msk [vmem:[%s4 + $0x158] sm:$0xf] %vm2745, %v2639
  %2833 = vst.msk [vmem:[%s4 + $0x15c] sm:$0xf] %vm2745, %v2640
  %2834 = vst.msk [vmem:[%s4 + $0x160] sm:$0xf] %vm2745, %v2641
  %2835 = vst.msk [vmem:[%s4 + $0x164] sm:$0xf] %vm2745, %v2642
  %2836 = vst.msk [vmem:[%s4 + $0x168] sm:$0xf] %vm2745, %v2643
  %2837 = vst.msk [vmem:[%s4 + $0x16c] sm:$0xf] %vm2745, %v2644
  %2838 = vst.msk [vmem:[%s4 + $0x170] sm:$0xf] %vm2745, %v2645
  %2839 = vst.msk [vmem:[%s4 + $0x174] sm:$0xf] %vm2745, %v2646
  %2840 = vst.msk [vmem:[%s4 + $0x178] sm:$0xf] %vm2745, %v2647
  %2841 = vst.msk [vmem:[%s4 + $0x17c] sm:$0xf] %vm2745, %v2648
  // Predicated region
  $region18: #{generator64_forward.5} parent=0 // pred_check
    _
  $region19: #{generator64_forward.5} parent=0 // pred_check_branch
    %2843 = sbr.rel (0) target = $region21
  $region20: #{generator64_forward.5} parent=0 // pred_region
    _
  $region21: #{generator64_forward.5} parent=0 // pred_fallthru
    _
  // Predicated region
  $region22: #{generator64_forward.5} parent=0 // pred_check
    _
  $region23: #{generator64_forward.5} parent=0 // pred_check_branch
    %2845 = sbr.rel (0) target = $region25
  $region24: #{generator64_forward.5} parent=0 // pred_region
    _
  $region25: #{generator64_forward.5} parent=0 // pred_fallthru
    _

// kernel: generator64_forward.7
$region0: #{generator64_forward.7}
  #allocation0 [shape = 'u32[]', space=smem, size = 0x4, offset = 0x4, fixed_abs, tag = 'smem constant byte address 0x4 - core index']
  #allocation1 [shape = 'u32[144,128]{1,0:T(1,128)}', space=vmem, size = 0x12000, scoped, tag = 'internal scratch']
  %s0 = inlined_call_operand.vmem [shape: bf16[4,12,96], index: 0, kind: input, shape index: {}]
  %s1 = inlined_call_operand.vmem [shape: bf16[4,96,128], index: 1, kind: input, shape index: {}]
  %s2 = inlined_call_operand.vmem [shape: f32[12,1], index: 2, kind: input, shape index: {}]
  %s3 = inlined_call_operand.vmem [shape: f32[12,1], index: 3, kind: input, shape index: {}]
  %s4 = inlined_call_operand.vmem [shape: bf16[4,12,128], index: 4, kind: output, shape index: {}]
  %s5 = sld [smem:[#allocation0]]
  $region49: #{generator64_forward.7} parent=0
    _
  %s7 = ssub.s32 1, %s5
  %s8 = scalar_select 0, %s7, %s5
  loop: start=0, step=1, limit=6
  $region2: #{generator64_forward.7} parent=0 // loop_pre_header
    _
  $region3: #{generator64_forward.7} parent=0 // loop_header
    %s10 = sphi 0, %s14
    %p11 = scmp.ge.s32.totalorder %s10, 6
    %s17 = sphi 0, %s29
    %s18 = sphi 0, %s25
    %s19 = sphi 0, %s17
    %s20 = sphi 0, %s18
    %s21 = sphi 0, %s19
    %s22 = sphi 0, %s20
    %s32 = sphi 0, %s34
    %s35 = sphi 0, %s32
    %s36 = sphi 0, %s35
    %s52 = sphi 0, %s36
    %s60 = sphi 0, %s62
    %s63 = sphi 0, %s60
    %s64 = sphi 0, %s63
    %s80 = sphi 0, %s64
    %s84 = sphi 0, %s84
    %s86 = sphi 0, %s84
    %s87 = sphi 0, %s86
    %s101 = sphi 0, %s87
    %s105 = sphi 0, %s105
    %s107 = sphi 0, %s105
    %s108 = sphi 0, %s107
    %s122 = sphi 0, %s108
    %s130 = sphi 0, %s132
    %s133 = sphi 0, %s130
    %s134 = sphi 0, %s133
    %s150 = sphi 0, %s134
  $region4: #{generator64_forward.7} parent=0 // loop_header_branch
    %13 = sbr.rel (%p11) target = $region8
  $region5: #{generator64_forward.7} parent=0 // loop_body
    %s15 = ssub.s32 %s10, 1
    %s16 = ssub.s32 %s10, 2
    %s23 = sadd.s32 1, %s18
    %p24 = scmp.ge.s32.totalorder %s23, 1
    %s25 = scalar_select %p24, 0, %s23
    %s26 = sadd.s32 1, %s17
    %s27 = scalar_select %p24, %s26, %s17
    %p28 = scmp.ge.s32.totalorder %s27, 4
    %s29 = scalar_select %p28, 0, %s27
    %s30 = ssub.s32 %s17, %s29
    %p31 = scmp.eq.s32.totalorder %s30, 0
    %s33 = sadd.s32 %s32, 1
    %s34 = scalar_select %p31, %s32, %s33
    %p37 = pneg %p31
    %p38 = scmp.eq.s32.totalorder %s10, 3
    %p39 = por %p37, %p38
    %p40 = scmp.ne.s32.totalorder %s32, %s35
    %p41 = scmp.eq.s32.totalorder %s10, 0
    %p42 = por %p40, %p41
    %p43 = scmp.ne.s32.totalorder %s32, %s35
    %p44 = scmp.eq.s32.totalorder %s15, 3
    %p45 = por %p43, %p44
    %p46 = scmp.ne.s32.totalorder %s35, %s36
    %p47 = scmp.eq.s32.totalorder %s15, 0
    %p48 = por %p46, %p47
    %p49 = scmp.ne.s32.totalorder %s35, %s36
    %p50 = scmp.eq.s32.totalorder %s16, 3
    %p51 = por %p49, %p50
    %p53 = scmp.ne.s32.totalorder %s36, %s52
    %p54 = scmp.eq.s32.totalorder %s16, 0
    %p55 = por %p53, %p54
    %s56 = ssub.s32 %s17, %s29
    %s57 = ssub.s32 %s18, %s25
    %s58 = sor.u32 %s56, %s57
    %p59 = scmp.eq.s32.totalorder %s58, 0
    %s61 = sadd.s32 %s60, 1
    %s62 = scalar_select %p59, %s60, %s61
    %p65 = pneg %p59
    %p66 = scmp.eq.s32.totalorder %s10, 3
    %p67 = por %p65, %p66
    %p68 = scmp.ne.s32.totalorder %s60, %s63
    %p69 = scmp.eq.s32.totalorder %s10, 0
    %p70 = por %p68, %p69
    %p71 = scmp.ne.s32.totalorder %s60, %s63
    %p72 = scmp.eq.s32.totalorder %s15, 3
    %p73 = por %p71, %p72
    %p74 = scmp.ne.s32.totalorder %s63, %s64
    %p75 = scmp.eq.s32.totalorder %s15, 0
    %p76 = por %p74, %p75
    %p77 = scmp.ne.s32.totalorder %s63, %s64
    %p78 = scmp.eq.s32.totalorder %s16, 3
    %p79 = por %p77, %p78
    %p81 = scmp.ne.s32.totalorder %s64, %s80
    %p82 = scmp.eq.s32.totalorder %s16, 0
    %p83 = por %p81, %p82
    %s85 = sadd.s32 %s84, 1
    %p88 = scmp.eq.s32.totalorder %s10, 3
    %p89 = scmp.ne.s32.totalorder %s84, %s86
    %p90 = scmp.eq.s32.totalorder %s10, 0
    %p91 = por %p89, %p90
    %p92 = scmp.ne.s32.totalorder %s84, %s86
    %p93 = scmp.eq.s32.totalorder %s15, 3
    %p94 = por %p92, %p93
    %p95 = scmp.ne.s32.totalorder %s86, %s87
    %p96 = scmp.eq.s32.totalorder %s15, 0
    %p97 = por %p95, %p96
    %p98 = scmp.ne.s32.totalorder %s86, %s87
    %p99 = scmp.eq.s32.totalorder %s16, 3
    %p100 = por %p98, %p99
    %p102 = scmp.ne.s32.totalorder %s87, %s101
    %p103 = scmp.eq.s32.totalorder %s16, 0
    %p104 = por %p102, %p103
    %s106 = sadd.s32 %s105, 1
    %p109 = scmp.eq.s32.totalorder %s10, 3
    %p110 = scmp.ne.s32.totalorder %s105, %s107
    %p111 = scmp.eq.s32.totalorder %s10, 0
    %p112 = por %p110, %p111
    %p113 = scmp.ne.s32.totalorder %s105, %s107
    %p114 = scmp.eq.s32.totalorder %s15, 3
    %p115 = por %p113, %p114
    %p116 = scmp.ne.s32.totalorder %s107, %s108
    %p117 = scmp.eq.s32.totalorder %s15, 0
    %p118 = por %p116, %p117
    %p119 = scmp.ne.s32.totalorder %s107, %s108
    %p120 = scmp.eq.s32.totalorder %s16, 3
    %p121 = por %p119, %p120
    %p123 = scmp.ne.s32.totalorder %s108, %s122
    %p124 = scmp.eq.s32.totalorder %s16, 0
    %p125 = por %p123, %p124
    %s126 = ssub.s32 %s17, %s29
    %s127 = ssub.s32 %s18, %s25
    %s128 = sor.u32 %s126, %s127
    %p129 = scmp.eq.s32.totalorder %s128, 0
    %s131 = sadd.s32 %s130, 1
    %s132 = scalar_select %p129, %s130, %s131
    %p135 = pneg %p129
    %p136 = scmp.eq.s32.totalorder %s10, 3
    %p137 = por %p135, %p136
    %p138 = scmp.ne.s32.totalorder %s130, %s133
    %p139 = scmp.eq.s32.totalorder %s10, 0
    %p140 = por %p138, %p139
    %p141 = scmp.ne.s32.totalorder %s130, %s133
    %p142 = scmp.eq.s32.totalorder %s15, 3
    %p143 = por %p141, %p142
    %p144 = scmp.ne.s32.totalorder %s133, %s134
    %p145 = scmp.eq.s32.totalorder %s15, 0
    %p146 = por %p144, %p145
    %p147 = scmp.ne.s32.totalorder %s133, %s134
    %p148 = scmp.eq.s32.totalorder %s16, 3
    %p149 = por %p147, %p148
    %p151 = scmp.ne.s32.totalorder %s134, %s150
    %p152 = scmp.eq.s32.totalorder %s16, 0
    %p153 = por %p151, %p152
    %p154 = scmp.le.s32.totalorder 1, %s10
    %p155 = scmp.lt.s32.totalorder %s10, 5
    %p156 = pnand %p154, %p155
    %p157 = pneg %p156
    // Predicated region
    $region9: #{generator64_forward.7} parent=5 // pred_check
      _
    $region10: #{generator64_forward.7} parent=5 // pred_check_branch
      %159 = sbr.rel (%p156) target = $region12
    $region11: #{generator64_forward.7} parent=5 // pred_region
      %s160 = ssub.s32 %s10, 1
      // Predicated region
      $region13: #{generator64_forward.7} parent=11 // pred_check
        %p161 = pneg %p97
      $region14: #{generator64_forward.7} parent=11 // pred_check_branch
        %163 = sbr.rel (%p161) target = $region16
      $region15: #{generator64_forward.7} parent=11 // pred_region
        _
      $region16: #{generator64_forward.7} parent=11 // pred_fallthru
        _
      // Predicated region
      $region17: #{generator64_forward.7} parent=11 // pred_check
        %p164 = pneg %p118
      $region18: #{generator64_forward.7} parent=11 // pred_check_branch
        %166 = sbr.rel (%p164) target = $region20
      $region19: #{generator64_forward.7} parent=11 // pred_region
        _
      $region20: #{generator64_forward.7} parent=11 // pred_fallthru
        _
    $region12: #{generator64_forward.7} parent=5 // pred_fallthru
      _
    %p167 = scmp.lt.s32.totalorder %s10, 4
    // Predicated region
    $region21: #{generator64_forward.7} parent=5 // pred_check
      %p168 = pneg %p167
    $region22: #{generator64_forward.7} parent=5 // pred_check_branch
      %170 = sbr.rel (%p168) target = $region24
    $region23: #{generator64_forward.7} parent=5 // pred_region
      // Predicated region
      $region25: #{generator64_forward.7} parent=23 // pred_check
        %p171 = pneg %p42
      $region26: #{generator64_forward.7} parent=23 // pred_check_branch
        %173 = sbr.rel (%p171) target = $region28
      $region27: #{generator64_forward.7} parent=23 // pred_region
        %p174 = scmp.lt.s32.totalorder %s17, 3
        %s175 = scalar_select %p174, %s17, 3
        %s176 = smul.addr %s175, 2
        %s177 = smul.addr %s176, 4
        %s178 = scalar_lea.vmem %s0, %s177
      $region28: #{generator64_forward.7} parent=23 // pred_fallthru
        _
      // Predicated region
      $region29: #{generator64_forward.7} parent=23 // pred_check
        %p179 = pneg %p70
      $region30: #{generator64_forward.7} parent=23 // pred_check_branch
        %181 = sbr.rel (%p179) target = $region32
      $region31: #{generator64_forward.7} parent=23 // pred_region
        %p182 = scmp.lt.s32.totalorder %s17, 3
        %s183 = scalar_select %p182, %s17, 3
        %p184 = scmp.lt.s32.totalorder %s18, 0
        %s185 = scalar_select %p184, %s18, 0
        %s186 = smul.addr %s183, 12
        %s187 = sadd.s32 %s185, %s186
        %s188 = smul.addr %s187, 4
        %s189 = scalar_lea.vmem %s1, %s188
      $region32: #{generator64_forward.7} parent=23 // pred_fallthru
        _
    $region24: #{generator64_forward.7} parent=5 // pred_fallthru
      _
    %p190 = scmp.le.s32.totalorder 1, %s10
    %p191 = scmp.lt.s32.totalorder %s10, 5
    %p192 = pnand %p190, %p191
    %p193 = pneg %p192
    // Predicated region
    $region33: #{generator64_forward.7} parent=5 // pred_check
      _
    $region34: #{generator64_forward.7} parent=5 // pred_check_branch
      %195 = sbr.rel (%p192) target = $region36
    $region35: #{generator64_forward.7} parent=5 // pred_region
      %s196 = ssub.s32 %s10, 1
      %p197 = scmp.lt.s32.totalorder %s19, 3
      %s198 = scalar_select %p197, %s19, 3
      %s199 = smul.addr %s198, 2
      %s200 = smul.addr %s199, 4
      %s201 = scalar_lea.vmem %s0, %s200
      %p202 = pneg %p48
      %p203 = pneg %p45
      %p204 = scmp.lt.s32.totalorder %s19, 3
      %s205 = scalar_select %p204, %s19, 3
      %p206 = scmp.lt.s32.totalorder %s20, 0
      %s207 = scalar_select %p206, %s20, 0
      %s208 = smul.addr %s205, 12
      %s209 = sadd.s32 %s207, %s208
      %s210 = smul.addr %s209, 4
      %s211 = scalar_lea.vmem %s1, %s210
      %p212 = pneg %p76
      %p213 = pneg %p73
      %p214 = pneg %p97
      %p215 = pneg %p94
      %p216 = pneg %p118
      %p217 = pneg %p115
      %p218 = pneg %p146
      %p219 = pneg %p143
      %p220 = scmp.lt.s32.totalorder %s19, 3
      %s221 = scalar_select %p220, %s19, 3
      %p222 = scmp.lt.s32.totalorder %s20, 0
      %s223 = scalar_select %p222, %s20, 0
      %s224 = smul.addr %s221, 2
      %s225 = sadd.s32 %s223, %s224
      %s226 = smul.addr %s225, 4
      %s227 = scalar_lea.vmem %s4, %s226
      %p228 = scmp.lt.s32.totalorder %s19, 3
      %s229 = scalar_select %p228, %s19, 3
      %s230 = smul.addr %s229, 2
      %s231 = smul.addr %s230, 4
      %s232 = scalar_lea.vmem %s0, %s231
      %p233 = scmp.lt.s32.totalorder %s19, 3
      %s234 = scalar_select %p233, %s19, 3
      %p235 = scmp.lt.s32.totalorder %s20, 0
      %s236 = scalar_select %p235, %s20, 0
      %s237 = smul.addr %s234, 12
      %s238 = sadd.s32 %s236, %s237
      %s239 = smul.addr %s238, 4
      %s240 = scalar_lea.vmem %s1, %s239
      %p241 = scmp.lt.s32.totalorder %s19, 3
      %s242 = scalar_select %p241, %s19, 3
      %p243 = scmp.lt.s32.totalorder %s20, 0
      %s244 = scalar_select %p243, %s20, 0
      %s245 = smul.addr %s242, 2
      %s246 = sadd.s32 %s244, %s245
      %s247 = smul.addr %s246, 4
      %s248 = scalar_lea.vmem %s4, %s247
      %v250 = vld [vmem:[%s232] sm:$0xf]
      %v251 = vld [vmem:[%s232 + $0x4] sm:$0x3]
      %v252 = vld [vmem:[%s240] sm:$0xf]
      %v253 = vld [vmem:[%s240 + $0x4] sm:$0xf]
      %v254 = vld [vmem:[%s240 + $0x8] sm:$0xf]
      %v255 = vld [vmem:[%s240 + $0xc] sm:$0xf]
      %v256 = vld [vmem:[%s240 + $0x10] sm:$0xf]
      %v257 = vld [vmem:[%s240 + $0x14] sm:$0xf]
      %v258 = vld [vmem:[%s240 + $0x18] sm:$0xf]
      %v259 = vld [vmem:[%s240 + $0x1c] sm:$0xf]
      %v260 = vld [vmem:[%s240 + $0x20] sm:$0xf]
      %v261 = vld [vmem:[%s240 + $0x24] sm:$0xf]
      %v262 = vld [vmem:[%s240 + $0x28] sm:$0xf]
      %v263 = vld [vmem:[%s240 + $0x2c] sm:$0xf]
      %v266 = vunpack.c.l.b16 %v250
      %v267 = vunpack.c.l.b16 %v251
      %v268 = vpack.c.b16 %v267, %v266
      %v281 = vunpack.c.l.b16 %v252
      %v282 = vunpack.c.l.b16 %v253
      %v283 = vunpack.c.l.b16 %v254
      %v284 = vunpack.c.l.b16 %v255
      %v285 = vunpack.c.l.b16 %v256
      %v286 = vunpack.c.l.b16 %v257
      %v287 = vunpack.c.l.b16 %v258
      %v288 = vunpack.c.l.b16 %v259
      %v289 = vunpack.c.l.b16 %v260
      %v290 = vunpack.c.l.b16 %v261
      %v291 = vunpack.c.l.b16 %v262
      %v292 = vunpack.c.l.b16 %v263
      %v293 = vpack.c.b16 %v282, %v281
      %v294 = vpack.c.b16 %v284, %v283
      %v295 = vpack.c.b16 %v286, %v285
      %v296 = vpack.c.b16 %v288, %v287
      %v297 = vpack.c.b16 %v290, %v289
      %v298 = vpack.c.b16 %v292, %v291
      %vm305 = vcmask 785408
      %v307 = vsel %vm305, %v268, 0
      %309 = vmatprep.subr.bf16.mxu0 0
      %310 = vmatpush1.bf16.msra.mxu0 0
      %311 = vmatprep.subr.bf16.mxu0 0
      %312 = vmatpush1.bf16.msra.mxu0 0
      %313 = vmatprep.subr.bf16.mxu0 0
      %314 = vmatpush1.bf16.msra.mxu0 %v298
      %315 = vmatprep.subr.bf16.mxu0 0
      %316 = vmatpush1.bf16.msra.mxu0 %v297
      %317 = vmatprep.subr.bf16.mxu0 0
      %318 = vmatpush1.bf16.msra.mxu0 %v296
      %319 = vmatprep.subr.bf16.mxu0 0
      %320 = vmatpush1.bf16.msra.mxu0 %v295
      %321 = vmatprep.subr.bf16.mxu0 0
      %322 = vmatpush1.bf16.msra.mxu0 %v294
      %323 = vmatprep.subr.bf16.mxu0 0
      %324 = vmatpush1.bf16.msra.mxu0 %v293
      %325 = vmatprep.subr.bf16.mxu0 0
      %326 = vmatpush2.bf16.msra.mxu0 0
      %327 = vmatprep.subr.bf16.mxu0 0
      %328 = vmatpush2.bf16.msra.mxu0 0
      %329 = vmatprep.subr.bf16.mxu0 0
      %330 = vmatpush2.bf16.msra.mxu0 0
      %331 = vmatprep.subr.bf16.mxu0 0
      %332 = vmatpush2.bf16.msra.mxu0 0
      %333 = vmatprep.subr.bf16.mxu0 0
      %334 = vmatpush2.bf16.msra.mxu0 0
      %335 = vmatprep.subr.bf16.mxu0 0
      %336 = vmatpush2.bf16.msra.mxu0 0
      %337 = vmatprep.subr.bf16.mxu0 0
      %338 = vmatpush2.bf16.msra.mxu0 0
      %339 = vmatprep.subr.bf16.mxu0 0
      %340 = vmatpush2.bf16.msra.mxu0 0
      %341 = vmatprep.mubr.bf16.mxu0 0
      %342 = vmatmul.mubr.bf16.gmra.mxu0 %v307
      %v343 = vpop.f32.mrf.mxu0
      %v344 = vadd.f32 0.0, %v343
      %v345 = vpop.f32.mrf.mxu0
      %v346 = vpop.f32.mrf.mxu0
      %v347 = vadd.f32 0.0, %v346
      %v348 = vpop.f32.mrf.mxu0
      %349 = vdwg.mxu0
      %v350 = vld [vmem:[%s2] sm:$0xff]
      %v351 = vld [vmem:[%s2 + $0x8] sm:$0xf]
      %353 = vset.pattern.permute.xlu0 0
      %354 = vperm.xlu0 %353, %v350
      %v355 = vpop.permute.xlu0 %354
      %358 = vset.pattern.permute.xlu0 0
      %359 = vperm.xlu0 %358, %v351
      %v360 = vpop.permute.xlu0 %359
      %v362 = vmul.f32 %v344, %v355
      %v363 = vmul.f32 %v347, %v360
      %v364 = vld [vmem:[%s3] sm:$0xff]
      %v365 = vld [vmem:[%s3 + $0x8] sm:$0xf]
      %367 = vset.pattern.permute.xlu0 0
      %368 = vperm.xlu0 %367, %v364
      %v369 = vpop.permute.xlu0 %368
      %372 = vset.pattern.permute.xlu0 0
      %373 = vperm.xlu0 %372, %v365
      %v374 = vpop.permute.xlu0 %373
      %v376 = vadd.f32 %v362, %v369
      %v377 = vadd.f32 %v363, %v374
      %v378 = vmax.f32 %v376, 0.0
      %v379 = vmax.f32 %v377, 0.0
      %v380 = vpack.c.bf16 %v379, %v378
      %v382 = vunpack.c.l.b16 %v380
      %v383 = vunpack.c.h.b16 %v380
      %v384 = vpack.c.b16 %v382, %v382
      %v385 = vpack.c.b16 %v383, %v383
      %388 = vst [vmem:[%s248] sm:$0xf] %v384
      %389 = vst [vmem:[%s248 + $0x4] sm:$0x3] %v385
      %p390 = scmp.lt.s32.totalorder %s19, 3
      %s391 = scalar_select %p390, %s19, 3
      %p392 = scmp.lt.s32.totalorder %s20, 0
      %s393 = scalar_select %p392, %s20, 0
      %s394 = smul.addr %s391, 2
      %s395 = sadd.s32 %s393, %s394
      %s396 = smul.addr %s395, 4
      %s397 = scalar_lea.vmem %s4, %s396
      // Predicated region
      $region37: #{generator64_forward.7} parent=35 // pred_check
        %p398 = pneg %p143
      $region38: #{generator64_forward.7} parent=35 // pred_check_branch
        %400 = sbr.rel (%p398) target = $region40
      $region39: #{generator64_forward.7} parent=35 // pred_region
        _
      $region40: #{generator64_forward.7} parent=35 // pred_fallthru
        _
    $region36: #{generator64_forward.7} parent=5 // pred_fallthru
      _
    %p401 = scmp.le.s32.totalorder 2, %s10
    // Predicated region
    $region41: #{generator64_forward.7} parent=5 // pred_check
      %p402 = pneg %p401
    $region42: #{generator64_forward.7} parent=5 // pred_check_branch
      %404 = sbr.rel (%p402) target = $region44
    $region43: #{generator64_forward.7} parent=5 // pred_region
      %s405 = ssub.s32 %s10, 2
      // Predicated region
      $region45: #{generator64_forward.7} parent=43 // pred_check
        %p406 = pneg %p149
      $region46: #{generator64_forward.7} parent=43 // pred_check_branch
        %408 = sbr.rel (%p406) target = $region48
      $region47: #{generator64_forward.7} parent=43 // pred_region
        %p409 = scmp.lt.s32.totalorder %s21, 3
        %s410 = scalar_select %p409, %s21, 3
        %p411 = scmp.lt.s32.totalorder %s22, 0
        %s412 = scalar_select %p411, %s22, 0
        %s413 = smul.addr %s410, 2
        %s414 = sadd.s32 %s412, %s413
        %s415 = smul.addr %s414, 4
        %s416 = scalar_lea.vmem %s4, %s415
      $region48: #{generator64_forward.7} parent=43 // pred_fallthru
        _
    $region44: #{generator64_forward.7} parent=5 // pred_fallthru
      _
  $region6: #{generator64_forward.7} parent=0 // loop_footer
    %s14 = sadd.s32 1, %s10
  $region7: #{generator64_forward.7} parent=0 // loop_footer_branch
    %9 = sbr.rel target = $region3
  $region8: #{generator64_forward.7} parent=0 // loop_exit
    _

// kernel: generator64_forward.8
$region0: #{generator64_forward.8}
  #allocation0 [shape = 'u32[]', space=smem, size = 0x4, offset = 0x4, fixed_abs, tag = 'smem constant byte address 0x4 - core index']
  #allocation1 [shape = 'u32[144,128]{1,0:T(1,128)}', space=vmem, size = 0x12000, scoped, tag = 'internal scratch']
  %s0 = inlined_call_operand.vmem [shape: bf16[4,6,48], index: 0, kind: input, shape index: {}]
  %s1 = inlined_call_operand.vmem [shape: bf16[4,48,512], index: 1, kind: input, shape index: {}]
  %s2 = inlined_call_operand.vmem [shape: f32[6,1], index: 2, kind: input, shape index: {}]
  %s3 = inlined_call_operand.vmem [shape: f32[6,1], index: 3, kind: input, shape index: {}]
  %s4 = inlined_call_operand.vmem [shape: bf16[4,6,512], index: 4, kind: output, shape index: {}]
  %s5 = sld [smem:[#allocation0]]
  $region49: #{generator64_forward.8} parent=0
    _
  %s7 = ssub.s32 1, %s5
  %s8 = scalar_select 0, %s7, %s5
  loop: start=0, step=1, limit=6
  $region2: #{generator64_forward.8} parent=0 // loop_pre_header
    _
  $region3: #{generator64_forward.8} parent=0 // loop_header
    %s10 = sphi 0, %s14
    %p11 = scmp.ge.s32.totalorder %s10, 6
    %s17 = sphi 0, %s29
    %s18 = sphi 0, %s25
    %s19 = sphi 0, %s17
    %s20 = sphi 0, %s18
    %s21 = sphi 0, %s19
    %s22 = sphi 0, %s20
    %s32 = sphi 0, %s34
    %s35 = sphi 0, %s32
    %s36 = sphi 0, %s35
    %s52 = sphi 0, %s36
    %s60 = sphi 0, %s62
    %s63 = sphi 0, %s60
    %s64 = sphi 0, %s63
    %s80 = sphi 0, %s64
    %s84 = sphi 0, %s84
    %s86 = sphi 0, %s84
    %s87 = sphi 0, %s86
    %s101 = sphi 0, %s87
    %s105 = sphi 0, %s105
    %s107 = sphi 0, %s105
    %s108 = sphi 0, %s107
    %s122 = sphi 0, %s108
    %s130 = sphi 0, %s132
    %s133 = sphi 0, %s130
    %s134 = sphi 0, %s133
    %s150 = sphi 0, %s134
  $region4: #{generator64_forward.8} parent=0 // loop_header_branch
    %13 = sbr.rel (%p11) target = $region8
  $region5: #{generator64_forward.8} parent=0 // loop_body
    %s15 = ssub.s32 %s10, 1
    %s16 = ssub.s32 %s10, 2
    %s23 = sadd.s32 1, %s18
    %p24 = scmp.ge.s32.totalorder %s23, 1
    %s25 = scalar_select %p24, 0, %s23
    %s26 = sadd.s32 1, %s17
    %s27 = scalar_select %p24, %s26, %s17
    %p28 = scmp.ge.s32.totalorder %s27, 4
    %s29 = scalar_select %p28, 0, %s27
    %s30 = ssub.s32 %s17, %s29
    %p31 = scmp.eq.s32.totalorder %s30, 0
    %s33 = sadd.s32 %s32, 1
    %s34 = scalar_select %p31, %s32, %s33
    %p37 = pneg %p31
    %p38 = scmp.eq.s32.totalorder %s10, 3
    %p39 = por %p37, %p38
    %p40 = scmp.ne.s32.totalorder %s32, %s35
    %p41 = scmp.eq.s32.totalorder %s10, 0
    %p42 = por %p40, %p41
    %p43 = scmp.ne.s32.totalorder %s32, %s35
    %p44 = scmp.eq.s32.totalorder %s15, 3
    %p45 = por %p43, %p44
    %p46 = scmp.ne.s32.totalorder %s35, %s36
    %p47 = scmp.eq.s32.totalorder %s15, 0
    %p48 = por %p46, %p47
    %p49 = scmp.ne.s32.totalorder %s35, %s36
    %p50 = scmp.eq.s32.totalorder %s16, 3
    %p51 = por %p49, %p50
    %p53 = scmp.ne.s32.totalorder %s36, %s52
    %p54 = scmp.eq.s32.totalorder %s16, 0
    %p55 = por %p53, %p54
    %s56 = ssub.s32 %s17, %s29
    %s57 = ssub.s32 %s18, %s25
    %s58 = sor.u32 %s56, %s57
    %p59 = scmp.eq.s32.totalorder %s58, 0
    %s61 = sadd.s32 %s60, 1
    %s62 = scalar_select %p59, %s60, %s61
    %p65 = pneg %p59
    %p66 = scmp.eq.s32.totalorder %s10, 3
    %p67 = por %p65, %p66
    %p68 = scmp.ne.s32.totalorder %s60, %s63
    %p69 = scmp.eq.s32.totalorder %s10, 0
    %p70 = por %p68, %p69
    %p71 = scmp.ne.s32.totalorder %s60, %s63
    %p72 = scmp.eq.s32.totalorder %s15, 3
    %p73 = por %p71, %p72
    %p74 = scmp.ne.s32.totalorder %s63, %s64
    %p75 = scmp.eq.s32.totalorder %s15, 0
    %p76 = por %p74, %p75
    %p77 = scmp.ne.s32.totalorder %s63, %s64
    %p78 = scmp.eq.s32.totalorder %s16, 3
    %p79 = por %p77, %p78
    %p81 = scmp.ne.s32.totalorder %s64, %s80
    %p82 = scmp.eq.s32.totalorder %s16, 0
    %p83 = por %p81, %p82
    %s85 = sadd.s32 %s84, 1
    %p88 = scmp.eq.s32.totalorder %s10, 3
    %p89 = scmp.ne.s32.totalorder %s84, %s86
    %p90 = scmp.eq.s32.totalorder %s10, 0
    %p91 = por %p89, %p90
    %p92 = scmp.ne.s32.totalorder %s84, %s86
    %p93 = scmp.eq.s32.totalorder %s15, 3
    %p94 = por %p92, %p93
    %p95 = scmp.ne.s32.totalorder %s86, %s87
    %p96 = scmp.eq.s32.totalorder %s15, 0
    %p97 = por %p95, %p96
    %p98 = scmp.ne.s32.totalorder %s86, %s87
    %p99 = scmp.eq.s32.totalorder %s16, 3
    %p100 = por %p98, %p99
    %p102 = scmp.ne.s32.totalorder %s87, %s101
    %p103 = scmp.eq.s32.totalorder %s16, 0
    %p104 = por %p102, %p103
    %s106 = sadd.s32 %s105, 1
    %p109 = scmp.eq.s32.totalorder %s10, 3
    %p110 = scmp.ne.s32.totalorder %s105, %s107
    %p111 = scmp.eq.s32.totalorder %s10, 0
    %p112 = por %p110, %p111
    %p113 = scmp.ne.s32.totalorder %s105, %s107
    %p114 = scmp.eq.s32.totalorder %s15, 3
    %p115 = por %p113, %p114
    %p116 = scmp.ne.s32.totalorder %s107, %s108
    %p117 = scmp.eq.s32.totalorder %s15, 0
    %p118 = por %p116, %p117
    %p119 = scmp.ne.s32.totalorder %s107, %s108
    %p120 = scmp.eq.s32.totalorder %s16, 3
    %p121 = por %p119, %p120
    %p123 = scmp.ne.s32.totalorder %s108, %s122
    %p124 = scmp.eq.s32.totalorder %s16, 0
    %p125 = por %p123, %p124
    %s126 = ssub.s32 %s17, %s29
    %s127 = ssub.s32 %s18, %s25
    %s128 = sor.u32 %s126, %s127
    %p129 = scmp.eq.s32.totalorder %s128, 0
    %s131 = sadd.s32 %s130, 1
    %s132 = scalar_select %p129, %s130, %s131
    %p135 = pneg %p129
    %p136 = scmp.eq.s32.totalorder %s10, 3
    %p137 = por %p135, %p136
    %p138 = scmp.ne.s32.totalorder %s130, %s133
    %p139 = scmp.eq.s32.totalorder %s10, 0
    %p140 = por %p138, %p139
    %p141 = scmp.ne.s32.totalorder %s130, %s133
    %p142 = scmp.eq.s32.totalorder %s15, 3
    %p143 = por %p141, %p142
    %p144 = scmp.ne.s32.totalorder %s133, %s134
    %p145 = scmp.eq.s32.totalorder %s15, 0
    %p146 = por %p144, %p145
    %p147 = scmp.ne.s32.totalorder %s133, %s134
    %p148 = scmp.eq.s32.totalorder %s16, 3
    %p149 = por %p147, %p148
    %p151 = scmp.ne.s32.totalorder %s134, %s150
    %p152 = scmp.eq.s32.totalorder %s16, 0
    %p153 = por %p151, %p152
    %p154 = scmp.le.s32.totalorder 1, %s10
    %p155 = scmp.lt.s32.totalorder %s10, 5
    %p156 = pnand %p154, %p155
    %p157 = pneg %p156
    // Predicated region
    $region9: #{generator64_forward.8} parent=5 // pred_check
      _
    $region10: #{generator64_forward.8} parent=5 // pred_check_branch
      %159 = sbr.rel (%p156) target = $region12
    $region11: #{generator64_forward.8} parent=5 // pred_region
      %s160 = ssub.s32 %s10, 1
      // Predicated region
      $region13: #{generator64_forward.8} parent=11 // pred_check
        %p161 = pneg %p97
      $region14: #{generator64_forward.8} parent=11 // pred_check_branch
        %163 = sbr.rel (%p161) target = $region16
      $region15: #{generator64_forward.8} parent=11 // pred_region
        _
      $region16: #{generator64_forward.8} parent=11 // pred_fallthru
        _
      // Predicated region
      $region17: #{generator64_forward.8} parent=11 // pred_check
        %p164 = pneg %p118
      $region18: #{generator64_forward.8} parent=11 // pred_check_branch
        %166 = sbr.rel (%p164) target = $region20
      $region19: #{generator64_forward.8} parent=11 // pred_region
        _
      $region20: #{generator64_forward.8} parent=11 // pred_fallthru
        _
    $region12: #{generator64_forward.8} parent=5 // pred_fallthru
      _
    %p167 = scmp.lt.s32.totalorder %s10, 4
    // Predicated region
    $region21: #{generator64_forward.8} parent=5 // pred_check
      %p168 = pneg %p167
    $region22: #{generator64_forward.8} parent=5 // pred_check_branch
      %170 = sbr.rel (%p168) target = $region24
    $region23: #{generator64_forward.8} parent=5 // pred_region
      // Predicated region
      $region25: #{generator64_forward.8} parent=23 // pred_check
        %p171 = pneg %p42
      $region26: #{generator64_forward.8} parent=23 // pred_check_branch
        %173 = sbr.rel (%p171) target = $region28
      $region27: #{generator64_forward.8} parent=23 // pred_region
        %p174 = scmp.lt.s32.totalorder %s17, 3
        %s175 = scalar_select %p174, %s17, 3
        %s176 = smul.addr %s175, 4
        %s177 = scalar_lea.vmem %s0, %s176
      $region28: #{generator64_forward.8} parent=23 // pred_fallthru
        _
      // Predicated region
      $region29: #{generator64_forward.8} parent=23 // pred_check
        %p178 = pneg %p70
      $region30: #{generator64_forward.8} parent=23 // pred_check_branch
        %180 = sbr.rel (%p178) target = $region32
      $region31: #{generator64_forward.8} parent=23 // pred_region
        %s181 = smul.u32 4, %s18
        %p182 = scmp.lt.s32.totalorder %s17, 3
        %s183 = scalar_select %p182, %s17, 3
        %p184 = scmp.lt.s32.totalorder %s181, 3
        %s185 = scalar_select %p184, %s181, 3
        %s186 = smul.addr %s183, 24
        %s187 = sadd.s32 %s185, %s186
        %s188 = smul.addr %s187, 4
        %s189 = scalar_lea.vmem %s1, %s188
        %s190 = smul.u32 4, %s18
      $region32: #{generator64_forward.8} parent=23 // pred_fallthru
        _
    $region24: #{generator64_forward.8} parent=5 // pred_fallthru
      _
    %p191 = scmp.le.s32.totalorder 1, %s10
    %p192 = scmp.lt.s32.totalorder %s10, 5
    %p193 = pnand %p191, %p192
    %p194 = pneg %p193
    // Predicated region
    $region33: #{generator64_forward.8} parent=5 // pred_check
      _
    $region34: #{generator64_forward.8} parent=5 // pred_check_branch
      %196 = sbr.rel (%p193) target = $region36
    $region35: #{generator64_forward.8} parent=5 // pred_region
      %s197 = ssub.s32 %s10, 1
      %p198 = scmp.lt.s32.totalorder %s19, 3
      %s199 = scalar_select %p198, %s19, 3
      %s200 = smul.addr %s199, 4
      %s201 = scalar_lea.vmem %s0, %s200
      %p202 = pneg %p48
      %p203 = pneg %p45
      %s204 = smul.u32 4, %s20
      %p205 = scmp.lt.s32.totalorder %s19, 3
      %s206 = scalar_select %p205, %s19, 3
      %p207 = scmp.lt.s32.totalorder %s204, 3
      %s208 = scalar_select %p207, %s204, 3
      %s209 = smul.addr %s206, 24
      %s210 = sadd.s32 %s208, %s209
      %s211 = smul.addr %s210, 4
      %s212 = scalar_lea.vmem %s1, %s211
      %p213 = pneg %p76
      %p214 = pneg %p73
      %p215 = pneg %p97
      %p216 = pneg %p94
      %p217 = pneg %p118
      %p218 = pneg %p115
      %p219 = pneg %p146
      %p220 = pneg %p143
      %s221 = smul.u32 4, %s20
      %p222 = scmp.lt.s32.totalorder %s19, 3
      %s223 = scalar_select %p222, %s19, 3
      %p224 = scmp.lt.s32.totalorder %s221, 3
      %s225 = scalar_select %p224, %s221, 3
      %s226 = smul.addr %s223, 4
      %s227 = sadd.s32 %s225, %s226
      %s228 = smul.addr %s227, 4
      %s229 = scalar_lea.vmem %s4, %s228
      %p230 = scmp.lt.s32.totalorder %s19, 3
      %s231 = scalar_select %p230, %s19, 3
      %s232 = smul.addr %s231, 4
      %s233 = scalar_lea.vmem %s0, %s232
      %s234 = smul.u32 4, %s20
      %p235 = scmp.lt.s32.totalorder %s19, 3
      %s236 = scalar_select %p235, %s19, 3
      %p237 = scmp.lt.s32.totalorder %s234, 3
      %s238 = scalar_select %p237, %s234, 3
      %s239 = smul.addr %s236, 24
      %s240 = sadd.s32 %s238, %s239
      %s241 = smul.addr %s240, 4
      %s242 = scalar_lea.vmem %s1, %s241
      %s243 = smul.u32 4, %s20
      %s244 = smul.u32 4, %s20
      %p245 = scmp.lt.s32.totalorder %s19, 3
      %s246 = scalar_select %p245, %s19, 3
      %p247 = scmp.lt.s32.totalorder %s244, 3
      %s248 = scalar_select %p247, %s244, 3
      %s249 = smul.addr %s246, 4
      %s250 = sadd.s32 %s248, %s249
      %s251 = smul.addr %s250, 4
      %s252 = scalar_lea.vmem %s4, %s251
      %s253 = smul.u32 4, %s20
      %v255 = vld [vmem:[%s233] sm:$0x7]
      %v256 = vld [vmem:[%s242] sm:$0xff]
      %v257 = vld [vmem:[%s242 + $0x8] sm:$0xff]
      %v258 = vld [vmem:[%s242 + $0x10] sm:$0xff]
      %v259 = vld [vmem:[%s242 + $0x18] sm:$0xff]
      %v260 = vld [vmem:[%s242 + $0x20] sm:$0xff]
      %v261 = vld [vmem:[%s242 + $0x28] sm:$0xff]
      %v262 = vld [vmem:[%s242 + $0x30] sm:$0xff]
      %v263 = vld [vmem:[%s242 + $0x38] sm:$0xff]
      %v264 = vld [vmem:[%s242 + $0x40] sm:$0xff]
      %v265 = vld [vmem:[%s242 + $0x48] sm:$0xff]
      %v266 = vld [vmem:[%s242 + $0x50] sm:$0xff]
      %v267 = vld [vmem:[%s242 + $0x58] sm:$0xff]
      %v280 = vunpack.c.l.b16 %v256
      %v281 = vunpack.c.h.b16 %v256
      %v282 = vunpack.c.l.b16 %v257
      %v283 = vunpack.c.h.b16 %v257
      %v284 = vunpack.c.l.b16 %v258
      %v285 = vunpack.c.h.b16 %v258
      %v286 = vunpack.c.l.b16 %v259
      %v287 = vunpack.c.h.b16 %v259
      %v288 = vunpack.c.l.b16 %v260
      %v289 = vunpack.c.h.b16 %v260
      %v290 = vunpack.c.l.b16 %v261
      %v291 = vunpack.c.h.b16 %v261
      %v292 = vunpack.c.l.b16 %v262
      %v293 = vunpack.c.h.b16 %v262
      %v294 = vunpack.c.l.b16 %v263
      %v295 = vunpack.c.h.b16 %v263
      %v296 = vunpack.c.l.b16 %v264
      %v297 = vunpack.c.h.b16 %v264
      %v298 = vunpack.c.l.b16 %v265
      %v299 = vunpack.c.h.b16 %v265
      %v300 = vunpack.c.l.b16 %v266
      %v301 = vunpack.c.h.b16 %v266
      %v302 = vunpack.c.l.b16 %v267
      %v303 = vunpack.c.h.b16 %v267
      %v304 = vpack.c.b16 %v284, %v280
      %v305 = vpack.c.b16 %v285, %v281
      %v306 = vpack.c.b16 %v286, %v282
      %v307 = vpack.c.b16 %v287, %v283
      %v308 = vpack.c.b16 %v292, %v288
      %v309 = vpack.c.b16 %v293, %v289
      %v310 = vpack.c.b16 %v294, %v290
      %v311 = vpack.c.b16 %v295, %v291
      %v312 = vpack.c.b16 %v300, %v296
      %v313 = vpack.c.b16 %v301, %v297
      %v314 = vpack.c.b16 %v302, %v298
      %v315 = vpack.c.b16 %v303, %v299
      %vm328 = vcmask 392192
      %v330 = vsel %vm328, %v255, 0
      %332 = vmatprep.subr.bf16.mxu0 0
      %333 = vmatpush1.bf16.msra.mxu0 0
      %334 = vmatprep.subr.bf16.mxu0 0
      %335 = vmatpush1.bf16.msra.mxu0 0
      %336 = vmatprep.subr.bf16.mxu0 0
      %337 = vmatpush1.bf16.msra.mxu0 0
      %338 = vmatprep.subr.bf16.mxu0 0
      %339 = vmatpush1.bf16.msra.mxu0 0
      %340 = vmatprep.subr.bf16.mxu0 0
      %341 = vmatpush1.bf16.msra.mxu0 0
      %342 = vmatprep.subr.bf16.mxu0 %v313
      %343 = vmatpush1.bf16.msra.mxu0 %v312
      %344 = vmatprep.subr.bf16.mxu0 %v309
      %345 = vmatpush1.bf16.msra.mxu0 %v308
      %346 = vmatprep.subr.bf16.mxu0 %v305
      %347 = vmatpush1.bf16.msra.mxu0 %v304
      %348 = vmatprep.subr.bf16.mxu0 0
      %349 = vmatpush2.bf16.msra.mxu0 0
      %350 = vmatprep.subr.bf16.mxu0 0
      %351 = vmatpush2.bf16.msra.mxu0 0
      %352 = vmatprep.subr.bf16.mxu0 0
      %353 = vmatpush2.bf16.msra.mxu0 0
      %354 = vmatprep.subr.bf16.mxu0 0
      %355 = vmatpush2.bf16.msra.mxu0 0
      %356 = vmatprep.subr.bf16.mxu0 0
      %357 = vmatpush2.bf16.msra.mxu0 0
      %358 = vmatprep.subr.bf16.mxu0 0
      %359 = vmatpush2.bf16.msra.mxu0 0
      %360 = vmatprep.subr.bf16.mxu0 0
      %361 = vmatpush2.bf16.msra.mxu0 0
      %362 = vmatprep.subr.bf16.mxu0 0
      %363 = vmatpush2.bf16.msra.mxu0 0
      %364 = vmatprep.mubr.bf16.mxu0 0
      %365 = vmatmul.mubr.bf16.gmra.mxu0 %v330
      %v366 = vpop.f32.mrf.mxu0
      %v367 = vadd.f32 0.0, %v366
      %v368 = vpop.f32.mrf.mxu0
      %v369 = vadd.f32 0.0, %v368
      %v370 = vpop.f32.mrf.mxu0
      %v371 = vpop.f32.mrf.mxu0
      %372 = vdwg.mxu0
      %373 = vmatprep.subr.bf16.mxu0 0
      %374 = vmatpush1.bf16.msra.mxu0 0
      %375 = vmatprep.subr.bf16.mxu0 0
      %376 = vmatpush1.bf16.msra.mxu0 0
      %377 = vmatprep.subr.bf16.mxu0 0
      %378 = vmatpush1.bf16.msra.mxu0 0
      %379 = vmatprep.subr.bf16.mxu0 0
      %380 = vmatpush1.bf16.msra.mxu0 0
      %381 = vmatprep.subr.bf16.mxu0 0
      %382 = vmatpush1.bf16.msra.mxu0 0
      %383 = vmatprep.subr.bf16.mxu0 %v315
      %384 = vmatpush1.bf16.msra.mxu0 %v314
      %385 = vmatprep.subr.bf16.mxu0 %v311
      %386 = vmatpush1.bf16.msra.mxu0 %v310
      %387 = vmatprep.subr.bf16.mxu0 %v307
      %388 = vmatpush1.bf16.msra.mxu0 %v306
      %389 = vmatprep.subr.bf16.mxu0 0
      %390 = vmatpush2.bf16.msra.mxu0 0
      %391 = vmatprep.subr.bf16.mxu0 0
      %392 = vmatpush2.bf16.msra.mxu0 0
      %393 = vmatprep.subr.bf16.mxu0 0
      %394 = vmatpush2.bf16.msra.mxu0 0
      %395 = vmatprep.subr.bf16.mxu0 0
      %396 = vmatpush2.bf16.msra.mxu0 0
      %397 = vmatprep.subr.bf16.mxu0 0
      %398 = vmatpush2.bf16.msra.mxu0 0
      %399 = vmatprep.subr.bf16.mxu0 0
      %400 = vmatpush2.bf16.msra.mxu0 0
      %401 = vmatprep.subr.bf16.mxu0 0
      %402 = vmatpush2.bf16.msra.mxu0 0
      %403 = vmatprep.subr.bf16.mxu0 0
      %404 = vmatpush2.bf16.msra.mxu0 0
      %405 = vmatprep.mubr.bf16.mxu0 0
      %406 = vmatmul.mubr.bf16.gmra.mxu0 %v330
      %v407 = vpop.f32.mrf.mxu0
      %v408 = vadd.f32 0.0, %v407
      %v409 = vpop.f32.mrf.mxu0
      %v410 = vadd.f32 0.0, %v409
      %v411 = vpop.f32.mrf.mxu0
      %v412 = vpop.f32.mrf.mxu0
      %413 = vdwg.mxu0
      %v414 = vld [vmem:[%s2] sm:$0x3f]
      %416 = vset.pattern.permute.xlu0 0
      %417 = vperm.xlu0 %416, %v414
      %v418 = vpop.permute.xlu0 %417
      %v420 = vmul.f32 %v367, %v418
      %v421 = vmul.f32 %v369, %v418
      %v422 = vmul.f32 %v408, %v418
      %v423 = vmul.f32 %v410, %v418
      %v424 = vld [vmem:[%s3] sm:$0x3f]
      %426 = vset.pattern.permute.xlu0 0
      %427 = vperm.xlu0 %426, %v424
      %v428 = vpop.permute.xlu0 %427
      %v430 = vadd.f32 %v420, %v428
      %v431 = vadd.f32 %v421, %v428
      %v432 = vadd.f32 %v422, %v428
      %v433 = vadd.f32 %v423, %v428
      %v434 = vmax.f32 %v430, 0.0
      %v435 = vmax.f32 %v431, 0.0
      %v436 = vmax.f32 %v432, 0.0
      %v437 = vmax.f32 %v433, 0.0
      %v438 = vpack.c.bf16 %v434, %v434
      %v439 = vpack.c.bf16 %v435, %v435
      %v440 = vpack.c.bf16 %v436, %v436
      %v441 = vpack.c.bf16 %v437, %v437
      %v446 = vunpack.c.l.b16 %v438
      %v447 = vunpack.c.l.b16 %v439
      %v448 = vunpack.c.l.b16 %v440
      %v449 = vunpack.c.l.b16 %v441
      %v450 = vpack.c.b16 %v447, %v446
      %v451 = vpack.c.b16 %v449, %v448
      %454 = vst [vmem:[%s252] sm:$0x77] %v450
      %455 = vst [vmem:[%s252 + $0x8] sm:$0x77] %v451
      %s456 = smul.u32 4, %s20
      %p457 = scmp.lt.s32.totalorder %s19, 3
      %s458 = scalar_select %p457, %s19, 3
      %p459 = scmp.lt.s32.totalorder %s456, 3
      %s460 = scalar_select %p459, %s456, 3
      %s461 = smul.addr %s458, 4
      %s462 = sadd.s32 %s460, %s461
      %s463 = smul.addr %s462, 4
      %s464 = scalar_lea.vmem %s4, %s463
      // Predicated region
      $region37: #{generator64_forward.8} parent=35 // pred_check
        %p465 = pneg %p143
      $region38: #{generator64_forward.8} parent=35 // pred_check_branch
        %467 = sbr.rel (%p465) target = $region40
      $region39: #{generator64_forward.8} parent=35 // pred_region
        %s468 = smul.u32 4, %s20
      $region40: #{generator64_forward.8} parent=35 // pred_fallthru
        _
    $region36: #{generator64_forward.8} parent=5 // pred_fallthru
      _
    %p469 = scmp.le.s32.totalorder 2, %s10
    // Predicated region
    $region41: #{generator64_forward.8} parent=5 // pred_check
      %p470 = pneg %p469
    $region42: #{generator64_forward.8} parent=5 // pred_check_branch
      %472 = sbr.rel (%p470) target = $region44
    $region43: #{generator64_forward.8} parent=5 // pred_region
      %s473 = ssub.s32 %s10, 2
      // Predicated region
      $region45: #{generator64_forward.8} parent=43 // pred_check
        %p474 = pneg %p149
      $region46: #{generator64_forward.8} parent=43 // pred_check_branch
        %476 = sbr.rel (%p474) target = $region48
      $region47: #{generator64_forward.8} parent=43 // pred_region
        %s477 = smul.u32 4, %s22
        %p478 = scmp.lt.s32.totalorder %s21, 3
        %s479 = scalar_select %p478, %s21, 3
        %p480 = scmp.lt.s32.totalorder %s477, 3
        %s481 = scalar_select %p480, %s477, 3
        %s482 = smul.addr %s479, 4
        %s483 = sadd.s32 %s481, %s482
        %s484 = smul.addr %s483, 4
        %s485 = scalar_lea.vmem %s4, %s484
      $region48: #{generator64_forward.8} parent=43 // pred_fallthru
        _
    $region44: #{generator64_forward.8} parent=5 // pred_fallthru
      _
  $region6: #{generator64_forward.8} parent=0 // loop_footer
    %s14 = sadd.s32 1, %s10
  $region7: #{generator64_forward.8} parent=0 // loop_footer_branch
    %9 = sbr.rel target = $region3
  $region8: #{generator64_forward.8} parent=0 // loop_exit
    _

// kernel: generator64_forward.9
$region0: #{generator64_forward.9}
  #allocation0 [shape = 'u32[]', space=smem, size = 0x4, offset = 0x4, fixed_abs, tag = 'smem constant byte address 0x4 - core index']
  #allocation1 [shape = 'u32[144,128]{1,0:T(1,128)}', space=vmem, size = 0x12000, scoped, tag = 'internal scratch']
  %s0 = inlined_call_operand.vmem [shape: bf16[4,3,24], index: 0, kind: input, shape index: {}]
  %s1 = inlined_call_operand.vmem [shape: bf16[4,24,2048], index: 1, kind: input, shape index: {}]
  %s2 = inlined_call_operand.vmem [shape: f32[3,1], index: 2, kind: input, shape index: {}]
  %s3 = inlined_call_operand.vmem [shape: f32[3,1], index: 3, kind: input, shape index: {}]
  %s4 = inlined_call_operand.vmem [shape: f32[4,3,2048], index: 4, kind: output, shape index: {}]
  %s5 = sld [smem:[#allocation0]]
  $region72: #{generator64_forward.9} parent=0
    _
  %s7 = ssub.s32 1, %s5
  %s8 = scalar_select 0, %s7, %s5
  $region1: #{generator64_forward.9} parent=0
    #allocation2 [shape = 'u8[49152]{0}', space=vmem, size = 0xc000, scoped, tag = 'input window, operand 1']
    loop: start=0, step=1, limit=18
    $region2: #{generator64_forward.9} parent=1 // loop_pre_header
      _
    $region3: #{generator64_forward.9} parent=1 // loop_header
      %s10 = sphi 0, %s14
      %p11 = scmp.ge.s32.totalorder %s10, 18
      %s17 = sphi 0, %s29
      %s18 = sphi 0, %s25
      %s19 = sphi 0, %s17
      %s20 = sphi 0, %s18
      %s21 = sphi 0, %s19
      %s22 = sphi 0, %s20
      %s32 = sphi 0, %s34
      %s35 = sphi 0, %s32
      %s36 = sphi 0, %s35
      %s52 = sphi 0, %s36
      %s60 = sphi 0, %s62
      %s63 = sphi 0, %s60
      %s64 = sphi 0, %s63
      %s80 = sphi 0, %s64
      %s84 = sphi 0, %s84
      %s86 = sphi 0, %s84
      %s87 = sphi 0, %s86
      %s101 = sphi 0, %s87
      %s105 = sphi 0, %s105
      %s107 = sphi 0, %s105
      %s108 = sphi 0, %s107
      %s122 = sphi 0, %s108
      %s130 = sphi 0, %s132
      %s133 = sphi 0, %s130
      %s134 = sphi 0, %s133
      %s150 = sphi 0, %s134
    $region4: #{generator64_forward.9} parent=1 // loop_header_branch
      %13 = sbr.rel (%p11) target = $region8
    $region5: #{generator64_forward.9} parent=1 // loop_body
      %s15 = ssub.s32 %s10, 1
      %s16 = ssub.s32 %s10, 2
      %s23 = sadd.s32 1, %s18
      %p24 = scmp.ge.s32.totalorder %s23, 4
      %s25 = scalar_select %p24, 0, %s23
      %s26 = sadd.s32 1, %s17
      %s27 = scalar_select %p24, %s26, %s17
      %p28 = scmp.ge.s32.totalorder %s27, 4
      %s29 = scalar_select %p28, 0, %s27
      %s30 = ssub.s32 %s17, %s29
      %p31 = scmp.eq.s32.totalorder %s30, 0
      %s33 = sadd.s32 %s32, 1
      %s34 = scalar_select %p31, %s32, %s33
      %p37 = pneg %p31
      %p38 = scmp.eq.s32.totalorder %s10, 15
      %p39 = por %p37, %p38
      %p40 = scmp.ne.s32.totalorder %s32, %s35
      %p41 = scmp.eq.s32.totalorder %s10, 0
      %p42 = por %p40, %p41
      %p43 = scmp.ne.s32.totalorder %s32, %s35
      %p44 = scmp.eq.s32.totalorder %s15, 15
      %p45 = por %p43, %p44
      %p46 = scmp.ne.s32.totalorder %s35, %s36
      %p47 = scmp.eq.s32.totalorder %s15, 0
      %p48 = por %p46, %p47
      %p49 = scmp.ne.s32.totalorder %s35, %s36
      %p50 = scmp.eq.s32.totalorder %s16, 15
      %p51 = por %p49, %p50
      %p53 = scmp.ne.s32.totalorder %s36, %s52
      %p54 = scmp.eq.s32.totalorder %s16, 0
      %p55 = por %p53, %p54
      %s56 = ssub.s32 %s17, %s29
      %s57 = ssub.s32 %s18, %s25
      %s58 = sor.u32 %s56, %s57
      %p59 = scmp.eq.s32.totalorder %s58, 0
      %s61 = sadd.s32 %s60, 1
      %s62 = scalar_select %p59, %s60, %s61
      %p65 = pneg %p59
      %p66 = scmp.eq.s32.totalorder %s10, 15
      %p67 = por %p65, %p66
      %p68 = scmp.ne.s32.totalorder %s60, %s63
      %p69 = scmp.eq.s32.totalorder %s10, 0
      %p70 = por %p68, %p69
      %p71 = scmp.ne.s32.totalorder %s60, %s63
      %p72 = scmp.eq.s32.totalorder %s15, 15
      %p73 = por %p71, %p72
      %p74 = scmp.ne.s32.totalorder %s63, %s64
      %p75 = scmp.eq.s32.totalorder %s15, 0
      %p76 = por %p74, %p75
      %p77 = scmp.ne.s32.totalorder %s63, %s64
      %p78 = scmp.eq.s32.totalorder %s16, 15
      %p79 = por %p77, %p78
      %p81 = scmp.ne.s32.totalorder %s64, %s80
      %p82 = scmp.eq.s32.totalorder %s16, 0
      %p83 = por %p81, %p82
      %s85 = sadd.s32 %s84, 1
      %p88 = scmp.eq.s32.totalorder %s10, 15
      %p89 = scmp.ne.s32.totalorder %s84, %s86
      %p90 = scmp.eq.s32.totalorder %s10, 0
      %p91 = por %p89, %p90
      %p92 = scmp.ne.s32.totalorder %s84, %s86
      %p93 = scmp.eq.s32.totalorder %s15, 15
      %p94 = por %p92, %p93
      %p95 = scmp.ne.s32.totalorder %s86, %s87
      %p96 = scmp.eq.s32.totalorder %s15, 0
      %p97 = por %p95, %p96
      %p98 = scmp.ne.s32.totalorder %s86, %s87
      %p99 = scmp.eq.s32.totalorder %s16, 15
      %p100 = por %p98, %p99
      %p102 = scmp.ne.s32.totalorder %s87, %s101
      %p103 = scmp.eq.s32.totalorder %s16, 0
      %p104 = por %p102, %p103
      %s106 = sadd.s32 %s105, 1
      %p109 = scmp.eq.s32.totalorder %s10, 15
      %p110 = scmp.ne.s32.totalorder %s105, %s107
      %p111 = scmp.eq.s32.totalorder %s10, 0
      %p112 = por %p110, %p111
      %p113 = scmp.ne.s32.totalorder %s105, %s107
      %p114 = scmp.eq.s32.totalorder %s15, 15
      %p115 = por %p113, %p114
      %p116 = scmp.ne.s32.totalorder %s107, %s108
      %p117 = scmp.eq.s32.totalorder %s15, 0
      %p118 = por %p116, %p117
      %p119 = scmp.ne.s32.totalorder %s107, %s108
      %p120 = scmp.eq.s32.totalorder %s16, 15
      %p121 = por %p119, %p120
      %p123 = scmp.ne.s32.totalorder %s108, %s122
      %p124 = scmp.eq.s32.totalorder %s16, 0
      %p125 = por %p123, %p124
      %s126 = ssub.s32 %s17, %s29
      %s127 = ssub.s32 %s18, %s25
      %s128 = sor.u32 %s126, %s127
      %p129 = scmp.eq.s32.totalorder %s128, 0
      %s131 = sadd.s32 %s130, 1
      %s132 = scalar_select %p129, %s130, %s131
      %p135 = pneg %p129
      %p136 = scmp.eq.s32.totalorder %s10, 15
      %p137 = por %p135, %p136
      %p138 = scmp.ne.s32.totalorder %s130, %s133
      %p139 = scmp.eq.s32.totalorder %s10, 0
      %p140 = por %p138, %p139
      %p141 = scmp.ne.s32.totalorder %s130, %s133
      %p142 = scmp.eq.s32.totalorder %s15, 15
      %p143 = por %p141, %p142
      %p144 = scmp.ne.s32.totalorder %s133, %s134
      %p145 = scmp.eq.s32.totalorder %s15, 0
      %p146 = por %p144, %p145
      %p147 = scmp.ne.s32.totalorder %s133, %s134
      %p148 = scmp.eq.s32.totalorder %s16, 15
      %p149 = por %p147, %p148
      %p151 = scmp.ne.s32.totalorder %s134, %s150
      %p152 = scmp.eq.s32.totalorder %s16, 0
      %p153 = por %p151, %p152
      %p154 = scmp.le.s32.totalorder 1, %s10
      %p155 = scmp.lt.s32.totalorder %s10, 17
      %p156 = pnand %p154, %p155
      %p157 = pneg %p156
      // Predicated region
      $region9: #{generator64_forward.9} parent=5 // pred_check
        _
      $region10: #{generator64_forward.9} parent=5 // pred_check_branch
        %159 = sbr.rel (%p156) target = $region12
      $region11: #{generator64_forward.9} parent=5 // pred_region
        %s160 = ssub.s32 %s10, 1
        // Predicated region
        $region13: #{generator64_forward.9} parent=11 // pred_check
          %p161 = pneg %p97
        $region14: #{generator64_forward.9} parent=11 // pred_check_branch
          %163 = sbr.rel (%p161) target = $region16
        $region15: #{generator64_forward.9} parent=11 // pred_region
          _
        $region16: #{generator64_forward.9} parent=11 // pred_fallthru
          _
        // Predicated region
        $region17: #{generator64_forward.9} parent=11 // pred_check
          %p164 = pneg %p118
        $region18: #{generator64_forward.9} parent=11 // pred_check_branch
          %166 = sbr.rel (%p164) target = $region20
        $region19: #{generator64_forward.9} parent=11 // pred_region
          _
        $region20: #{generator64_forward.9} parent=11 // pred_fallthru
          _
      $region12: #{generator64_forward.9} parent=5 // pred_fallthru
        _
      %p167 = scmp.lt.s32.totalorder %s10, 16
      // Predicated region
      $region21: #{generator64_forward.9} parent=5 // pred_check
        %p168 = pneg %p167
      $region22: #{generator64_forward.9} parent=5 // pred_check_branch
        %170 = sbr.rel (%p168) target = $region24
      $region23: #{generator64_forward.9} parent=5 // pred_region
        // Predicated region
        $region25: #{generator64_forward.9} parent=23 // pred_check
          %p171 = pneg %p42
        $region26: #{generator64_forward.9} parent=23 // pred_check_branch
          %173 = sbr.rel (%p171) target = $region28
        $region27: #{generator64_forward.9} parent=23 // pred_region
          %p174 = scmp.lt.s32.totalorder %s17, 3
          %s175 = scalar_select %p174, %s17, 3
          %s176 = smul.addr %s175, 2
          %s177 = scalar_lea.vmem %s0, %s176
        $region28: #{generator64_forward.9} parent=23 // pred_fallthru
          _
        // Predicated region
        $region29: #{generator64_forward.9} parent=23 // pred_check
          %p178 = pneg %p70
        $region30: #{generator64_forward.9} parent=23 // pred_check_branch
          %180 = sbr.rel (%p178) target = $region32
        $region31: #{generator64_forward.9} parent=23 // pred_region
          %s181 = sand.u32 %s60, 1
          %s182 = sand.u32 %s60, 1
          %s183 = smul.addr %s182, 48
          %s184 = scalar_lea.vmem [#allocation2], %s183
          %s185 = smul.u32 4, %s18
          %s186 = smul.addr %s17, 48
          %s187 = sadd.s32 %s185, %s186
          %s188 = smul.addr %s187, 4
          %s189 = scalar_lea.vmem %s1, %s188
          // Predicated region
          $region33: #{generator64_forward.9} parent=31 // pred_check
            _
          $region34: #{generator64_forward.9} parent=31 // pred_check_branch
            %191 = sbr.rel (0) target = $region36
          $region35: #{generator64_forward.9} parent=31 // pred_region
            // Predicated region
            $region37: #{generator64_forward.9} parent=35 // pred_check
              _
            $region38: #{generator64_forward.9} parent=35 // pred_check_branch
              %193 = sbr.rel (0) target = $region40
            $region39: #{generator64_forward.9} parent=35 // pred_region
              loop: start=0, step=1, limit=1
              $region41: #{generator64_forward.9} parent=39 // loop_pre_header
                _
              $region42: #{generator64_forward.9} parent=39 // loop_header
                %s195 = sphi 0, %s199
                %p196 = scmp.ge.s32.totalorder %s195, 1
                %s200 = sphi %s189, %s189
                %s201 = sphi %s184, %s184
              $region43: #{generator64_forward.9} parent=39 // loop_header_branch
                %198 = sbr.rel (%p196) target = $region47
              $region44: #{generator64_forward.9} parent=39 // loop_body
                %v202 = vld [vmem:[%s200] sm:$0xff]
                %203 = vst [vmem:[%s201] sm:$0xff] %v202
                %v204 = vld [vmem:[%s200 + $0x8] sm:$0xff]
                %205 = vst [vmem:[%s201 + $0x8] sm:$0xff] %v204
                %v206 = vld [vmem:[%s200 + $0x40] sm:$0xff]
                %207 = vst [vmem:[%s201 + $0x10] sm:$0xff] %v206
                %v208 = vld [vmem:[%s200 + $0x48] sm:$0xff]
                %209 = vst [vmem:[%s201 + $0x18] sm:$0xff] %v208
                %v210 = vld [vmem:[%s200 + $0x80] sm:$0xff]
                %211 = vst [vmem:[%s201 + $0x20] sm:$0xff] %v210
                %v212 = vld [vmem:[%s200 + $0x88] sm:$0xff]
                %213 = vst [vmem:[%s201 + $0x28] sm:$0xff] %v212
              $region45: #{generator64_forward.9} parent=39 // loop_footer
                %s199 = sadd.s32 1, %s195
              $region46: #{generator64_forward.9} parent=39 // loop_footer_branch
                %194 = sbr.rel target = $region42
              $region47: #{generator64_forward.9} parent=39 // loop_exit
                _
            $region40: #{generator64_forward.9} parent=35 // pred_fallthru
              _
            // Predicated region
            $region48: #{generator64_forward.9} parent=35 // pred_check
              _
            $region49: #{generator64_forward.9} parent=35 // pred_check_branch
              %215 = sbr.rel target = $region51
            $region50: #{generator64_forward.9} parent=35 // pred_region
              _
            $region51: #{generator64_forward.9} parent=35 // pred_fallthru
              _
          $region36: #{generator64_forward.9} parent=31 // pred_fallthru
            _
          %216 = vnop
        $region32: #{generator64_forward.9} parent=23 // pred_fallthru
          _
      $region24: #{generator64_forward.9} parent=5 // pred_fallthru
        _
      %p217 = scmp.le.s32.totalorder 1, %s10
      %p218 = scmp.lt.s32.totalorder %s10, 17
      %p219 = pnand %p217, %p218
      %p220 = pneg %p219
      // Predicated region
      $region52: #{generator64_forward.9} parent=5 // pred_check
        _
      $region53: #{generator64_forward.9} parent=5 // pred_check_branch
        %222 = sbr.rel (%p219) target = $region55
      $region54: #{generator64_forward.9} parent=5 // pred_region
        %s223 = ssub.s32 %s10, 1
        %s224 = sand.u32 %s63, 1
        %s225 = sand.u32 %s63, 1
        %s226 = smul.addr %s225, 48
        %s227 = scalar_lea.vmem [#allocation2], %s226
        // Predicated region
        $region56: #{generator64_forward.9} parent=54 // pred_check
          %p228 = pneg %p76
        $region57: #{generator64_forward.9} parent=54 // pred_check_branch
          %230 = sbr.rel (%p228) target = $region59
        $region58: #{generator64_forward.9} parent=54 // pred_region
          _
        $region59: #{generator64_forward.9} parent=54 // pred_fallthru
          _
        %p231 = scmp.lt.s32.totalorder %s19, 3
        %s232 = scalar_select %p231, %s19, 3
        %s233 = smul.addr %s232, 2
        %s234 = scalar_lea.vmem %s0, %s233
        %p235 = pneg %p48
        %p236 = pneg %p45
        %s237 = sand.u32 %s63, 1
        %s238 = sand.u32 %s63, 1
        %s239 = smul.addr %s238, 48
        %s240 = scalar_lea.vmem [#allocation2], %s239
        %p241 = pneg %p76
        %p242 = pneg %p73
        %p243 = pneg %p97
        %p244 = pneg %p94
        %p245 = pneg %p118
        %p246 = pneg %p115
        %p247 = pneg %p146
        %p248 = pneg %p143
        %s249 = smul.u32 4, %s20
        %p250 = scmp.lt.s32.totalorder %s19, 3
        %s251 = scalar_select %p250, %s19, 3
        %p252 = scmp.lt.s32.totalorder %s249, 15
        %s253 = scalar_select %p252, %s249, 15
        %s254 = smul.addr %s251, 16
        %s255 = sadd.s32 %s253, %s254
        %s256 = smul.addr %s255, 4
        %s257 = scalar_lea.vmem %s4, %s256
        %p258 = scmp.lt.s32.totalorder %s19, 3
        %s259 = scalar_select %p258, %s19, 3
        %s260 = smul.addr %s259, 2
        %s261 = scalar_lea.vmem %s0, %s260
        %s262 = smul.u32 4, %s20
        %s263 = smul.u32 4, %s20
        %p264 = scmp.lt.s32.totalorder %s19, 3
        %s265 = scalar_select %p264, %s19, 3
        %p266 = scmp.lt.s32.totalorder %s263, 15
        %s267 = scalar_select %p266, %s263, 15
        %s268 = smul.addr %s265, 16
        %s269 = sadd.s32 %s267, %s268
        %s270 = smul.addr %s269, 4
        %s271 = scalar_lea.vmem %s4, %s270
        %s272 = smul.u32 4, %s20
        %v274 = vld [vmem:[%s261] sm:$0x3]
        %v275 = vld [vmem:[%s227] sm:$0xff]
        %v276 = vld [vmem:[%s227 + $0x8] sm:$0xff]
        %v277 = vld [vmem:[%s227 + $0x10] sm:$0xff]
        %v278 = vld [vmem:[%s227 + $0x18] sm:$0xff]
        %v279 = vld [vmem:[%s227 + $0x20] sm:$0xff]
        %v280 = vld [vmem:[%s227 + $0x28] sm:$0xff]
        %v287 = vunpack.c.l.b16 %v275
        %v288 = vunpack.c.h.b16 %v275
        %v289 = vunpack.c.l.b16 %v276
        %v290 = vunpack.c.h.b16 %v276
        %v291 = vunpack.c.l.b16 %v277
        %v292 = vunpack.c.h.b16 %v277
        %v293 = vunpack.c.l.b16 %v278
        %v294 = vunpack.c.h.b16 %v278
        %v295 = vunpack.c.l.b16 %v279
        %v296 = vunpack.c.h.b16 %v279
        %v297 = vunpack.c.l.b16 %v280
        %v298 = vunpack.c.h.b16 %v280
        %v299 = vpack.c.b16 %v291, %v287
        %v300 = vpack.c.b16 %v292, %v288
        %v301 = vpack.c.b16 %v293, %v289
        %v302 = vpack.c.b16 %v294, %v290
        %v303 = vpack.c.b16 %v295, %v295
        %v304 = vpack.c.b16 %v296, %v296
        %v305 = vpack.c.b16 %v297, %v297
        %v306 = vpack.c.b16 %v298, %v298
        %vm311 = vcmask 195584
        %v313 = vsel %vm311, %v274, 0
        %vm315 = vcmask 1043456
        %v317 = vsel %vm315, %v303, 0
        %v320 = vsel %vm315, %v304, 0
        %v323 = vsel %vm315, %v305, 0
        %v326 = vsel %vm315, %v306, 0
        %328 = vmatprep.subr.bf16.mxu0 0
        %329 = vmatpush1.bf16.msra.mxu0 0
        %330 = vmatprep.subr.bf16.mxu0 0
        %331 = vmatpush1.bf16.msra.mxu0 0
        %332 = vmatprep.subr.bf16.mxu0 0
        %333 = vmatpush1.bf16.msra.mxu0 0
        %334 = vmatprep.subr.bf16.mxu0 0
        %335 = vmatpush1.bf16.msra.mxu0 0
        %336 = vmatprep.subr.bf16.mxu0 0
        %337 = vmatpush1.bf16.msra.mxu0 0
        %338 = vmatprep.subr.bf16.mxu0 0
        %339 = vmatpush1.bf16.msra.mxu0 0
        %340 = vmatprep.subr.bf16.mxu0 %v320
        %341 = vmatpush1.bf16.msra.mxu0 %v317
        %342 = vmatprep.subr.bf16.mxu0 %v300
        %343 = vmatpush1.bf16.msra.mxu0 %v299
        %344 = vmatprep.subr.bf16.mxu0 0
        %345 = vmatpush2.bf16.msra.mxu0 0
        %346 = vmatprep.subr.bf16.mxu0 0
        %347 = vmatpush2.bf16.msra.mxu0 0
        %348 = vmatprep.subr.bf16.mxu0 0
        %349 = vmatpush2.bf16.msra.mxu0 0
        %350 = vmatprep.subr.bf16.mxu0 0
        %351 = vmatpush2.bf16.msra.mxu0 0
        %352 = vmatprep.subr.bf16.mxu0 0
        %353 = vmatpush2.bf16.msra.mxu0 0
        %354 = vmatprep.subr.bf16.mxu0 0
        %355 = vmatpush2.bf16.msra.mxu0 0
        %356 = vmatprep.subr.bf16.mxu0 0
        %357 = vmatpush2.bf16.msra.mxu0 0
        %358 = vmatprep.subr.bf16.mxu0 0
        %359 = vmatpush2.bf16.msra.mxu0 0
        %360 = vmatprep.mubr.bf16.mxu0 0
        %361 = vmatmul.mubr.bf16.gmra.mxu0 %v313
        %v362 = vpop.f32.mrf.mxu0
        %v363 = vadd.f32 0.0, %v362
        %v364 = vpop.f32.mrf.mxu0
        %v365 = vadd.f32 0.0, %v364
        %v366 = vpop.f32.mrf.mxu0
        %v367 = vpop.f32.mrf.mxu0
        %368 = vdwg.mxu0
        %369 = vmatprep.subr.bf16.mxu0 0
        %370 = vmatpush1.bf16.msra.mxu0 0
        %371 = vmatprep.subr.bf16.mxu0 0
        %372 = vmatpush1.bf16.msra.mxu0 0
        %373 = vmatprep.subr.bf16.mxu0 0
        %374 = vmatpush1.bf16.msra.mxu0 0
        %375 = vmatprep.subr.bf16.mxu0 0
        %376 = vmatpush1.bf16.msra.mxu0 0
        %377 = vmatprep.subr.bf16.mxu0 0
        %378 = vmatpush1.bf16.msra.mxu0 0
        %379 = vmatprep.subr.bf16.mxu0 0
        %380 = vmatpush1.bf16.msra.mxu0 0
        %381 = vmatprep.subr.bf16.mxu0 %v326
        %382 = vmatpush1.bf16.msra.mxu0 %v323
        %383 = vmatprep.subr.bf16.mxu0 %v302
        %384 = vmatpush1.bf16.msra.mxu0 %v301
        %385 = vmatprep.subr.bf16.mxu0 0
        %386 = vmatpush2.bf16.msra.mxu0 0
        %387 = vmatprep.subr.bf16.mxu0 0
        %388 = vmatpush2.bf16.msra.mxu0 0
        %389 = vmatprep.subr.bf16.mxu0 0
        %390 = vmatpush2.bf16.msra.mxu0 0
        %391 = vmatprep.subr.bf16.mxu0 0
        %392 = vmatpush2.bf16.msra.mxu0 0
        %393 = vmatprep.subr.bf16.mxu0 0
        %394 = vmatpush2.bf16.msra.mxu0 0
        %395 = vmatprep.subr.bf16.mxu0 0
        %396 = vmatpush2.bf16.msra.mxu0 0
        %397 = vmatprep.subr.bf16.mxu0 0
        %398 = vmatpush2.bf16.msra.mxu0 0
        %399 = vmatprep.subr.bf16.mxu0 0
        %400 = vmatpush2.bf16.msra.mxu0 0
        %401 = vmatprep.mubr.bf16.mxu0 0
        %402 = vmatmul.mubr.bf16.gmra.mxu0 %v313
        %v403 = vpop.f32.mrf.mxu0
        %v404 = vadd.f32 0.0, %v403
        %v405 = vpop.f32.mrf.mxu0
        %v406 = vadd.f32 0.0, %v405
        %v407 = vpop.f32.mrf.mxu0
        %v408 = vpop.f32.mrf.mxu0
        %409 = vdwg.mxu0
        %v410 = vld [vmem:[%s2] sm:$0x7]
        %412 = vset.pattern.permute.xlu0 0
        %413 = vperm.xlu0 %412, %v410
        %v414 = vpop.permute.xlu0 %413
        %v416 = vmul.f32 %v363, %v414
        %v417 = vmul.f32 %v365, %v414
        %v418 = vmul.f32 %v404, %v414
        %v419 = vmul.f32 %v406, %v414
        %v420 = vld [vmem:[%s3] sm:$0x7]
        %422 = vset.pattern.permute.xlu0 0
        %423 = vperm.xlu0 %422, %v420
        %v424 = vpop.permute.xlu0 %423
        %v426 = vadd.f32 %v416, %v424
        %v427 = vadd.f32 %v417, %v424
        %v428 = vadd.f32 %v418, %v424
        %v429 = vadd.f32 %v419, %v424
        %v430 = vtanh.pop %v426
        %v431 = vtanh.pop %v427
        %v432 = vtanh.pop %v428
        %v433 = vtanh.pop %v429
        %v438 = vcombine.low %v430, %v431
        %v439 = vcombine.low %v432, %v433
        %442 = vst [vmem:[%s271] sm:$0x77] %v438
        %443 = vst [vmem:[%s271 + $0x8] sm:$0x77] %v439
        %s444 = smul.u32 4, %s20
        %p445 = scmp.lt.s32.totalorder %s19, 3
        %s446 = scalar_select %p445, %s19, 3
        %p447 = scmp.lt.s32.totalorder %s444, 15
        %s448 = scalar_select %p447, %s444, 15
        %s449 = smul.addr %s446, 16
        %s450 = sadd.s32 %s448, %s449
        %s451 = smul.addr %s450, 4
        %s452 = scalar_lea.vmem %s4, %s451
        // Predicated region
        $region60: #{generator64_forward.9} parent=54 // pred_check
          %p453 = pneg %p143
        $region61: #{generator64_forward.9} parent=54 // pred_check_branch
          %455 = sbr.rel (%p453) target = $region63
        $region62: #{generator64_forward.9} parent=54 // pred_region
          %s456 = smul.u32 4, %s20
        $region63: #{generator64_forward.9} parent=54 // pred_fallthru
          _
      $region55: #{generator64_forward.9} parent=5 // pred_fallthru
        _
      %p457 = scmp.le.s32.totalorder 2, %s10
      // Predicated region
      $region64: #{generator64_forward.9} parent=5 // pred_check
        %p458 = pneg %p457
      $region65: #{generator64_forward.9} parent=5 // pred_check_branch
        %460 = sbr.rel (%p458) target = $region67
      $region66: #{generator64_forward.9} parent=5 // pred_region
        %s461 = ssub.s32 %s10, 2
        // Predicated region
        $region68: #{generator64_forward.9} parent=66 // pred_check
          %p462 = pneg %p149
        $region69: #{generator64_forward.9} parent=66 // pred_check_branch
          %464 = sbr.rel (%p462) target = $region71
        $region70: #{generator64_forward.9} parent=66 // pred_region
          %s465 = smul.u32 4, %s22
          %p466 = scmp.lt.s32.totalorder %s21, 3
          %s467 = scalar_select %p466, %s21, 3
          %p468 = scmp.lt.s32.totalorder %s465, 15
          %s469 = scalar_select %p468, %s465, 15
          %s470 = smul.addr %s467, 16
          %s471 = sadd.s32 %s469, %s470
          %s472 = smul.addr %s471, 4
          %s473 = scalar_lea.vmem %s4, %s472
        $region71: #{generator64_forward.9} parent=66 // pred_fallthru
          _
      $region67: #{generator64_forward.9} parent=5 // pred_fallthru
        _
    $region6: #{generator64_forward.9} parent=1 // loop_footer
      %s14 = sadd.s32 1, %s10
    $region7: #{generator64_forward.9} parent=1 // loop_footer_branch
      %9 = sbr.rel target = $region3
    $region8: #{generator64_forward.9} parent=1 // loop_exit
      _

</llo_original>
